<compile_context>
chip_gen: v6e
topology: v6e:2x2x1
jax: 0.10.0
libtpu: 0.0.40
codegen_flags: <defaults>
</compile_context>

<pallas_src>
import jax
import jax.numpy as jnp
from jax.experimental import pallas as pl
from jax.experimental.pallas import tpu as pltpu

RADIX = 2
REDUCTION_FACTOR = 4


def _make_splat_kernel(radix, H, W):
    """Per-batch-element kernel.  Ref order:
       inputs : xp_split[0..radix-1], x_res, w1, s0, b0, wfc1, bfc1, s1, b1,
                wfc2, bfc2, w2, s2, b2
       outputs: o
       scratch: u_buf[0..radix-1], pad_buf
    """
    n_in = radix + 13

    def kernel(*refs):
        in_refs = refs[:n_in]
        o_ref = refs[n_in]
        scratch = refs[n_in + 1:]

        xp_refs = in_refs[:radix]                       # each [1, H+2, W+2, Cg] bf16
        (xres_ref,                                      # [1, H, W, P]        f32
         w1_ref,                                        # [radix*9, Cg, P]    bf16
         s0_ref, b0_ref,                                # [radix, P]          f32 (folded BN0)
         wfc1_ref, bfc1_ref,                            # [P, inter] bf16, [1, inter] f32
         s1_ref, b1_ref,                                # [1, inter]          f32 (folded BN1)
         wfc2_ref, bfc2_ref,                            # [radix, inter, P] bf16, [radix, P] f32
         w2_ref,                                        # [9, P, P]           bf16
         s2_ref, b2_ref) = in_refs[radix:]              # [1, P]              f32 (folded BN2)

        u_bufs = scratch[:radix]                        # each [H*W, P] bf16
        pad_buf = scratch[radix]                        # [H+2, W+2, P] bf16

        P = o_ref.shape[3]
        Cg = xp_refs[0].shape[3]
        HW = H * W
        f32 = jnp.float32

        # ---- conv1: grouped 3x3 conv (bf16 dots, f32 accum) + BN0 + ReLU ----
        # TODO(synk): fold the 9 taps into a single K = 9*Cg matmul via in-kernel
        # im2col once unaligned lane-dim concatenate lowering is confirmed for the
        # target Mosaic version; per-tap dots are kept to guarantee clean lowering.
        gap = None
        for r in range(radix):
            acc = None
            for kh in range(3):
                for kw in range(3):
                    patch = xp_refs[r][:, kh:kh + H, kw:kw + W, :].reshape(HW, Cg)
                    d = jnp.dot(patch, w1_ref[r * 9 + kh * 3 + kw],
                                preferred_element_type=f32)
                    acc = d if acc is None else acc + d       # first tap initializes
            ur = jnp.maximum(acc * s0_ref[r:r + 1, :] + b0_ref[r:r + 1, :], 0.0)
            u_bufs[r][...] = ur.astype(u_bufs[r].dtype)       # bf16 scratch, bounds live range
            gsum = jnp.sum(ur, axis=0, keepdims=True)         # [1, P] f32
            gap = gsum if gap is None else gap + gsum
        gap = gap * (1.0 / HW)                                # global average pool

        # ---- attention MLP: fc1 -> BN1 -> ReLU -> fc2 -> radix softmax ----
        g = jnp.dot(gap.astype(wfc1_ref.dtype), wfc1_ref[...],
                    preferred_element_type=f32) + bfc1_ref[...]
        g = jnp.maximum(g * s1_ref[...] + b1_ref[...], 0.0)   # [1, inter]
        gb = g.astype(wfc2_ref.dtype)
        logits = [jnp.dot(gb, wfc2_ref[r], preferred_element_type=f32)
                  + bfc2_ref[r:r + 1, :] for r in range(radix)]          # radix x [1, P]
        m = logits[0]
        for r in range(1, radix):
            m = jnp.maximum(m, logits[r])
        exps = [jnp.exp(l - m) for l in logits]
        denom = exps[0]
        for r in range(1, radix):
            denom = denom + exps[r]
        inv = pl.reciprocal(denom, approx=True)               # EUP slot, ~free
        attn = [e * inv for e in exps]                        # radix x [1, P]

        # ---- attention-weighted sum, fused straight into pad_buf interior ----
        out1 = u_bufs[0][...].astype(f32) * attn[0]
        for r in range(1, radix):
            out1 = out1 + u_bufs[r][...].astype(f32) * attn[r]

        # Re-zero only the 1-pixel halo ring each step (O(H+W), not O(H*W));
        # per-step (not once) so it is correct under "parallel" megacore sharding.
        zrow = jnp.zeros((1, W + 2, P), pad_buf.dtype)
        zcol = jnp.zeros((H + 2, 1, P), pad_buf.dtype)
        pad_buf[0:1, :, :] = zrow
        pad_buf[H + 1:H + 2, :, :] = zrow
        pad_buf[:, 0:1, :] = zcol
        pad_buf[:, W + 1:W + 2, :] = zcol
        pad_buf[1:H + 1, 1:W + 1, :] = out1.reshape(H, W, P).astype(pad_buf.dtype)

        # ---- conv2: 3x3 conv (bf16 dots, f32 accum) + BN2 (no activation) ----
        acc2 = None
        for kh in range(3):
            for kw in range(3):
                patch = pad_buf[kh:kh + H, kw:kw + W, :].reshape(HW, P)
                d = jnp.dot(patch, w2_ref[kh * 3 + kw], preferred_element_type=f32)
                acc2 = d if acc2 is None else acc2 + d
        y = acc2 * s2_ref[...] + b2_ref[...]

        # ---- identity residual (downsample/se/drop_path are None) + final ReLU ----
        y = y + xres_ref[...].reshape(HW, P)
        o_ref[...] = jnp.maximum(y, 0.0).reshape(1, H, W, P)

    return kernel


def _bn_fold(key, channels, eps=1e-5):
    """Eval-mode BatchNorm folded to (scale, bias); running_mean=0, running_var=1."""
    k1, k2 = jax.random.split(key)
    gamma = 1.0 + 0.1 * jax.random.normal(k1, (channels,), jnp.float32)
    beta = 0.1 * jax.random.normal(k2, (channels,), jnp.float32)
    mean = jnp.zeros((channels,), jnp.float32)
    var = jnp.ones((channels,), jnp.float32)
    scale = gamma / jnp.sqrt(var + eps)
    bias = beta - mean * scale
    return scale, bias


def make_params(key, inplanes, planes, radix=RADIX, reduction_factor=REDUCTION_FACTOR):
    assert inplanes % radix == 0
    inter = max(inplanes * radix // reduction_factor, 32)
    Cg = inplanes // radix
    ks = jax.random.split(key, 9)

    # conv1 (grouped): PyTorch OIHW [planes*radix, Cg, 3, 3] -> [radix, 3, 3, Cg, planes]
    w1_t = 0.1 * jax.random.normal(ks[0], (planes * radix, Cg, 3, 3), jnp.float32)
    w1 = jnp.transpose(w1_t.reshape(radix, planes, Cg, 3, 3), (0, 3, 4, 2, 1))
    s0, b0 = _bn_fold(ks[1], planes * radix)
    s0 = s0.reshape(radix, planes)
    b0 = b0.reshape(radix, planes)

    # fc1 (1x1 conv): PyTorch [inter, planes, 1, 1] -> [planes, inter]
    wfc1_t = 0.1 * jax.random.normal(ks[2], (inter, planes), jnp.float32)
    wfc1 = wfc1_t.T
    bfc1 = 0.1 * jax.random.normal(ks[3], (inter,), jnp.float32).reshape(1, inter)
    s1, b1 = _bn_fold(ks[4], inter)
    s1 = s1.reshape(1, inter)
    b1 = b1.reshape(1, inter)

    # fc2 (1x1 conv): PyTorch [planes*radix, inter, 1, 1] -> [radix, inter, planes]
    wfc2_t = 0.1 * jax.random.normal(ks[5], (planes * radix, inter), jnp.float32)
    wfc2 = jnp.transpose(wfc2_t.reshape(radix, planes, inter), (0, 2, 1))
    bfc2 = 0.1 * jax.random.normal(ks[6], (planes * radix,), jnp.float32).reshape(radix, planes)

    # conv2: PyTorch OIHW [planes, planes, 3, 3] -> HWIO [3, 3, planes, planes]
    w2_t = 0.1 * jax.random.normal(ks[7], (planes, planes, 3, 3), jnp.float32)
    w2 = jnp.transpose(w2_t, (2, 3, 1, 0))
    s2, b2 = _bn_fold(ks[8], planes)
    s2 = s2.reshape(1, planes)
    b2 = b2.reshape(1, planes)

    return dict(w1=w1, s0=s0, b0=b0, wfc1=wfc1, bfc1=bfc1, s1=s1, b1=b1,
                wfc2=wfc2, bfc2=bfc2, w2=w2, s2=s2, b2=b2)


@jax.jit
def splat_atte_basic(x_nchw, params):
    """x_nchw: [B, C, H, W] float32 (PyTorch layout). Returns [B, C, H, W] float32."""
    B, C, H, W = x_nchw.shape
    w1 = params["w1"]
    radix = w1.shape[0]
    Cg = w1.shape[3]
    P = w1.shape[4]
    assert C == P and C == radix * Cg, \
        "identity residual requires inplanes == planes (downsample=None)"

    x = jnp.transpose(x_nchw, (0, 2, 3, 1)).astype(jnp.float32)        # NHWC residual (f32)
    xp = jnp.pad(x, ((0, 0), (1, 1), (1, 1), (0, 0)))                  # pad=1 for 3x3
    # Pre-split by radix in the wrapper (free layout change; removes in-kernel lane
    # slicing) and cast MXU operands to bf16.
    xp_splits = [xp[..., r * Cg:(r + 1) * Cg].astype(jnp.bfloat16) for r in range(radix)]

    # bf16 matmul operands; folded-BN scales/biases and fc biases stay f32.
    weights = [
        w1.reshape(radix * 9, Cg, P).astype(jnp.bfloat16),
        params["s0"], params["b0"],
        params["wfc1"].astype(jnp.bfloat16), params["bfc1"], params["s1"], params["b1"],
        params["wfc2"].astype(jnp.bfloat16), params["bfc2"],
        params["w2"].reshape(9, P, P).astype(jnp.bfloat16), params["s2"], params["b2"],
    ]

    batch_map = lambda b: (b, 0, 0, 0)
    act_specs = [pl.BlockSpec((1, H + 2, W + 2, Cg), batch_map) for _ in range(radix)]
    res_spec = pl.BlockSpec((1, H, W, C), batch_map)

    def const_spec(a):                       # weights stay resident across the grid
        nd = a.ndim
        return pl.BlockSpec(a.shape, lambda b, _nd=nd: (0,) * _nd)

    w_specs = [const_spec(w) for w in weights]

    kernel = _make_splat_kernel(radix, H, W)
    out = pl.pallas_call(
        kernel,
        out_shape=jax.ShapeDtypeStruct((B, H, W, P), jnp.float32),
        grid=(B,),
        in_specs=act_specs + [res_spec] + w_specs,
        out_specs=pl.BlockSpec((1, H, W, P), batch_map),
        scratch_shapes=(
            [pltpu.VMEM((H * W, P), jnp.bfloat16) for _ in range(radix)]
            + [pltpu.VMEM((H + 2, W + 2, P), jnp.bfloat16)]),
        compiler_params=pltpu.CompilerParams(
            dimension_semantics=("parallel",),          # megacore sharding over batch (v7x)
            vmem_limit_bytes=48 * 1024 * 1024),         # > 16/32 MiB defaults, < v7x 64 MiB
    )(*xp_splits, x, *weights)

    return jnp.transpose(out, (0, 3, 1, 2))                            # back to NCHW


if __name__ == "__main__":
    # TODO(synk): se / downsample / drop_block / drop_path are None in the module
    # defaults and are treated as identity (nothing to translate).
    # NOTE: demo shape is intentionally tiny; production shapes should use planes
    # that are a multiple of 128 so channels fill the 128-lane axis.
    B, C, H, W = 2, 8, 8, 8          # inplanes = planes = 8, stride = 1, radix = 2
    key = jax.random.PRNGKey(0)
    kx, kp = jax.random.split(key)

    x = jax.random.normal(kx, (B, C, H, W), jnp.float32)
    params = make_params(kp, inplanes=C, planes=C)

    y = splat_atte_basic(x, params)
    y = jax.block_until_ready(y)

    assert y.shape == (B, C, H, W)
    assert bool(jnp.all(jnp.isfinite(y)))
    assert bool(jnp.all(y >= 0.0))   # final ReLU
    print("KERNEL_OK")
</pallas_src>

<mosaic_0001>
module attributes {stable_mosaic.version = 11 : i64} {
  func.func @kernel(%arg0: i32, %arg1: memref<1x10x10x4xbf16, #tpu.memory_space<vmem>>, %arg2: memref<1x10x10x4xbf16, #tpu.memory_space<vmem>>, %arg3: memref<1x8x8x8xf32, #tpu.memory_space<vmem>>, %arg4: memref<18x4x8xbf16, #tpu.memory_space<vmem>>, %arg5: memref<2x8xf32, #tpu.memory_space<vmem>>, %arg6: memref<2x8xf32, #tpu.memory_space<vmem>>, %arg7: memref<8x32xbf16, #tpu.memory_space<vmem>>, %arg8: memref<1x32xf32, #tpu.memory_space<vmem>>, %arg9: memref<1x32xf32, #tpu.memory_space<vmem>>, %arg10: memref<1x32xf32, #tpu.memory_space<vmem>>, %arg11: memref<2x32x8xbf16, #tpu.memory_space<vmem>>, %arg12: memref<2x8xf32, #tpu.memory_space<vmem>>, %arg13: memref<9x8x8xbf16, #tpu.memory_space<vmem>>, %arg14: memref<1x8xf32, #tpu.memory_space<vmem>>, %arg15: memref<1x8xf32, #tpu.memory_space<vmem>>, %arg16: memref<1x8x8x8xf32, #tpu.memory_space<vmem>>, %arg17: memref<64x8xbf16, #tpu.memory_space<vmem>>, %arg18: memref<64x8xbf16, #tpu.memory_space<vmem>>, %arg19: memref<10x10x8xbf16, #tpu.memory_space<vmem>>) attributes {dimension_semantics = [#tpu.dimension_semantics<parallel>], iteration_bounds = array<i64: 2>, scalar_prefetch = 0 : i64, scratch_operands = 3 : i64, tpu.core_type = #tpu.core_type<tc>, window_params = [{transform_indices = @transform_0, window_bounds = array<i64: 1, 10, 10, 4>}, {transform_indices = @transform_1, window_bounds = array<i64: 1, 10, 10, 4>}, {transform_indices = @transform_2, window_bounds = array<i64: 1, 8, 8, 8>}, {pipeline_mode = #tpu.pipeline_mode<synchronous>, transform_indices = @transform_3, window_bounds = array<i64: 18, 4, 8>}, {pipeline_mode = #tpu.pipeline_mode<synchronous>, transform_indices = @transform_4, window_bounds = array<i64: 2, 8>}, {pipeline_mode = #tpu.pipeline_mode<synchronous>, transform_indices = @transform_5, window_bounds = array<i64: 2, 8>}, {pipeline_mode = #tpu.pipeline_mode<synchronous>, transform_indices = @transform_6, window_bounds = array<i64: 8, 32>}, {pipeline_mode = #tpu.pipeline_mode<synchronous>, transform_indices = @transform_7, window_bounds = array<i64: 1, 32>}, {pipeline_mode = #tpu.pipeline_mode<synchronous>, transform_indices = @transform_8, window_bounds = array<i64: 1, 32>}, {pipeline_mode = #tpu.pipeline_mode<synchronous>, transform_indices = @transform_9, window_bounds = array<i64: 1, 32>}, {pipeline_mode = #tpu.pipeline_mode<synchronous>, transform_indices = @transform_10, window_bounds = array<i64: 2, 32, 8>}, {pipeline_mode = #tpu.pipeline_mode<synchronous>, transform_indices = @transform_11, window_bounds = array<i64: 2, 8>}, {pipeline_mode = #tpu.pipeline_mode<synchronous>, transform_indices = @transform_12, window_bounds = array<i64: 9, 8, 8>}, {pipeline_mode = #tpu.pipeline_mode<synchronous>, transform_indices = @transform_13, window_bounds = array<i64: 1, 8>}, {pipeline_mode = #tpu.pipeline_mode<synchronous>, transform_indices = @transform_14, window_bounds = array<i64: 1, 8>}, {transform_indices = @transform_15, window_bounds = array<i64: 1, 8, 8, 8>}]} {
    %c0 = arith.constant 0 : index
    %c0_0 = arith.constant 0 : index
    %c0_1 = arith.constant 0 : index
    %c0_2 = arith.constant 0 : index
    %0 = vector.load %arg1[%c0, %c0_0, %c0_1, %c0_2] : memref<1x10x10x4xbf16, #tpu.memory_space<vmem>>, vector<1x8x8x4xbf16>
    %1 = vector.shape_cast %0 : vector<1x8x8x4xbf16> to vector<64x4xbf16>
    %c0_3 = arith.constant 0 : index
    %c0_4 = arith.constant 0 : index
    %c0_5 = arith.constant 0 : index
    %2 = vector.load %arg4[%c0_3, %c0_4, %c0_5] : memref<18x4x8xbf16, #tpu.memory_space<vmem>>, vector<1x4x8xbf16>
    %3 = vector.shape_cast %2 : vector<1x4x8xbf16> to vector<4x8xbf16>
    %cst = arith.constant dense<0.000000e+00> : vector<64x8xf32>
    %4 = tpu.matmul %1, %3, %cst {dimension_numbers = #tpu.dot_dimension_numbers<[1], [0], [0], [1], [0, 0, 1, 1], [], []>} : vector<64x4xbf16>, vector<4x8xbf16>, vector<64x8xf32> -> vector<64x8xf32>
    %c0_6 = arith.constant 0 : index
    %c0_7 = arith.constant 0 : index
    %c1 = arith.constant 1 : index
    %c0_8 = arith.constant 0 : index
    %5 = vector.load %arg1[%c0_6, %c0_7, %c1, %c0_8] : memref<1x10x10x4xbf16, #tpu.memory_space<vmem>>, vector<1x8x8x4xbf16>
    %6 = vector.shape_cast %5 : vector<1x8x8x4xbf16> to vector<64x4xbf16>
    %c1_9 = arith.constant 1 : index
    %c0_10 = arith.constant 0 : index
    %c0_11 = arith.constant 0 : index
    %7 = vector.load %arg4[%c1_9, %c0_10, %c0_11] : memref<18x4x8xbf16, #tpu.memory_space<vmem>>, vector<1x4x8xbf16>
    %8 = vector.shape_cast %7 : vector<1x4x8xbf16> to vector<4x8xbf16>
    %cst_12 = arith.constant dense<0.000000e+00> : vector<64x8xf32>
    %9 = tpu.matmul %6, %8, %cst_12 {dimension_numbers = #tpu.dot_dimension_numbers<[1], [0], [0], [1], [0, 0, 1, 1], [], []>} : vector<64x4xbf16>, vector<4x8xbf16>, vector<64x8xf32> -> vector<64x8xf32>
    %10 = arith.addf %4, %9 : vector<64x8xf32>
    %c0_13 = arith.constant 0 : index
    %c0_14 = arith.constant 0 : index
    %c2 = arith.constant 2 : index
    %c0_15 = arith.constant 0 : index
    %11 = vector.load %arg1[%c0_13, %c0_14, %c2, %c0_15] : memref<1x10x10x4xbf16, #tpu.memory_space<vmem>>, vector<1x8x8x4xbf16>
    %12 = vector.shape_cast %11 : vector<1x8x8x4xbf16> to vector<64x4xbf16>
    %c2_16 = arith.constant 2 : index
    %c0_17 = arith.constant 0 : index
    %c0_18 = arith.constant 0 : index
    %13 = vector.load %arg4[%c2_16, %c0_17, %c0_18] : memref<18x4x8xbf16, #tpu.memory_space<vmem>>, vector<1x4x8xbf16>
    %14 = vector.shape_cast %13 : vector<1x4x8xbf16> to vector<4x8xbf16>
    %cst_19 = arith.constant dense<0.000000e+00> : vector<64x8xf32>
    %15 = tpu.matmul %12, %14, %cst_19 {dimension_numbers = #tpu.dot_dimension_numbers<[1], [0], [0], [1], [0, 0, 1, 1], [], []>} : vector<64x4xbf16>, vector<4x8xbf16>, vector<64x8xf32> -> vector<64x8xf32>
    %16 = arith.addf %10, %15 : vector<64x8xf32>
    %c0_20 = arith.constant 0 : index
    %c1_21 = arith.constant 1 : index
    %c0_22 = arith.constant 0 : index
    %c0_23 = arith.constant 0 : index
    %17 = vector.load %arg1[%c0_20, %c1_21, %c0_22, %c0_23] : memref<1x10x10x4xbf16, #tpu.memory_space<vmem>>, vector<1x8x8x4xbf16>
    %18 = vector.shape_cast %17 : vector<1x8x8x4xbf16> to vector<64x4xbf16>
    %c3 = arith.constant 3 : index
    %c0_24 = arith.constant 0 : index
    %c0_25 = arith.constant 0 : index
    %19 = vector.load %arg4[%c3, %c0_24, %c0_25] : memref<18x4x8xbf16, #tpu.memory_space<vmem>>, vector<1x4x8xbf16>
    %20 = vector.shape_cast %19 : vector<1x4x8xbf16> to vector<4x8xbf16>
    %cst_26 = arith.constant dense<0.000000e+00> : vector<64x8xf32>
    %21 = tpu.matmul %18, %20, %cst_26 {dimension_numbers = #tpu.dot_dimension_numbers<[1], [0], [0], [1], [0, 0, 1, 1], [], []>} : vector<64x4xbf16>, vector<4x8xbf16>, vector<64x8xf32> -> vector<64x8xf32>
    %22 = arith.addf %16, %21 : vector<64x8xf32>
    %c0_27 = arith.constant 0 : index
    %c1_28 = arith.constant 1 : index
    %c1_29 = arith.constant 1 : index
    %c0_30 = arith.constant 0 : index
    %23 = vector.load %arg1[%c0_27, %c1_28, %c1_29, %c0_30] : memref<1x10x10x4xbf16, #tpu.memory_space<vmem>>, vector<1x8x8x4xbf16>
    %24 = vector.shape_cast %23 : vector<1x8x8x4xbf16> to vector<64x4xbf16>
    %c4 = arith.constant 4 : index
    %c0_31 = arith.constant 0 : index
    %c0_32 = arith.constant 0 : index
    %25 = vector.load %arg4[%c4, %c0_31, %c0_32] : memref<18x4x8xbf16, #tpu.memory_space<vmem>>, vector<1x4x8xbf16>
    %26 = vector.shape_cast %25 : vector<1x4x8xbf16> to vector<4x8xbf16>
    %cst_33 = arith.constant dense<0.000000e+00> : vector<64x8xf32>
    %27 = tpu.matmul %24, %26, %cst_33 {dimension_numbers = #tpu.dot_dimension_numbers<[1], [0], [0], [1], [0, 0, 1, 1], [], []>} : vector<64x4xbf16>, vector<4x8xbf16>, vector<64x8xf32> -> vector<64x8xf32>
    %28 = arith.addf %22, %27 : vector<64x8xf32>
    %c0_34 = arith.constant 0 : index
    %c1_35 = arith.constant 1 : index
    %c2_36 = arith.constant 2 : index
    %c0_37 = arith.constant 0 : index
    %29 = vector.load %arg1[%c0_34, %c1_35, %c2_36, %c0_37] : memref<1x10x10x4xbf16, #tpu.memory_space<vmem>>, vector<1x8x8x4xbf16>
    %30 = vector.shape_cast %29 : vector<1x8x8x4xbf16> to vector<64x4xbf16>
    %c5 = arith.constant 5 : index
    %c0_38 = arith.constant 0 : index
    %c0_39 = arith.constant 0 : index
    %31 = vector.load %arg4[%c5, %c0_38, %c0_39] : memref<18x4x8xbf16, #tpu.memory_space<vmem>>, vector<1x4x8xbf16>
    %32 = vector.shape_cast %31 : vector<1x4x8xbf16> to vector<4x8xbf16>
    %cst_40 = arith.constant dense<0.000000e+00> : vector<64x8xf32>
    %33 = tpu.matmul %30, %32, %cst_40 {dimension_numbers = #tpu.dot_dimension_numbers<[1], [0], [0], [1], [0, 0, 1, 1], [], []>} : vector<64x4xbf16>, vector<4x8xbf16>, vector<64x8xf32> -> vector<64x8xf32>
    %34 = arith.addf %28, %33 : vector<64x8xf32>
    %c0_41 = arith.constant 0 : index
    %c2_42 = arith.constant 2 : index
    %c0_43 = arith.constant 0 : index
    %c0_44 = arith.constant 0 : index
    %35 = vector.load %arg1[%c0_41, %c2_42, %c0_43, %c0_44] : memref<1x10x10x4xbf16, #tpu.memory_space<vmem>>, vector<1x8x8x4xbf16>
    %36 = vector.shape_cast %35 : vector<1x8x8x4xbf16> to vector<64x4xbf16>
    %c6 = arith.constant 6 : index
    %c0_45 = arith.constant 0 : index
    %c0_46 = arith.constant 0 : index
    %37 = vector.load %arg4[%c6, %c0_45, %c0_46] : memref<18x4x8xbf16, #tpu.memory_space<vmem>>, vector<1x4x8xbf16>
    %38 = vector.shape_cast %37 : vector<1x4x8xbf16> to vector<4x8xbf16>
    %cst_47 = arith.constant dense<0.000000e+00> : vector<64x8xf32>
    %39 = tpu.matmul %36, %38, %cst_47 {dimension_numbers = #tpu.dot_dimension_numbers<[1], [0], [0], [1], [0, 0, 1, 1], [], []>} : vector<64x4xbf16>, vector<4x8xbf16>, vector<64x8xf32> -> vector<64x8xf32>
    %40 = arith.addf %34, %39 : vector<64x8xf32>
    %c0_48 = arith.constant 0 : index
    %c2_49 = arith.constant 2 : index
    %c1_50 = arith.constant 1 : index
    %c0_51 = arith.constant 0 : index
    %41 = vector.load %arg1[%c0_48, %c2_49, %c1_50, %c0_51] : memref<1x10x10x4xbf16, #tpu.memory_space<vmem>>, vector<1x8x8x4xbf16>
    %42 = vector.shape_cast %41 : vector<1x8x8x4xbf16> to vector<64x4xbf16>
    %c7 = arith.constant 7 : index
    %c0_52 = arith.constant 0 : index
    %c0_53 = arith.constant 0 : index
    %43 = vector.load %arg4[%c7, %c0_52, %c0_53] : memref<18x4x8xbf16, #tpu.memory_space<vmem>>, vector<1x4x8xbf16>
    %44 = vector.shape_cast %43 : vector<1x4x8xbf16> to vector<4x8xbf16>
    %cst_54 = arith.constant dense<0.000000e+00> : vector<64x8xf32>
    %45 = tpu.matmul %42, %44, %cst_54 {dimension_numbers = #tpu.dot_dimension_numbers<[1], [0], [0], [1], [0, 0, 1, 1], [], []>} : vector<64x4xbf16>, vector<4x8xbf16>, vector<64x8xf32> -> vector<64x8xf32>
    %46 = arith.addf %40, %45 : vector<64x8xf32>
    %c0_55 = arith.constant 0 : index
    %c2_56 = arith.constant 2 : index
    %c2_57 = arith.constant 2 : index
    %c0_58 = arith.constant 0 : index
    %47 = vector.load %arg1[%c0_55, %c2_56, %c2_57, %c0_58] : memref<1x10x10x4xbf16, #tpu.memory_space<vmem>>, vector<1x8x8x4xbf16>
    %48 = vector.shape_cast %47 : vector<1x8x8x4xbf16> to vector<64x4xbf16>
    %c8 = arith.constant 8 : index
    %c0_59 = arith.constant 0 : index
    %c0_60 = arith.constant 0 : index
    %49 = vector.load %arg4[%c8, %c0_59, %c0_60] : memref<18x4x8xbf16, #tpu.memory_space<vmem>>, vector<1x4x8xbf16>
    %50 = vector.shape_cast %49 : vector<1x4x8xbf16> to vector<4x8xbf16>
    %cst_61 = arith.constant dense<0.000000e+00> : vector<64x8xf32>
    %51 = tpu.matmul %48, %50, %cst_61 {dimension_numbers = #tpu.dot_dimension_numbers<[1], [0], [0], [1], [0, 0, 1, 1], [], []>} : vector<64x4xbf16>, vector<4x8xbf16>, vector<64x8xf32> -> vector<64x8xf32>
    %52 = arith.addf %46, %51 : vector<64x8xf32>
    %c0_62 = arith.constant 0 : index
    %c0_63 = arith.constant 0 : index
    %53 = vector.load %arg5[%c0_62, %c0_63] : memref<2x8xf32, #tpu.memory_space<vmem>>, vector<1x8xf32>
    %54 = vector.broadcast %53 : vector<1x8xf32> to vector<64x8xf32>
    %55 = arith.mulf %52, %54 : vector<64x8xf32>
    %c0_64 = arith.constant 0 : index
    %c0_65 = arith.constant 0 : index
    %56 = vector.load %arg6[%c0_64, %c0_65] : memref<2x8xf32, #tpu.memory_space<vmem>>, vector<1x8xf32>
    %57 = vector.broadcast %56 : vector<1x8xf32> to vector<64x8xf32>
    %58 = arith.addf %55, %57 : vector<64x8xf32>
    %cst_66 = arith.constant 0.000000e+00 : f32
    %59 = vector.broadcast %cst_66 : f32 to vector<64x8xf32>
    %60 = arith.maximumf %58, %59 : vector<64x8xf32>
    %61 = arith.truncf %60 : vector<64x8xf32> to vector<64x8xbf16>
    %c0_67 = arith.constant 0 : index
    %c0_68 = arith.constant 0 : index
    %62 = vector.load %arg17[%c0_67, %c0_68] : memref<64x8xbf16, #tpu.memory_space<vmem>>, vector<64x8xbf16>
    tpu.vector_store %arg17[%c0_67, %c0_68], %61 {strides = array<i32>} : memref<64x8xbf16, #tpu.memory_space<vmem>>, vector<64x8xbf16>,
    %cst_69 = arith.constant dense<0.000000e+00> : vector<8xf32>
    %63 = vector.multi_reduction <add>, %60, %cst_69 [0] : vector<64x8xf32> to vector<8xf32>
    %64 = vector.shape_cast %63 : vector<8xf32> to vector<1x8xf32>
    %c0_70 = arith.constant 0 : index
    %c0_71 = arith.constant 0 : index
    %c0_72 = arith.constant 0 : index
    %c0_73 = arith.constant 0 : index
    %65 = vector.load %arg2[%c0_70, %c0_71, %c0_72, %c0_73] : memref<1x10x10x4xbf16, #tpu.memory_space<vmem>>, vector<1x8x8x4xbf16>
    %66 = vector.shape_cast %65 : vector<1x8x8x4xbf16> to vector<64x4xbf16>
    %c9 = arith.constant 9 : index
    %c0_74 = arith.constant 0 : index
    %c0_75 = arith.constant 0 : index
    %67 = vector.load %arg4[%c9, %c0_74, %c0_75] : memref<18x4x8xbf16, #tpu.memory_space<vmem>>, vector<1x4x8xbf16>
    %68 = vector.shape_cast %67 : vector<1x4x8xbf16> to vector<4x8xbf16>
    %cst_76 = arith.constant dense<0.000000e+00> : vector<64x8xf32>
    %69 = tpu.matmul %66, %68, %cst_76 {dimension_numbers = #tpu.dot_dimension_numbers<[1], [0], [0], [1], [0, 0, 1, 1], [], []>} : vector<64x4xbf16>, vector<4x8xbf16>, vector<64x8xf32> -> vector<64x8xf32>
    %c0_77 = arith.constant 0 : index
    %c0_78 = arith.constant 0 : index
    %c1_79 = arith.constant 1 : index
    %c0_80 = arith.constant 0 : index
    %70 = vector.load %arg2[%c0_77, %c0_78, %c1_79, %c0_80] : memref<1x10x10x4xbf16, #tpu.memory_space<vmem>>, vector<1x8x8x4xbf16>
    %71 = vector.shape_cast %70 : vector<1x8x8x4xbf16> to vector<64x4xbf16>
    %c10 = arith.constant 10 : index
    %c0_81 = arith.constant 0 : index
    %c0_82 = arith.constant 0 : index
    %72 = vector.load %arg4[%c10, %c0_81, %c0_82] : memref<18x4x8xbf16, #tpu.memory_space<vmem>>, vector<1x4x8xbf16>
    %73 = vector.shape_cast %72 : vector<1x4x8xbf16> to vector<4x8xbf16>
    %cst_83 = arith.constant dense<0.000000e+00> : vector<64x8xf32>
    %74 = tpu.matmul %71, %73, %cst_83 {dimension_numbers = #tpu.dot_dimension_numbers<[1], [0], [0], [1], [0, 0, 1, 1], [], []>} : vector<64x4xbf16>, vector<4x8xbf16>, vector<64x8xf32> -> vector<64x8xf32>
    %75 = arith.addf %69, %74 : vector<64x8xf32>
    %c0_84 = arith.constant 0 : index
    %c0_85 = arith.constant 0 : index
    %c2_86 = arith.constant 2 : index
    %c0_87 = arith.constant 0 : index
    %76 = vector.load %arg2[%c0_84, %c0_85, %c2_86, %c0_87] : memref<1x10x10x4xbf16, #tpu.memory_space<vmem>>, vector<1x8x8x4xbf16>
    %77 = vector.shape_cast %76 : vector<1x8x8x4xbf16> to vector<64x4xbf16>
    %c11 = arith.constant 11 : index
    %c0_88 = arith.constant 0 : index
    %c0_89 = arith.constant 0 : index
    %78 = vector.load %arg4[%c11, %c0_88, %c0_89] : memref<18x4x8xbf16, #tpu.memory_space<vmem>>, vector<1x4x8xbf16>
    %79 = vector.shape_cast %78 : vector<1x4x8xbf16> to vector<4x8xbf16>
    %cst_90 = arith.constant dense<0.000000e+00> : vector<64x8xf32>
    %80 = tpu.matmul %77, %79, %cst_90 {dimension_numbers = #tpu.dot_dimension_numbers<[1], [0], [0], [1], [0, 0, 1, 1], [], []>} : vector<64x4xbf16>, vector<4x8xbf16>, vector<64x8xf32> -> vector<64x8xf32>
    %81 = arith.addf %75, %80 : vector<64x8xf32>
    %c0_91 = arith.constant 0 : index
    %c1_92 = arith.constant 1 : index
    %c0_93 = arith.constant 0 : index
    %c0_94 = arith.constant 0 : index
    %82 = vector.load %arg2[%c0_91, %c1_92, %c0_93, %c0_94] : memref<1x10x10x4xbf16, #tpu.memory_space<vmem>>, vector<1x8x8x4xbf16>
    %83 = vector.shape_cast %82 : vector<1x8x8x4xbf16> to vector<64x4xbf16>
    %c12 = arith.constant 12 : index
    %c0_95 = arith.constant 0 : index
    %c0_96 = arith.constant 0 : index
    %84 = vector.load %arg4[%c12, %c0_95, %c0_96] : memref<18x4x8xbf16, #tpu.memory_space<vmem>>, vector<1x4x8xbf16>
    %85 = vector.shape_cast %84 : vector<1x4x8xbf16> to vector<4x8xbf16>
    %cst_97 = arith.constant dense<0.000000e+00> : vector<64x8xf32>
    %86 = tpu.matmul %83, %85, %cst_97 {dimension_numbers = #tpu.dot_dimension_numbers<[1], [0], [0], [1], [0, 0, 1, 1], [], []>} : vector<64x4xbf16>, vector<4x8xbf16>, vector<64x8xf32> -> vector<64x8xf32>
    %87 = arith.addf %81, %86 : vector<64x8xf32>
    %c0_98 = arith.constant 0 : index
    %c1_99 = arith.constant 1 : index
    %c1_100 = arith.constant 1 : index
    %c0_101 = arith.constant 0 : index
    %88 = vector.load %arg2[%c0_98, %c1_99, %c1_100, %c0_101] : memref<1x10x10x4xbf16, #tpu.memory_space<vmem>>, vector<1x8x8x4xbf16>
    %89 = vector.shape_cast %88 : vector<1x8x8x4xbf16> to vector<64x4xbf16>
    %c13 = arith.constant 13 : index
    %c0_102 = arith.constant 0 : index
    %c0_103 = arith.constant 0 : index
    %90 = vector.load %arg4[%c13, %c0_102, %c0_103] : memref<18x4x8xbf16, #tpu.memory_space<vmem>>, vector<1x4x8xbf16>
    %91 = vector.shape_cast %90 : vector<1x4x8xbf16> to vector<4x8xbf16>
    %cst_104 = arith.constant dense<0.000000e+00> : vector<64x8xf32>
    %92 = tpu.matmul %89, %91, %cst_104 {dimension_numbers = #tpu.dot_dimension_numbers<[1], [0], [0], [1], [0, 0, 1, 1], [], []>} : vector<64x4xbf16>, vector<4x8xbf16>, vector<64x8xf32> -> vector<64x8xf32>
    %93 = arith.addf %87, %92 : vector<64x8xf32>
    %c0_105 = arith.constant 0 : index
    %c1_106 = arith.constant 1 : index
    %c2_107 = arith.constant 2 : index
    %c0_108 = arith.constant 0 : index
    %94 = vector.load %arg2[%c0_105, %c1_106, %c2_107, %c0_108] : memref<1x10x10x4xbf16, #tpu.memory_space<vmem>>, vector<1x8x8x4xbf16>
    %95 = vector.shape_cast %94 : vector<1x8x8x4xbf16> to vector<64x4xbf16>
    %c14 = arith.constant 14 : index
    %c0_109 = arith.constant 0 : index
    %c0_110 = arith.constant 0 : index
    %96 = vector.load %arg4[%c14, %c0_109, %c0_110] : memref<18x4x8xbf16, #tpu.memory_space<vmem>>, vector<1x4x8xbf16>
    %97 = vector.shape_cast %96 : vector<1x4x8xbf16> to vector<4x8xbf16>
    %cst_111 = arith.constant dense<0.000000e+00> : vector<64x8xf32>
    %98 = tpu.matmul %95, %97, %cst_111 {dimension_numbers = #tpu.dot_dimension_numbers<[1], [0], [0], [1], [0, 0, 1, 1], [], []>} : vector<64x4xbf16>, vector<4x8xbf16>, vector<64x8xf32> -> vector<64x8xf32>
    %99 = arith.addf %93, %98 : vector<64x8xf32>
    %c0_112 = arith.constant 0 : index
    %c2_113 = arith.constant 2 : index
    %c0_114 = arith.constant 0 : index
    %c0_115 = arith.constant 0 : index
    %100 = vector.load %arg2[%c0_112, %c2_113, %c0_114, %c0_115] : memref<1x10x10x4xbf16, #tpu.memory_space<vmem>>, vector<1x8x8x4xbf16>
    %101 = vector.shape_cast %100 : vector<1x8x8x4xbf16> to vector<64x4xbf16>
    %c15 = arith.constant 15 : index
    %c0_116 = arith.constant 0 : index
    %c0_117 = arith.constant 0 : index
    %102 = vector.load %arg4[%c15, %c0_116, %c0_117] : memref<18x4x8xbf16, #tpu.memory_space<vmem>>, vector<1x4x8xbf16>
    %103 = vector.shape_cast %102 : vector<1x4x8xbf16> to vector<4x8xbf16>
    %cst_118 = arith.constant dense<0.000000e+00> : vector<64x8xf32>
    %104 = tpu.matmul %101, %103, %cst_118 {dimension_numbers = #tpu.dot_dimension_numbers<[1], [0], [0], [1], [0, 0, 1, 1], [], []>} : vector<64x4xbf16>, vector<4x8xbf16>, vector<64x8xf32> -> vector<64x8xf32>
    %105 = arith.addf %99, %104 : vector<64x8xf32>
    %c0_119 = arith.constant 0 : index
    %c2_120 = arith.constant 2 : index
    %c1_121 = arith.constant 1 : index
    %c0_122 = arith.constant 0 : index
    %106 = vector.load %arg2[%c0_119, %c2_120, %c1_121, %c0_122] : memref<1x10x10x4xbf16, #tpu.memory_space<vmem>>, vector<1x8x8x4xbf16>
    %107 = vector.shape_cast %106 : vector<1x8x8x4xbf16> to vector<64x4xbf16>
    %c16 = arith.constant 16 : index
    %c0_123 = arith.constant 0 : index
    %c0_124 = arith.constant 0 : index
    %108 = vector.load %arg4[%c16, %c0_123, %c0_124] : memref<18x4x8xbf16, #tpu.memory_space<vmem>>, vector<1x4x8xbf16>
    %109 = vector.shape_cast %108 : vector<1x4x8xbf16> to vector<4x8xbf16>
    %cst_125 = arith.constant dense<0.000000e+00> : vector<64x8xf32>
    %110 = tpu.matmul %107, %109, %cst_125 {dimension_numbers = #tpu.dot_dimension_numbers<[1], [0], [0], [1], [0, 0, 1, 1], [], []>} : vector<64x4xbf16>, vector<4x8xbf16>, vector<64x8xf32> -> vector<64x8xf32>
    %111 = arith.addf %105, %110 : vector<64x8xf32>
    %c0_126 = arith.constant 0 : index
    %c2_127 = arith.constant 2 : index
    %c2_128 = arith.constant 2 : index
    %c0_129 = arith.constant 0 : index
    %112 = vector.load %arg2[%c0_126, %c2_127, %c2_128, %c0_129] : memref<1x10x10x4xbf16, #tpu.memory_space<vmem>>, vector<1x8x8x4xbf16>
    %113 = vector.shape_cast %112 : vector<1x8x8x4xbf16> to vector<64x4xbf16>
    %c17 = arith.constant 17 : index
    %c0_130 = arith.constant 0 : index
    %c0_131 = arith.constant 0 : index
    %114 = vector.load %arg4[%c17, %c0_130, %c0_131] : memref<18x4x8xbf16, #tpu.memory_space<vmem>>, vector<1x4x8xbf16>
    %115 = vector.shape_cast %114 : vector<1x4x8xbf16> to vector<4x8xbf16>
    %cst_132 = arith.constant dense<0.000000e+00> : vector<64x8xf32>
    %116 = tpu.matmul %113, %115, %cst_132 {dimension_numbers = #tpu.dot_dimension_numbers<[1], [0], [0], [1], [0, 0, 1, 1], [], []>} : vector<64x4xbf16>, vector<4x8xbf16>, vector<64x8xf32> -> vector<64x8xf32>
    %117 = arith.addf %111, %116 : vector<64x8xf32>
    %c1_133 = arith.constant 1 : index
    %c0_134 = arith.constant 0 : index
    %118 = vector.load %arg5[%c1_133, %c0_134] : memref<2x8xf32, #tpu.memory_space<vmem>>, vector<1x8xf32>
    %119 = vector.broadcast %118 : vector<1x8xf32> to vector<64x8xf32>
    %120 = arith.mulf %117, %119 : vector<64x8xf32>
    %c1_135 = arith.constant 1 : index
    %c0_136 = arith.constant 0 : index
    %121 = vector.load %arg6[%c1_135, %c0_136] : memref<2x8xf32, #tpu.memory_space<vmem>>, vector<1x8xf32>
    %122 = vector.broadcast %121 : vector<1x8xf32> to vector<64x8xf32>
    %123 = arith.addf %120, %122 : vector<64x8xf32>
    %cst_137 = arith.constant 0.000000e+00 : f32
    %124 = vector.broadcast %cst_137 : f32 to vector<64x8xf32>
    %125 = arith.maximumf %123, %124 : vector<64x8xf32>
    %126 = arith.truncf %125 : vector<64x8xf32> to vector<64x8xbf16>
    %c0_138 = arith.constant 0 : index
    %c0_139 = arith.constant 0 : index
    %127 = vector.load %arg18[%c0_138, %c0_139] : memref<64x8xbf16, #tpu.memory_space<vmem>>, vector<64x8xbf16>
    tpu.vector_store %arg18[%c0_138, %c0_139], %126 {strides = array<i32>} : memref<64x8xbf16, #tpu.memory_space<vmem>>, vector<64x8xbf16>,
    %cst_140 = arith.constant dense<0.000000e+00> : vector<8xf32>
    %128 = vector.multi_reduction <add>, %125, %cst_140 [0] : vector<64x8xf32> to vector<8xf32>
    %129 = vector.shape_cast %128 : vector<8xf32> to vector<1x8xf32>
    %130 = arith.addf %64, %129 : vector<1x8xf32>
    %cst_141 = arith.constant 1.562500e-02 : f32
    %131 = vector.broadcast %cst_141 : f32 to vector<1x8xf32>
    %132 = arith.mulf %130, %131 : vector<1x8xf32>
    %133 = arith.truncf %132 : vector<1x8xf32> to vector<1x8xbf16>
    %c0_142 = arith.constant 0 : index
    %c0_143 = arith.constant 0 : index
    %134 = vector.load %arg7[%c0_142, %c0_143] : memref<8x32xbf16, #tpu.memory_space<vmem>>, vector<8x32xbf16>
    %cst_144 = arith.constant dense<0.000000e+00> : vector<1x32xf32>
    %135 = tpu.matmul %133, %134, %cst_144 {dimension_numbers = #tpu.dot_dimension_numbers<[1], [0], [0], [1], [0, 0, 1, 1], [], []>} : vector<1x8xbf16>, vector<8x32xbf16>, vector<1x32xf32> -> vector<1x32xf32>
    %c0_145 = arith.constant 0 : index
    %c0_146 = arith.constant 0 : index
    %136 = vector.load %arg8[%c0_145, %c0_146] : memref<1x32xf32, #tpu.memory_space<vmem>>, vector<1x32xf32>
    %137 = arith.addf %135, %136 : vector<1x32xf32>
    %c0_147 = arith.constant 0 : index
    %c0_148 = arith.constant 0 : index
    %138 = vector.load %arg9[%c0_147, %c0_148] : memref<1x32xf32, #tpu.memory_space<vmem>>, vector<1x32xf32>
    %139 = arith.mulf %137, %138 : vector<1x32xf32>
    %c0_149 = arith.constant 0 : index
    %c0_150 = arith.constant 0 : index
    %140 = vector.load %arg10[%c0_149, %c0_150] : memref<1x32xf32, #tpu.memory_space<vmem>>, vector<1x32xf32>
    %141 = arith.addf %139, %140 : vector<1x32xf32>
    %cst_151 = arith.constant 0.000000e+00 : f32
    %142 = vector.broadcast %cst_151 : f32 to vector<1x32xf32>
    %143 = arith.maximumf %141, %142 : vector<1x32xf32>
    %144 = arith.truncf %143 : vector<1x32xf32> to vector<1x32xbf16>
    %c0_152 = arith.constant 0 : index
    %c0_153 = arith.constant 0 : index
    %c0_154 = arith.constant 0 : index
    %145 = vector.load %arg11[%c0_152, %c0_153, %c0_154] : memref<2x32x8xbf16, #tpu.memory_space<vmem>>, vector<1x32x8xbf16>
    %146 = vector.shape_cast %145 : vector<1x32x8xbf16> to vector<32x8xbf16>
    %cst_155 = arith.constant dense<0.000000e+00> : vector<1x8xf32>
    %147 = tpu.matmul %144, %146, %cst_155 {dimension_numbers = #tpu.dot_dimension_numbers<[1], [0], [0], [1], [0, 0, 1, 1], [], []>} : vector<1x32xbf16>, vector<32x8xbf16>, vector<1x8xf32> -> vector<1x8xf32>
    %c0_156 = arith.constant 0 : index
    %c0_157 = arith.constant 0 : index
    %148 = vector.load %arg12[%c0_156, %c0_157] : memref<2x8xf32, #tpu.memory_space<vmem>>, vector<1x8xf32>
    %149 = arith.addf %147, %148 : vector<1x8xf32>
    %c1_158 = arith.constant 1 : index
    %c0_159 = arith.constant 0 : index
    %c0_160 = arith.constant 0 : index
    %150 = vector.load %arg11[%c1_158, %c0_159, %c0_160] : memref<2x32x8xbf16, #tpu.memory_space<vmem>>, vector<1x32x8xbf16>
    %151 = vector.shape_cast %150 : vector<1x32x8xbf16> to vector<32x8xbf16>
    %cst_161 = arith.constant dense<0.000000e+00> : vector<1x8xf32>
    %152 = tpu.matmul %144, %151, %cst_161 {dimension_numbers = #tpu.dot_dimension_numbers<[1], [0], [0], [1], [0, 0, 1, 1], [], []>} : vector<1x32xbf16>, vector<32x8xbf16>, vector<1x8xf32> -> vector<1x8xf32>
    %c1_162 = arith.constant 1 : index
    %c0_163 = arith.constant 0 : index
    %153 = vector.load %arg12[%c1_162, %c0_163] : memref<2x8xf32, #tpu.memory_space<vmem>>, vector<1x8xf32>
    %154 = arith.addf %152, %153 : vector<1x8xf32>
    %155 = arith.maximumf %149, %154 : vector<1x8xf32>
    %156 = arith.subf %149, %155 : vector<1x8xf32>
    %157 = math.exp %156 : vector<1x8xf32>
    %158 = arith.subf %154, %155 : vector<1x8xf32>
    %159 = math.exp %158 : vector<1x8xf32>
    %160 = arith.addf %157, %159 : vector<1x8xf32>
    %161 = tpu.reciprocal %160 {approx = true} : vector<1x8xf32> -> vector<1x8xf32>
    %162 = arith.mulf %157, %161 : vector<1x8xf32>
    %163 = arith.mulf %159, %161 : vector<1x8xf32>
    %c0_164 = arith.constant 0 : index
    %c0_165 = arith.constant 0 : index
    %164 = vector.load %arg17[%c0_164, %c0_165] : memref<64x8xbf16, #tpu.memory_space<vmem>>, vector<64x8xbf16>
    %165 = arith.extf %164 : vector<64x8xbf16> to vector<64x8xf32>
    %166 = vector.broadcast %162 : vector<1x8xf32> to vector<64x8xf32>
    %167 = arith.mulf %165, %166 : vector<64x8xf32>
    %c0_166 = arith.constant 0 : index
    %c0_167 = arith.constant 0 : index
    %168 = vector.load %arg18[%c0_166, %c0_167] : memref<64x8xbf16, #tpu.memory_space<vmem>>, vector<64x8xbf16>
    %169 = arith.extf %168 : vector<64x8xbf16> to vector<64x8xf32>
    %170 = vector.broadcast %163 : vector<1x8xf32> to vector<64x8xf32>
    %171 = arith.mulf %169, %170 : vector<64x8xf32>
    %172 = arith.addf %167, %171 : vector<64x8xf32>
    %cst_168 = arith.constant 0.000000e+00 : bf16
    %173 = vector.broadcast %cst_168 : bf16 to vector<1x10x8xbf16>
    %cst_169 = arith.constant 0.000000e+00 : bf16
    %174 = vector.broadcast %cst_169 : bf16 to vector<10x1x8xbf16>
    %c0_170 = arith.constant 0 : index
    %c0_171 = arith.constant 0 : index
    %c0_172 = arith.constant 0 : index
    %175 = vector.load %arg19[%c0_170, %c0_171, %c0_172] : memref<10x10x8xbf16, #tpu.memory_space<vmem>>, vector<1x10x8xbf16>
    tpu.vector_store %arg19[%c0_170, %c0_171, %c0_172], %173 {strides = array<i32>} : memref<10x10x8xbf16, #tpu.memory_space<vmem>>, vector<1x10x8xbf16>,
    %c9_173 = arith.constant 9 : index
    %c0_174 = arith.constant 0 : index
    %c0_175 = arith.constant 0 : index
    %176 = vector.load %arg19[%c9_173, %c0_174, %c0_175] : memref<10x10x8xbf16, #tpu.memory_space<vmem>>, vector<1x10x8xbf16>
    tpu.vector_store %arg19[%c9_173, %c0_174, %c0_175], %173 {strides = array<i32>} : memref<10x10x8xbf16, #tpu.memory_space<vmem>>, vector<1x10x8xbf16>,
    %c0_176 = arith.constant 0 : index
    %c0_177 = arith.constant 0 : index
    %c0_178 = arith.constant 0 : index
    %177 = vector.load %arg19[%c0_176, %c0_177, %c0_178] : memref<10x10x8xbf16, #tpu.memory_space<vmem>>, vector<10x1x8xbf16>
    tpu.vector_store %arg19[%c0_176, %c0_177, %c0_178], %174 {strides = array<i32>} : memref<10x10x8xbf16, #tpu.memory_space<vmem>>, vector<10x1x8xbf16>,
    %c0_179 = arith.constant 0 : index
    %c9_180 = arith.constant 9 : index
    %c0_181 = arith.constant 0 : index
    %178 = vector.load %arg19[%c0_179, %c9_180, %c0_181] : memref<10x10x8xbf16, #tpu.memory_space<vmem>>, vector<10x1x8xbf16>
    tpu.vector_store %arg19[%c0_179, %c9_180, %c0_181], %174 {strides = array<i32>} : memref<10x10x8xbf16, #tpu.memory_space<vmem>>, vector<10x1x8xbf16>,
    %179 = vector.shape_cast %172 : vector<64x8xf32> to vector<8x8x8xf32>
    %180 = arith.truncf %179 : vector<8x8x8xf32> to vector<8x8x8xbf16>
    %c1_182 = arith.constant 1 : index
    %c1_183 = arith.constant 1 : index
    %c0_184 = arith.constant 0 : index
    %181 = vector.load %arg19[%c1_182, %c1_183, %c0_184] : memref<10x10x8xbf16, #tpu.memory_space<vmem>>, vector<8x8x8xbf16>
    tpu.vector_store %arg19[%c1_182, %c1_183, %c0_184], %180 {strides = array<i32>} : memref<10x10x8xbf16, #tpu.memory_space<vmem>>, vector<8x8x8xbf16>,
    %c0_185 = arith.constant 0 : index
    %c0_186 = arith.constant 0 : index
    %c0_187 = arith.constant 0 : index
    %182 = vector.load %arg19[%c0_185, %c0_186, %c0_187] : memref<10x10x8xbf16, #tpu.memory_space<vmem>>, vector<8x8x8xbf16>
    %183 = vector.shape_cast %182 : vector<8x8x8xbf16> to vector<64x8xbf16>
    %c0_188 = arith.constant 0 : index
    %c0_189 = arith.constant 0 : index
    %c0_190 = arith.constant 0 : index
    %184 = vector.load %arg13[%c0_188, %c0_189, %c0_190] : memref<9x8x8xbf16, #tpu.memory_space<vmem>>, vector<1x8x8xbf16>
    %185 = vector.shape_cast %184 : vector<1x8x8xbf16> to vector<8x8xbf16>
    %cst_191 = arith.constant dense<0.000000e+00> : vector<64x8xf32>
    %186 = tpu.matmul %183, %185, %cst_191 {dimension_numbers = #tpu.dot_dimension_numbers<[1], [0], [0], [1], [0, 0, 1, 1], [], []>} : vector<64x8xbf16>, vector<8x8xbf16>, vector<64x8xf32> -> vector<64x8xf32>
    %c0_192 = arith.constant 0 : index
    %c1_193 = arith.constant 1 : index
    %c0_194 = arith.constant 0 : index
    %187 = vector.load %arg19[%c0_192, %c1_193, %c0_194] : memref<10x10x8xbf16, #tpu.memory_space<vmem>>, vector<8x8x8xbf16>
    %188 = vector.shape_cast %187 : vector<8x8x8xbf16> to vector<64x8xbf16>
    %c1_195 = arith.constant 1 : index
    %c0_196 = arith.constant 0 : index
    %c0_197 = arith.constant 0 : index
    %189 = vector.load %arg13[%c1_195, %c0_196, %c0_197] : memref<9x8x8xbf16, #tpu.memory_space<vmem>>, vector<1x8x8xbf16>
    %190 = vector.shape_cast %189 : vector<1x8x8xbf16> to vector<8x8xbf16>
    %cst_198 = arith.constant dense<0.000000e+00> : vector<64x8xf32>
    %191 = tpu.matmul %188, %190, %cst_198 {dimension_numbers = #tpu.dot_dimension_numbers<[1], [0], [0], [1], [0, 0, 1, 1], [], []>} : vector<64x8xbf16>, vector<8x8xbf16>, vector<64x8xf32> -> vector<64x8xf32>
    %192 = arith.addf %186, %191 : vector<64x8xf32>
    %c0_199 = arith.constant 0 : index
    %c2_200 = arith.constant 2 : index
    %c0_201 = arith.constant 0 : index
    %193 = vector.load %arg19[%c0_199, %c2_200, %c0_201] : memref<10x10x8xbf16, #tpu.memory_space<vmem>>, vector<8x8x8xbf16>
    %194 = vector.shape_cast %193 : vector<8x8x8xbf16> to vector<64x8xbf16>
    %c2_202 = arith.constant 2 : index
    %c0_203 = arith.constant 0 : index
    %c0_204 = arith.constant 0 : index
    %195 = vector.load %arg13[%c2_202, %c0_203, %c0_204] : memref<9x8x8xbf16, #tpu.memory_space<vmem>>, vector<1x8x8xbf16>
    %196 = vector.shape_cast %195 : vector<1x8x8xbf16> to vector<8x8xbf16>
    %cst_205 = arith.constant dense<0.000000e+00> : vector<64x8xf32>
    %197 = tpu.matmul %194, %196, %cst_205 {dimension_numbers = #tpu.dot_dimension_numbers<[1], [0], [0], [1], [0, 0, 1, 1], [], []>} : vector<64x8xbf16>, vector<8x8xbf16>, vector<64x8xf32> -> vector<64x8xf32>
    %198 = arith.addf %192, %197 : vector<64x8xf32>
    %c1_206 = arith.constant 1 : index
    %c0_207 = arith.constant 0 : index
    %c0_208 = arith.constant 0 : index
    %199 = vector.load %arg19[%c1_206, %c0_207, %c0_208] : memref<10x10x8xbf16, #tpu.memory_space<vmem>>, vector<8x8x8xbf16>
    %200 = vector.shape_cast %199 : vector<8x8x8xbf16> to vector<64x8xbf16>
    %c3_209 = arith.constant 3 : index
    %c0_210 = arith.constant 0 : index
    %c0_211 = arith.constant 0 : index
    %201 = vector.load %arg13[%c3_209, %c0_210, %c0_211] : memref<9x8x8xbf16, #tpu.memory_space<vmem>>, vector<1x8x8xbf16>
    %202 = vector.shape_cast %201 : vector<1x8x8xbf16> to vector<8x8xbf16>
    %cst_212 = arith.constant dense<0.000000e+00> : vector<64x8xf32>
    %203 = tpu.matmul %200, %202, %cst_212 {dimension_numbers = #tpu.dot_dimension_numbers<[1], [0], [0], [1], [0, 0, 1, 1], [], []>} : vector<64x8xbf16>, vector<8x8xbf16>, vector<64x8xf32> -> vector<64x8xf32>
    %204 = arith.addf %198, %203 : vector<64x8xf32>
    %c1_213 = arith.constant 1 : index
    %c1_214 = arith.constant 1 : index
    %c0_215 = arith.constant 0 : index
    %205 = vector.load %arg19[%c1_213, %c1_214, %c0_215] : memref<10x10x8xbf16, #tpu.memory_space<vmem>>, vector<8x8x8xbf16>
    %206 = vector.shape_cast %205 : vector<8x8x8xbf16> to vector<64x8xbf16>
    %c4_216 = arith.constant 4 : index
    %c0_217 = arith.constant 0 : index
    %c0_218 = arith.constant 0 : index
    %207 = vector.load %arg13[%c4_216, %c0_217, %c0_218] : memref<9x8x8xbf16, #tpu.memory_space<vmem>>, vector<1x8x8xbf16>
    %208 = vector.shape_cast %207 : vector<1x8x8xbf16> to vector<8x8xbf16>
    %cst_219 = arith.constant dense<0.000000e+00> : vector<64x8xf32>
    %209 = tpu.matmul %206, %208, %cst_219 {dimension_numbers = #tpu.dot_dimension_numbers<[1], [0], [0], [1], [0, 0, 1, 1], [], []>} : vector<64x8xbf16>, vector<8x8xbf16>, vector<64x8xf32> -> vector<64x8xf32>
    %210 = arith.addf %204, %209 : vector<64x8xf32>
    %c1_220 = arith.constant 1 : index
    %c2_221 = arith.constant 2 : index
    %c0_222 = arith.constant 0 : index
    %211 = vector.load %arg19[%c1_220, %c2_221, %c0_222] : memref<10x10x8xbf16, #tpu.memory_space<vmem>>, vector<8x8x8xbf16>
    %212 = vector.shape_cast %211 : vector<8x8x8xbf16> to vector<64x8xbf16>
    %c5_223 = arith.constant 5 : index
    %c0_224 = arith.constant 0 : index
    %c0_225 = arith.constant 0 : index
    %213 = vector.load %arg13[%c5_223, %c0_224, %c0_225] : memref<9x8x8xbf16, #tpu.memory_space<vmem>>, vector<1x8x8xbf16>
    %214 = vector.shape_cast %213 : vector<1x8x8xbf16> to vector<8x8xbf16>
    %cst_226 = arith.constant dense<0.000000e+00> : vector<64x8xf32>
    %215 = tpu.matmul %212, %214, %cst_226 {dimension_numbers = #tpu.dot_dimension_numbers<[1], [0], [0], [1], [0, 0, 1, 1], [], []>} : vector<64x8xbf16>, vector<8x8xbf16>, vector<64x8xf32> -> vector<64x8xf32>
    %216 = arith.addf %210, %215 : vector<64x8xf32>
    %c2_227 = arith.constant 2 : index
    %c0_228 = arith.constant 0 : index
    %c0_229 = arith.constant 0 : index
    %217 = vector.load %arg19[%c2_227, %c0_228, %c0_229] : memref<10x10x8xbf16, #tpu.memory_space<vmem>>, vector<8x8x8xbf16>
    %218 = vector.shape_cast %217 : vector<8x8x8xbf16> to vector<64x8xbf16>
    %c6_230 = arith.constant 6 : index
    %c0_231 = arith.constant 0 : index
    %c0_232 = arith.constant 0 : index
    %219 = vector.load %arg13[%c6_230, %c0_231, %c0_232] : memref<9x8x8xbf16, #tpu.memory_space<vmem>>, vector<1x8x8xbf16>
    %220 = vector.shape_cast %219 : vector<1x8x8xbf16> to vector<8x8xbf16>
    %cst_233 = arith.constant dense<0.000000e+00> : vector<64x8xf32>
    %221 = tpu.matmul %218, %220, %cst_233 {dimension_numbers = #tpu.dot_dimension_numbers<[1], [0], [0], [1], [0, 0, 1, 1], [], []>} : vector<64x8xbf16>, vector<8x8xbf16>, vector<64x8xf32> -> vector<64x8xf32>
    %222 = arith.addf %216, %221 : vector<64x8xf32>
    %c2_234 = arith.constant 2 : index
    %c1_235 = arith.constant 1 : index
    %c0_236 = arith.constant 0 : index
    %223 = vector.load %arg19[%c2_234, %c1_235, %c0_236] : memref<10x10x8xbf16, #tpu.memory_space<vmem>>, vector<8x8x8xbf16>
    %224 = vector.shape_cast %223 : vector<8x8x8xbf16> to vector<64x8xbf16>
    %c7_237 = arith.constant 7 : index
    %c0_238 = arith.constant 0 : index
    %c0_239 = arith.constant 0 : index
    %225 = vector.load %arg13[%c7_237, %c0_238, %c0_239] : memref<9x8x8xbf16, #tpu.memory_space<vmem>>, vector<1x8x8xbf16>
    %226 = vector.shape_cast %225 : vector<1x8x8xbf16> to vector<8x8xbf16>
    %cst_240 = arith.constant dense<0.000000e+00> : vector<64x8xf32>
    %227 = tpu.matmul %224, %226, %cst_240 {dimension_numbers = #tpu.dot_dimension_numbers<[1], [0], [0], [1], [0, 0, 1, 1], [], []>} : vector<64x8xbf16>, vector<8x8xbf16>, vector<64x8xf32> -> vector<64x8xf32>
    %228 = arith.addf %222, %227 : vector<64x8xf32>
    %c2_241 = arith.constant 2 : index
    %c2_242 = arith.constant 2 : index
    %c0_243 = arith.constant 0 : index
    %229 = vector.load %arg19[%c2_241, %c2_242, %c0_243] : memref<10x10x8xbf16, #tpu.memory_space<vmem>>, vector<8x8x8xbf16>
    %230 = vector.shape_cast %229 : vector<8x8x8xbf16> to vector<64x8xbf16>
    %c8_244 = arith.constant 8 : index
    %c0_245 = arith.constant 0 : index
    %c0_246 = arith.constant 0 : index
    %231 = vector.load %arg13[%c8_244, %c0_245, %c0_246] : memref<9x8x8xbf16, #tpu.memory_space<vmem>>, vector<1x8x8xbf16>
    %232 = vector.shape_cast %231 : vector<1x8x8xbf16> to vector<8x8xbf16>
    %cst_247 = arith.constant dense<0.000000e+00> : vector<64x8xf32>
    %233 = tpu.matmul %230, %232, %cst_247 {dimension_numbers = #tpu.dot_dimension_numbers<[1], [0], [0], [1], [0, 0, 1, 1], [], []>} : vector<64x8xbf16>, vector<8x8xbf16>, vector<64x8xf32> -> vector<64x8xf32>
    %234 = arith.addf %228, %233 : vector<64x8xf32>
    %c0_248 = arith.constant 0 : index
    %c0_249 = arith.constant 0 : index
    %235 = vector.load %arg14[%c0_248, %c0_249] : memref<1x8xf32, #tpu.memory_space<vmem>>, vector<1x8xf32>
    %236 = vector.broadcast %235 : vector<1x8xf32> to vector<64x8xf32>
    %237 = arith.mulf %234, %236 : vector<64x8xf32>
    %c0_250 = arith.constant 0 : index
    %c0_251 = arith.constant 0 : index
    %238 = vector.load %arg15[%c0_250, %c0_251] : memref<1x8xf32, #tpu.memory_space<vmem>>, vector<1x8xf32>
    %239 = vector.broadcast %238 : vector<1x8xf32> to vector<64x8xf32>
    %240 = arith.addf %237, %239 : vector<64x8xf32>
    %c0_252 = arith.constant 0 : index
    %c0_253 = arith.constant 0 : index
    %c0_254 = arith.constant 0 : index
    %c0_255 = arith.constant 0 : index
    %241 = vector.load %arg3[%c0_252, %c0_253, %c0_254, %c0_255] : memref<1x8x8x8xf32, #tpu.memory_space<vmem>>, vector<1x8x8x8xf32>
    %242 = vector.shape_cast %241 : vector<1x8x8x8xf32> to vector<64x8xf32>
    %243 = arith.addf %240, %242 : vector<64x8xf32>
    %cst_256 = arith.constant 0.000000e+00 : f32
    %244 = vector.broadcast %cst_256 : f32 to vector<64x8xf32>
    %245 = arith.maximumf %243, %244 : vector<64x8xf32>
    %246 = vector.shape_cast %245 : vector<64x8xf32> to vector<1x8x8x8xf32>
    %c0_257 = arith.constant 0 : index
    %c0_258 = arith.constant 0 : index
    %c0_259 = arith.constant 0 : index
    %c0_260 = arith.constant 0 : index
    %247 = vector.load %arg16[%c0_257, %c0_258, %c0_259, %c0_260] : memref<1x8x8x8xf32, #tpu.memory_space<vmem>>, vector<1x8x8x8xf32>
    tpu.vector_store %arg16[%c0_257, %c0_258, %c0_259, %c0_260], %246 {strides = array<i32>} : memref<1x8x8x8xf32, #tpu.memory_space<vmem>>, vector<1x8x8x8xf32>,
    return
  }
  func.func @transform_0(%arg0: i32) -> (i32, i32, i32, i32) {
    %c0_i32 = arith.constant 0 : i32
    %c0_i32_0 = arith.constant 0 : i32
    %c0_i32_1 = arith.constant 0 : i32
    %c0_i32_2 = arith.constant 0 : i32
    return %arg0, %c0_i32, %c0_i32_0, %c0_i32_1 : i32, i32, i32, i32
  }
  func.func @transform_1(%arg0: i32) -> (i32, i32, i32, i32) {
    %c0_i32 = arith.constant 0 : i32
    %c0_i32_0 = arith.constant 0 : i32
    %c0_i32_1 = arith.constant 0 : i32
    %c0_i32_2 = arith.constant 0 : i32
    return %arg0, %c0_i32, %c0_i32_0, %c0_i32_1 : i32, i32, i32, i32
  }
  func.func @transform_2(%arg0: i32) -> (i32, i32, i32, i32) {
    %c0_i32 = arith.constant 0 : i32
    %c0_i32_0 = arith.constant 0 : i32
    %c0_i32_1 = arith.constant 0 : i32
    %c0_i32_2 = arith.constant 0 : i32
    return %arg0, %c0_i32, %c0_i32_0, %c0_i32_1 : i32, i32, i32, i32
  }
  func.func @transform_3(%arg0: i32) -> (i32, i32, i32) {
    %c0_i32 = arith.constant 0 : i32
    %c0_i32_0 = arith.constant 0 : i32
    %c0_i32_1 = arith.constant 0 : i32
    %c0_i32_2 = arith.constant 0 : i32
    return %c0_i32, %c0_i32_0, %c0_i32_1 : i32, i32, i32
  }
  func.func @transform_4(%arg0: i32) -> (i32, i32) {
    %c0_i32 = arith.constant 0 : i32
    %c0_i32_0 = arith.constant 0 : i32
    %c0_i32_1 = arith.constant 0 : i32
    return %c0_i32, %c0_i32_0 : i32, i32
  }
  func.func @transform_5(%arg0: i32) -> (i32, i32) {
    %c0_i32 = arith.constant 0 : i32
    %c0_i32_0 = arith.constant 0 : i32
    %c0_i32_1 = arith.constant 0 : i32
    return %c0_i32, %c0_i32_0 : i32, i32
  }
  func.func @transform_6(%arg0: i32) -> (i32, i32) {
    %c0_i32 = arith.constant 0 : i32
    %c0_i32_0 = arith.constant 0 : i32
    %c0_i32_1 = arith.constant 0 : i32
    return %c0_i32, %c0_i32_0 : i32, i32
  }
  func.func @transform_7(%arg0: i32) -> (i32, i32) {
    %c0_i32 = arith.constant 0 : i32
    %c0_i32_0 = arith.constant 0 : i32
    %c0_i32_1 = arith.constant 0 : i32
    return %c0_i32, %c0_i32_0 : i32, i32
  }
  func.func @transform_8(%arg0: i32) -> (i32, i32) {
    %c0_i32 = arith.constant 0 : i32
    %c0_i32_0 = arith.constant 0 : i32
    %c0_i32_1 = arith.constant 0 : i32
    return %c0_i32, %c0_i32_0 : i32, i32
  }
  func.func @transform_9(%arg0: i32) -> (i32, i32) {
    %c0_i32 = arith.constant 0 : i32
    %c0_i32_0 = arith.constant 0 : i32
    %c0_i32_1 = arith.constant 0 : i32
    return %c0_i32, %c0_i32_0 : i32, i32
  }
  func.func @transform_10(%arg0: i32) -> (i32, i32, i32) {
    %c0_i32 = arith.constant 0 : i32
    %c0_i32_0 = arith.constant 0 : i32
    %c0_i32_1 = arith.constant 0 : i32
    %c0_i32_2 = arith.constant 0 : i32
    return %c0_i32, %c0_i32_0, %c0_i32_1 : i32, i32, i32
  }
  func.func @transform_11(%arg0: i32) -> (i32, i32) {
    %c0_i32 = arith.constant 0 : i32
    %c0_i32_0 = arith.constant 0 : i32
    %c0_i32_1 = arith.constant 0 : i32
    return %c0_i32, %c0_i32_0 : i32, i32
  }
  func.func @transform_12(%arg0: i32) -> (i32, i32, i32) {
    %c0_i32 = arith.constant 0 : i32
    %c0_i32_0 = arith.constant 0 : i32
    %c0_i32_1 = arith.constant 0 : i32
    %c0_i32_2 = arith.constant 0 : i32
    return %c0_i32, %c0_i32_0, %c0_i32_1 : i32, i32, i32
  }
  func.func @transform_13(%arg0: i32) -> (i32, i32) {
    %c0_i32 = arith.constant 0 : i32
    %c0_i32_0 = arith.constant 0 : i32
    %c0_i32_1 = arith.constant 0 : i32
    return %c0_i32, %c0_i32_0 : i32, i32
  }
  func.func @transform_14(%arg0: i32) -> (i32, i32) {
    %c0_i32 = arith.constant 0 : i32
    %c0_i32_0 = arith.constant 0 : i32
    %c0_i32_1 = arith.constant 0 : i32
    return %c0_i32, %c0_i32_0 : i32, i32
  }
  func.func @transform_15(%arg0: i32) -> (i32, i32, i32, i32) {
    %c0_i32 = arith.constant 0 : i32
    %c0_i32_0 = arith.constant 0 : i32
    %c0_i32_1 = arith.constant 0 : i32
    %c0_i32_2 = arith.constant 0 : i32
    return %arg0, %c0_i32, %c0_i32_0, %c0_i32_1 : i32, i32, i32, i32
  }
}

</mosaic_0001>

<llo_original>
// kernel: splat_atte_basic.1
$region0: #{splat_atte_basic.1}
  #allocation0 [shape = 'u32[]', space=smem, size = 0x4, offset = 0x4, fixed_abs, tag = 'smem constant byte address 0x4 - core index']
  #allocation1 [shape = 'u32[144,128]{1,0:T(1,128)}', space=vmem, size = 0x12000, scoped, tag = 'internal scratch']
  #allocation2 [shape = 'bf16[64,8]{1,0:T(8,128)(2,1)}', space=vmem, size = 0x4000, scoped, tag = 'scratch operand']
  #allocation3 [shape = 'bf16[64,8]{1,0:T(8,128)(2,1)}', space=vmem, size = 0x4000, scoped, tag = 'scratch operand']
  #allocation4 [shape = 'bf16[10,10,8]{2,1,0:T(8,128)(2,1)}', space=vmem, size = 0xa000, scoped, tag = 'scratch operand']
  %s0 = inlined_call_operand.vmem [shape: bf16[2,10,10,4], index: 0, kind: input, shape index: {}]
  %s1 = inlined_call_operand.vmem [shape: bf16[2,10,10,4], index: 1, kind: input, shape index: {}]
  %s2 = inlined_call_operand.vmem [shape: f32[2,8,8,8], index: 2, kind: input, shape index: {}]
  %s3 = inlined_call_operand.vmem [shape: bf16[18,4,8], index: 3, kind: input, shape index: {}]
  %s4 = inlined_call_operand.vmem [shape: f32[2,8], index: 4, kind: input, shape index: {}]
  %s5 = inlined_call_operand.vmem [shape: f32[2,8], index: 5, kind: input, shape index: {}]
  %s6 = inlined_call_operand.vmem [shape: bf16[8,32], index: 6, kind: input, shape index: {}]
  %s7 = inlined_call_operand.vmem [shape: f32[1,32], index: 7, kind: input, shape index: {}]
  %s8 = inlined_call_operand.vmem [shape: f32[1,32], index: 8, kind: input, shape index: {}]
  %s9 = inlined_call_operand.vmem [shape: f32[1,32], index: 9, kind: input, shape index: {}]
  %s10 = inlined_call_operand.vmem [shape: bf16[2,32,8], index: 10, kind: input, shape index: {}]
  %s11 = inlined_call_operand.vmem [shape: f32[2,8], index: 11, kind: input, shape index: {}]
  %s12 = inlined_call_operand.vmem [shape: bf16[9,8,8], index: 12, kind: input, shape index: {}]
  %s13 = inlined_call_operand.vmem [shape: f32[1,8], index: 13, kind: input, shape index: {}]
  %s14 = inlined_call_operand.vmem [shape: f32[1,8], index: 14, kind: input, shape index: {}]
  %s15 = inlined_call_operand.vmem [shape: f32[2,8,8,8], index: 15, kind: output, shape index: {}]
  %s16 = sld [smem:[#allocation0]]
  $region93: #{splat_atte_basic.1} parent=0
    _
  %s18 = ssub.s32 1, %s16
  %s19 = scalar_select 0, %s18, %s16
  loop: start=0, step=1, limit=4
  $region2: #{splat_atte_basic.1} parent=0 // loop_pre_header
    _
  $region3: #{splat_atte_basic.1} parent=0 // loop_header
    %s21 = sphi 0, %s25
    %p22 = scmp.ge.s32.totalorder %s21, 4
    %s31 = sphi 0, %s33
    %s34 = sphi 0, %s31
    %s35 = sphi 0, %s34
    %s51 = sphi 0, %s35
    %s57 = sphi 0, %s59
    %s60 = sphi 0, %s57
    %s61 = sphi 0, %s60
    %s77 = sphi 0, %s61
    %s83 = sphi 0, %s85
    %s86 = sphi 0, %s83
    %s87 = sphi 0, %s86
    %s103 = sphi 0, %s87
    %s107 = sphi 0, %s107
    %s109 = sphi 0, %s107
    %s110 = sphi 0, %s109
    %s124 = sphi 0, %s110
    %s128 = sphi 0, %s128
    %s130 = sphi 0, %s128
    %s131 = sphi 0, %s130
    %s145 = sphi 0, %s131
    %s149 = sphi 0, %s149
    %s151 = sphi 0, %s149
    %s152 = sphi 0, %s151
    %s166 = sphi 0, %s152
    %s170 = sphi 0, %s170
    %s172 = sphi 0, %s170
    %s173 = sphi 0, %s172
    %s187 = sphi 0, %s173
    %s191 = sphi 0, %s191
    %s193 = sphi 0, %s191
    %s194 = sphi 0, %s193
    %s208 = sphi 0, %s194
    %s212 = sphi 0, %s212
    %s214 = sphi 0, %s212
    %s215 = sphi 0, %s214
    %s229 = sphi 0, %s215
    %s233 = sphi 0, %s233
    %s235 = sphi 0, %s233
    %s236 = sphi 0, %s235
    %s250 = sphi 0, %s236
    %s254 = sphi 0, %s254
    %s256 = sphi 0, %s254
    %s257 = sphi 0, %s256
    %s271 = sphi 0, %s257
    %s275 = sphi 0, %s275
    %s277 = sphi 0, %s275
    %s278 = sphi 0, %s277
    %s292 = sphi 0, %s278
    %s296 = sphi 0, %s296
    %s298 = sphi 0, %s296
    %s299 = sphi 0, %s298
    %s313 = sphi 0, %s299
    %s317 = sphi 0, %s317
    %s319 = sphi 0, %s317
    %s320 = sphi 0, %s319
    %s334 = sphi 0, %s320
    %s338 = sphi 0, %s338
    %s340 = sphi 0, %s338
    %s341 = sphi 0, %s340
    %s355 = sphi 0, %s341
    %s361 = sphi 0, %s363
    %s364 = sphi 0, %s361
    %s365 = sphi 0, %s364
    %s381 = sphi 0, %s365
  $region4: #{splat_atte_basic.1} parent=0 // loop_header_branch
    %24 = sbr.rel (%p22) target = $region8
  $region5: #{splat_atte_basic.1} parent=0 // loop_body
    %s26 = ssub.s32 %s21, 1
    %s27 = ssub.s32 %s21, 2
    %s28 = sadd.s32 %s21, 1
    %s29 = ssub.s32 %s21, %s28
    %p30 = scmp.eq.s32.totalorder %s29, 0
    %s32 = sadd.s32 %s31, 1
    %s33 = scalar_select %p30, %s31, %s32
    %p36 = pneg %p30
    %p37 = scmp.eq.s32.totalorder %s21, 1
    %p38 = por %p36, %p37
    %p39 = scmp.ne.s32.totalorder %s31, %s34
    %p40 = scmp.eq.s32.totalorder %s21, 0
    %p41 = por %p39, %p40
    %p42 = scmp.ne.s32.totalorder %s31, %s34
    %p43 = scmp.eq.s32.totalorder %s26, 1
    %p44 = por %p42, %p43
    %p45 = scmp.ne.s32.totalorder %s34, %s35
    %p46 = scmp.eq.s32.totalorder %s26, 0
    %p47 = por %p45, %p46
    %p48 = scmp.ne.s32.totalorder %s34, %s35
    %p49 = scmp.eq.s32.totalorder %s27, 1
    %p50 = por %p48, %p49
    %p52 = scmp.ne.s32.totalorder %s35, %s51
    %p53 = scmp.eq.s32.totalorder %s27, 0
    %p54 = por %p52, %p53
    %s55 = ssub.s32 %s21, %s28
    %p56 = scmp.eq.s32.totalorder %s55, 0
    %s58 = sadd.s32 %s57, 1
    %s59 = scalar_select %p56, %s57, %s58
    %p62 = pneg %p56
    %p63 = scmp.eq.s32.totalorder %s21, 1
    %p64 = por %p62, %p63
    %p65 = scmp.ne.s32.totalorder %s57, %s60
    %p66 = scmp.eq.s32.totalorder %s21, 0
    %p67 = por %p65, %p66
    %p68 = scmp.ne.s32.totalorder %s57, %s60
    %p69 = scmp.eq.s32.totalorder %s26, 1
    %p70 = por %p68, %p69
    %p71 = scmp.ne.s32.totalorder %s60, %s61
    %p72 = scmp.eq.s32.totalorder %s26, 0
    %p73 = por %p71, %p72
    %p74 = scmp.ne.s32.totalorder %s60, %s61
    %p75 = scmp.eq.s32.totalorder %s27, 1
    %p76 = por %p74, %p75
    %p78 = scmp.ne.s32.totalorder %s61, %s77
    %p79 = scmp.eq.s32.totalorder %s27, 0
    %p80 = por %p78, %p79
    %s81 = ssub.s32 %s21, %s28
    %p82 = scmp.eq.s32.totalorder %s81, 0
    %s84 = sadd.s32 %s83, 1
    %s85 = scalar_select %p82, %s83, %s84
    %p88 = pneg %p82
    %p89 = scmp.eq.s32.totalorder %s21, 1
    %p90 = por %p88, %p89
    %p91 = scmp.ne.s32.totalorder %s83, %s86
    %p92 = scmp.eq.s32.totalorder %s21, 0
    %p93 = por %p91, %p92
    %p94 = scmp.ne.s32.totalorder %s83, %s86
    %p95 = scmp.eq.s32.totalorder %s26, 1
    %p96 = por %p94, %p95
    %p97 = scmp.ne.s32.totalorder %s86, %s87
    %p98 = scmp.eq.s32.totalorder %s26, 0
    %p99 = por %p97, %p98
    %p100 = scmp.ne.s32.totalorder %s86, %s87
    %p101 = scmp.eq.s32.totalorder %s27, 1
    %p102 = por %p100, %p101
    %p104 = scmp.ne.s32.totalorder %s87, %s103
    %p105 = scmp.eq.s32.totalorder %s27, 0
    %p106 = por %p104, %p105
    %s108 = sadd.s32 %s107, 1
    %p111 = scmp.eq.s32.totalorder %s21, 1
    %p112 = scmp.ne.s32.totalorder %s107, %s109
    %p113 = scmp.eq.s32.totalorder %s21, 0
    %p114 = por %p112, %p113
    %p115 = scmp.ne.s32.totalorder %s107, %s109
    %p116 = scmp.eq.s32.totalorder %s26, 1
    %p117 = por %p115, %p116
    %p118 = scmp.ne.s32.totalorder %s109, %s110
    %p119 = scmp.eq.s32.totalorder %s26, 0
    %p120 = por %p118, %p119
    %p121 = scmp.ne.s32.totalorder %s109, %s110
    %p122 = scmp.eq.s32.totalorder %s27, 1
    %p123 = por %p121, %p122
    %p125 = scmp.ne.s32.totalorder %s110, %s124
    %p126 = scmp.eq.s32.totalorder %s27, 0
    %p127 = por %p125, %p126
    %s129 = sadd.s32 %s128, 1
    %p132 = scmp.eq.s32.totalorder %s21, 1
    %p133 = scmp.ne.s32.totalorder %s128, %s130
    %p134 = scmp.eq.s32.totalorder %s21, 0
    %p135 = por %p133, %p134
    %p136 = scmp.ne.s32.totalorder %s128, %s130
    %p137 = scmp.eq.s32.totalorder %s26, 1
    %p138 = por %p136, %p137
    %p139 = scmp.ne.s32.totalorder %s130, %s131
    %p140 = scmp.eq.s32.totalorder %s26, 0
    %p141 = por %p139, %p140
    %p142 = scmp.ne.s32.totalorder %s130, %s131
    %p143 = scmp.eq.s32.totalorder %s27, 1
    %p144 = por %p142, %p143
    %p146 = scmp.ne.s32.totalorder %s131, %s145
    %p147 = scmp.eq.s32.totalorder %s27, 0
    %p148 = por %p146, %p147
    %s150 = sadd.s32 %s149, 1
    %p153 = scmp.eq.s32.totalorder %s21, 1
    %p154 = scmp.ne.s32.totalorder %s149, %s151
    %p155 = scmp.eq.s32.totalorder %s21, 0
    %p156 = por %p154, %p155
    %p157 = scmp.ne.s32.totalorder %s149, %s151
    %p158 = scmp.eq.s32.totalorder %s26, 1
    %p159 = por %p157, %p158
    %p160 = scmp.ne.s32.totalorder %s151, %s152
    %p161 = scmp.eq.s32.totalorder %s26, 0
    %p162 = por %p160, %p161
    %p163 = scmp.ne.s32.totalorder %s151, %s152
    %p164 = scmp.eq.s32.totalorder %s27, 1
    %p165 = por %p163, %p164
    %p167 = scmp.ne.s32.totalorder %s152, %s166
    %p168 = scmp.eq.s32.totalorder %s27, 0
    %p169 = por %p167, %p168
    %s171 = sadd.s32 %s170, 1
    %p174 = scmp.eq.s32.totalorder %s21, 1
    %p175 = scmp.ne.s32.totalorder %s170, %s172
    %p176 = scmp.eq.s32.totalorder %s21, 0
    %p177 = por %p175, %p176
    %p178 = scmp.ne.s32.totalorder %s170, %s172
    %p179 = scmp.eq.s32.totalorder %s26, 1
    %p180 = por %p178, %p179
    %p181 = scmp.ne.s32.totalorder %s172, %s173
    %p182 = scmp.eq.s32.totalorder %s26, 0
    %p183 = por %p181, %p182
    %p184 = scmp.ne.s32.totalorder %s172, %s173
    %p185 = scmp.eq.s32.totalorder %s27, 1
    %p186 = por %p184, %p185
    %p188 = scmp.ne.s32.totalorder %s173, %s187
    %p189 = scmp.eq.s32.totalorder %s27, 0
    %p190 = por %p188, %p189
    %s192 = sadd.s32 %s191, 1
    %p195 = scmp.eq.s32.totalorder %s21, 1
    %p196 = scmp.ne.s32.totalorder %s191, %s193
    %p197 = scmp.eq.s32.totalorder %s21, 0
    %p198 = por %p196, %p197
    %p199 = scmp.ne.s32.totalorder %s191, %s193
    %p200 = scmp.eq.s32.totalorder %s26, 1
    %p201 = por %p199, %p200
    %p202 = scmp.ne.s32.totalorder %s193, %s194
    %p203 = scmp.eq.s32.totalorder %s26, 0
    %p204 = por %p202, %p203
    %p205 = scmp.ne.s32.totalorder %s193, %s194
    %p206 = scmp.eq.s32.totalorder %s27, 1
    %p207 = por %p205, %p206
    %p209 = scmp.ne.s32.totalorder %s194, %s208
    %p210 = scmp.eq.s32.totalorder %s27, 0
    %p211 = por %p209, %p210
    %s213 = sadd.s32 %s212, 1
    %p216 = scmp.eq.s32.totalorder %s21, 1
    %p217 = scmp.ne.s32.totalorder %s212, %s214
    %p218 = scmp.eq.s32.totalorder %s21, 0
    %p219 = por %p217, %p218
    %p220 = scmp.ne.s32.totalorder %s212, %s214
    %p221 = scmp.eq.s32.totalorder %s26, 1
    %p222 = por %p220, %p221
    %p223 = scmp.ne.s32.totalorder %s214, %s215
    %p224 = scmp.eq.s32.totalorder %s26, 0
    %p225 = por %p223, %p224
    %p226 = scmp.ne.s32.totalorder %s214, %s215
    %p227 = scmp.eq.s32.totalorder %s27, 1
    %p228 = por %p226, %p227
    %p230 = scmp.ne.s32.totalorder %s215, %s229
    %p231 = scmp.eq.s32.totalorder %s27, 0
    %p232 = por %p230, %p231
    %s234 = sadd.s32 %s233, 1
    %p237 = scmp.eq.s32.totalorder %s21, 1
    %p238 = scmp.ne.s32.totalorder %s233, %s235
    %p239 = scmp.eq.s32.totalorder %s21, 0
    %p240 = por %p238, %p239
    %p241 = scmp.ne.s32.totalorder %s233, %s235
    %p242 = scmp.eq.s32.totalorder %s26, 1
    %p243 = por %p241, %p242
    %p244 = scmp.ne.s32.totalorder %s235, %s236
    %p245 = scmp.eq.s32.totalorder %s26, 0
    %p246 = por %p244, %p245
    %p247 = scmp.ne.s32.totalorder %s235, %s236
    %p248 = scmp.eq.s32.totalorder %s27, 1
    %p249 = por %p247, %p248
    %p251 = scmp.ne.s32.totalorder %s236, %s250
    %p252 = scmp.eq.s32.totalorder %s27, 0
    %p253 = por %p251, %p252
    %s255 = sadd.s32 %s254, 1
    %p258 = scmp.eq.s32.totalorder %s21, 1
    %p259 = scmp.ne.s32.totalorder %s254, %s256
    %p260 = scmp.eq.s32.totalorder %s21, 0
    %p261 = por %p259, %p260
    %p262 = scmp.ne.s32.totalorder %s254, %s256
    %p263 = scmp.eq.s32.totalorder %s26, 1
    %p264 = por %p262, %p263
    %p265 = scmp.ne.s32.totalorder %s256, %s257
    %p266 = scmp.eq.s32.totalorder %s26, 0
    %p267 = por %p265, %p266
    %p268 = scmp.ne.s32.totalorder %s256, %s257
    %p269 = scmp.eq.s32.totalorder %s27, 1
    %p270 = por %p268, %p269
    %p272 = scmp.ne.s32.totalorder %s257, %s271
    %p273 = scmp.eq.s32.totalorder %s27, 0
    %p274 = por %p272, %p273
    %s276 = sadd.s32 %s275, 1
    %p279 = scmp.eq.s32.totalorder %s21, 1
    %p280 = scmp.ne.s32.totalorder %s275, %s277
    %p281 = scmp.eq.s32.totalorder %s21, 0
    %p282 = por %p280, %p281
    %p283 = scmp.ne.s32.totalorder %s275, %s277
    %p284 = scmp.eq.s32.totalorder %s26, 1
    %p285 = por %p283, %p284
    %p286 = scmp.ne.s32.totalorder %s277, %s278
    %p287 = scmp.eq.s32.totalorder %s26, 0
    %p288 = por %p286, %p287
    %p289 = scmp.ne.s32.totalorder %s277, %s278
    %p290 = scmp.eq.s32.totalorder %s27, 1
    %p291 = por %p289, %p290
    %p293 = scmp.ne.s32.totalorder %s278, %s292
    %p294 = scmp.eq.s32.totalorder %s27, 0
    %p295 = por %p293, %p294
    %s297 = sadd.s32 %s296, 1
    %p300 = scmp.eq.s32.totalorder %s21, 1
    %p301 = scmp.ne.s32.totalorder %s296, %s298
    %p302 = scmp.eq.s32.totalorder %s21, 0
    %p303 = por %p301, %p302
    %p304 = scmp.ne.s32.totalorder %s296, %s298
    %p305 = scmp.eq.s32.totalorder %s26, 1
    %p306 = por %p304, %p305
    %p307 = scmp.ne.s32.totalorder %s298, %s299
    %p308 = scmp.eq.s32.totalorder %s26, 0
    %p309 = por %p307, %p308
    %p310 = scmp.ne.s32.totalorder %s298, %s299
    %p311 = scmp.eq.s32.totalorder %s27, 1
    %p312 = por %p310, %p311
    %p314 = scmp.ne.s32.totalorder %s299, %s313
    %p315 = scmp.eq.s32.totalorder %s27, 0
    %p316 = por %p314, %p315
    %s318 = sadd.s32 %s317, 1
    %p321 = scmp.eq.s32.totalorder %s21, 1
    %p322 = scmp.ne.s32.totalorder %s317, %s319
    %p323 = scmp.eq.s32.totalorder %s21, 0
    %p324 = por %p322, %p323
    %p325 = scmp.ne.s32.totalorder %s317, %s319
    %p326 = scmp.eq.s32.totalorder %s26, 1
    %p327 = por %p325, %p326
    %p328 = scmp.ne.s32.totalorder %s319, %s320
    %p329 = scmp.eq.s32.totalorder %s26, 0
    %p330 = por %p328, %p329
    %p331 = scmp.ne.s32.totalorder %s319, %s320
    %p332 = scmp.eq.s32.totalorder %s27, 1
    %p333 = por %p331, %p332
    %p335 = scmp.ne.s32.totalorder %s320, %s334
    %p336 = scmp.eq.s32.totalorder %s27, 0
    %p337 = por %p335, %p336
    %s339 = sadd.s32 %s338, 1
    %p342 = scmp.eq.s32.totalorder %s21, 1
    %p343 = scmp.ne.s32.totalorder %s338, %s340
    %p344 = scmp.eq.s32.totalorder %s21, 0
    %p345 = por %p343, %p344
    %p346 = scmp.ne.s32.totalorder %s338, %s340
    %p347 = scmp.eq.s32.totalorder %s26, 1
    %p348 = por %p346, %p347
    %p349 = scmp.ne.s32.totalorder %s340, %s341
    %p350 = scmp.eq.s32.totalorder %s26, 0
    %p351 = por %p349, %p350
    %p352 = scmp.ne.s32.totalorder %s340, %s341
    %p353 = scmp.eq.s32.totalorder %s27, 1
    %p354 = por %p352, %p353
    %p356 = scmp.ne.s32.totalorder %s341, %s355
    %p357 = scmp.eq.s32.totalorder %s27, 0
    %p358 = por %p356, %p357
    %s359 = ssub.s32 %s21, %s28
    %p360 = scmp.eq.s32.totalorder %s359, 0
    %s362 = sadd.s32 %s361, 1
    %s363 = scalar_select %p360, %s361, %s362
    %p366 = pneg %p360
    %p367 = scmp.eq.s32.totalorder %s21, 1
    %p368 = por %p366, %p367
    %p369 = scmp.ne.s32.totalorder %s361, %s364
    %p370 = scmp.eq.s32.totalorder %s21, 0
    %p371 = por %p369, %p370
    %p372 = scmp.ne.s32.totalorder %s361, %s364
    %p373 = scmp.eq.s32.totalorder %s26, 1
    %p374 = por %p372, %p373
    %p375 = scmp.ne.s32.totalorder %s364, %s365
    %p376 = scmp.eq.s32.totalorder %s26, 0
    %p377 = por %p375, %p376
    %p378 = scmp.ne.s32.totalorder %s364, %s365
    %p379 = scmp.eq.s32.totalorder %s27, 1
    %p380 = por %p378, %p379
    %p382 = scmp.ne.s32.totalorder %s365, %s381
    %p383 = scmp.eq.s32.totalorder %s27, 0
    %p384 = por %p382, %p383
    %p385 = scmp.le.s32.totalorder 1, %s21
    %p386 = scmp.lt.s32.totalorder %s21, 3
    %p387 = pnand %p385, %p386
    %p388 = pneg %p387
    // Predicated region
    $region9: #{splat_atte_basic.1} parent=5 // pred_check
      _
    $region10: #{splat_atte_basic.1} parent=5 // pred_check_branch
      %390 = sbr.rel (%p387) target = $region12
    $region11: #{splat_atte_basic.1} parent=5 // pred_region
      %s391 = ssub.s32 %s21, 1
      // Predicated region
      $region13: #{splat_atte_basic.1} parent=11 // pred_check
        %p392 = pneg %p120
      $region14: #{splat_atte_basic.1} parent=11 // pred_check_branch
        %394 = sbr.rel (%p392) target = $region16
      $region15: #{splat_atte_basic.1} parent=11 // pred_region
        _
      $region16: #{splat_atte_basic.1} parent=11 // pred_fallthru
        _
      // Predicated region
      $region17: #{splat_atte_basic.1} parent=11 // pred_check
        %p395 = pneg %p141
      $region18: #{splat_atte_basic.1} parent=11 // pred_check_branch
        %397 = sbr.rel (%p395) target = $region20
      $region19: #{splat_atte_basic.1} parent=11 // pred_region
        _
      $region20: #{splat_atte_basic.1} parent=11 // pred_fallthru
        _
      // Predicated region
      $region21: #{splat_atte_basic.1} parent=11 // pred_check
        %p398 = pneg %p162
      $region22: #{splat_atte_basic.1} parent=11 // pred_check_branch
        %400 = sbr.rel (%p398) target = $region24
      $region23: #{splat_atte_basic.1} parent=11 // pred_region
        _
      $region24: #{splat_atte_basic.1} parent=11 // pred_fallthru
        _
      // Predicated region
      $region25: #{splat_atte_basic.1} parent=11 // pred_check
        %p401 = pneg %p183
      $region26: #{splat_atte_basic.1} parent=11 // pred_check_branch
        %403 = sbr.rel (%p401) target = $region28
      $region27: #{splat_atte_basic.1} parent=11 // pred_region
        _
      $region28: #{splat_atte_basic.1} parent=11 // pred_fallthru
        _
      // Predicated region
      $region29: #{splat_atte_basic.1} parent=11 // pred_check
        %p404 = pneg %p204
      $region30: #{splat_atte_basic.1} parent=11 // pred_check_branch
        %406 = sbr.rel (%p404) target = $region32
      $region31: #{splat_atte_basic.1} parent=11 // pred_region
        _
      $region32: #{splat_atte_basic.1} parent=11 // pred_fallthru
        _
      // Predicated region
      $region33: #{splat_atte_basic.1} parent=11 // pred_check
        %p407 = pneg %p225
      $region34: #{splat_atte_basic.1} parent=11 // pred_check_branch
        %409 = sbr.rel (%p407) target = $region36
      $region35: #{splat_atte_basic.1} parent=11 // pred_region
        _
      $region36: #{splat_atte_basic.1} parent=11 // pred_fallthru
        _
      // Predicated region
      $region37: #{splat_atte_basic.1} parent=11 // pred_check
        %p410 = pneg %p246
      $region38: #{splat_atte_basic.1} parent=11 // pred_check_branch
        %412 = sbr.rel (%p410) target = $region40
      $region39: #{splat_atte_basic.1} parent=11 // pred_region
        _
      $region40: #{splat_atte_basic.1} parent=11 // pred_fallthru
        _
      // Predicated region
      $region41: #{splat_atte_basic.1} parent=11 // pred_check
        %p413 = pneg %p267
      $region42: #{splat_atte_basic.1} parent=11 // pred_check_branch
        %415 = sbr.rel (%p413) target = $region44
      $region43: #{splat_atte_basic.1} parent=11 // pred_region
        _
      $region44: #{splat_atte_basic.1} parent=11 // pred_fallthru
        _
      // Predicated region
      $region45: #{splat_atte_basic.1} parent=11 // pred_check
        %p416 = pneg %p288
      $region46: #{splat_atte_basic.1} parent=11 // pred_check_branch
        %418 = sbr.rel (%p416) target = $region48
      $region47: #{splat_atte_basic.1} parent=11 // pred_region
        _
      $region48: #{splat_atte_basic.1} parent=11 // pred_fallthru
        _
      // Predicated region
      $region49: #{splat_atte_basic.1} parent=11 // pred_check
        %p419 = pneg %p309
      $region50: #{splat_atte_basic.1} parent=11 // pred_check_branch
        %421 = sbr.rel (%p419) target = $region52
      $region51: #{splat_atte_basic.1} parent=11 // pred_region
        _
      $region52: #{splat_atte_basic.1} parent=11 // pred_fallthru
        _
      // Predicated region
      $region53: #{splat_atte_basic.1} parent=11 // pred_check
        %p422 = pneg %p330
      $region54: #{splat_atte_basic.1} parent=11 // pred_check_branch
        %424 = sbr.rel (%p422) target = $region56
      $region55: #{splat_atte_basic.1} parent=11 // pred_region
        _
      $region56: #{splat_atte_basic.1} parent=11 // pred_fallthru
        _
      // Predicated region
      $region57: #{splat_atte_basic.1} parent=11 // pred_check
        %p425 = pneg %p351
      $region58: #{splat_atte_basic.1} parent=11 // pred_check_branch
        %427 = sbr.rel (%p425) target = $region60
      $region59: #{splat_atte_basic.1} parent=11 // pred_region
        _
      $region60: #{splat_atte_basic.1} parent=11 // pred_fallthru
        _
    $region12: #{splat_atte_basic.1} parent=5 // pred_fallthru
      _
    %p428 = scmp.lt.s32.totalorder %s21, 2
    // Predicated region
    $region61: #{splat_atte_basic.1} parent=5 // pred_check
      %p429 = pneg %p428
    $region62: #{splat_atte_basic.1} parent=5 // pred_check_branch
      %431 = sbr.rel (%p429) target = $region64
    $region63: #{splat_atte_basic.1} parent=5 // pred_region
      // Predicated region
      $region65: #{splat_atte_basic.1} parent=63 // pred_check
        %p432 = pneg %p41
      $region66: #{splat_atte_basic.1} parent=63 // pred_check_branch
        %434 = sbr.rel (%p432) target = $region68
      $region67: #{splat_atte_basic.1} parent=63 // pred_region
        %p435 = scmp.lt.s32.totalorder %s21, 1
        %s436 = scalar_select %p435, %s21, 1
        %s437 = smul.addr %s436, 20
        %s438 = smul.addr %s437, 4
        %s439 = scalar_lea.vmem %s0, %s438
      $region68: #{splat_atte_basic.1} parent=63 // pred_fallthru
        _
      // Predicated region
      $region69: #{splat_atte_basic.1} parent=63 // pred_check
        %p440 = pneg %p67
      $region70: #{splat_atte_basic.1} parent=63 // pred_check_branch
        %442 = sbr.rel (%p440) target = $region72
      $region71: #{splat_atte_basic.1} parent=63 // pred_region
        %p443 = scmp.lt.s32.totalorder %s21, 1
        %s444 = scalar_select %p443, %s21, 1
        %s445 = smul.addr %s444, 20
        %s446 = smul.addr %s445, 4
        %s447 = scalar_lea.vmem %s1, %s446
      $region72: #{splat_atte_basic.1} parent=63 // pred_fallthru
        _
      // Predicated region
      $region73: #{splat_atte_basic.1} parent=63 // pred_check
        %p448 = pneg %p93
      $region74: #{splat_atte_basic.1} parent=63 // pred_check_branch
        %450 = sbr.rel (%p448) target = $region76
      $region75: #{splat_atte_basic.1} parent=63 // pred_region
        %p451 = scmp.lt.s32.totalorder %s21, 1
        %s452 = scalar_select %p451, %s21, 1
        %s453 = smul.addr %s452, 8
        %s454 = smul.addr %s453, 8
        %s455 = scalar_lea.vmem %s2, %s454
      $region76: #{splat_atte_basic.1} parent=63 // pred_fallthru
        _
    $region64: #{splat_atte_basic.1} parent=5 // pred_fallthru
      _
    %p456 = scmp.le.s32.totalorder 1, %s21
    %p457 = scmp.lt.s32.totalorder %s21, 3
    %p458 = pnand %p456, %p457
    %p459 = pneg %p458
    // Predicated region
    $region77: #{splat_atte_basic.1} parent=5 // pred_check
      _
    $region78: #{splat_atte_basic.1} parent=5 // pred_check_branch
      %461 = sbr.rel (%p458) target = $region80
    $region79: #{splat_atte_basic.1} parent=5 // pred_region
      %s462 = ssub.s32 %s21, 1
      %p463 = scmp.lt.s32.totalorder %s26, 1
      %s464 = scalar_select %p463, %s26, 1
      %s465 = smul.addr %s464, 20
      %s466 = smul.addr %s465, 4
      %s467 = scalar_lea.vmem %s0, %s466
      %p468 = pneg %p47
      %p469 = pneg %p44
      %p470 = scmp.lt.s32.totalorder %s26, 1
      %s471 = scalar_select %p470, %s26, 1
      %s472 = smul.addr %s471, 20
      %s473 = smul.addr %s472, 4
      %s474 = scalar_lea.vmem %s1, %s473
      %p475 = pneg %p73
      %p476 = pneg %p70
      %p477 = scmp.lt.s32.totalorder %s26, 1
      %s478 = scalar_select %p477, %s26, 1
      %s479 = smul.addr %s478, 8
      %s480 = smul.addr %s479, 8
      %s481 = scalar_lea.vmem %s2, %s480
      %p482 = pneg %p99
      %p483 = pneg %p96
      %p484 = pneg %p120
      %p485 = pneg %p117
      %p486 = pneg %p141
      %p487 = pneg %p138
      %p488 = pneg %p162
      %p489 = pneg %p159
      %p490 = pneg %p183
      %p491 = pneg %p180
      %p492 = pneg %p204
      %p493 = pneg %p201
      %p494 = pneg %p225
      %p495 = pneg %p222
      %p496 = pneg %p246
      %p497 = pneg %p243
      %p498 = pneg %p267
      %p499 = pneg %p264
      %p500 = pneg %p288
      %p501 = pneg %p285
      %p502 = pneg %p309
      %p503 = pneg %p306
      %p504 = pneg %p330
      %p505 = pneg %p327
      %p506 = pneg %p351
      %p507 = pneg %p348
      %p508 = pneg %p377
      %p509 = pneg %p374
      %p510 = scmp.lt.s32.totalorder %s26, 1
      %s511 = scalar_select %p510, %s26, 1
      %s512 = smul.addr %s511, 8
      %s513 = smul.addr %s512, 8
      %s514 = scalar_lea.vmem %s15, %s513
      %p515 = scmp.lt.s32.totalorder %s26, 1
      %s516 = scalar_select %p515, %s26, 1
      %s517 = smul.addr %s516, 20
      %s518 = smul.addr %s517, 4
      %s519 = scalar_lea.vmem %s0, %s518
      %p520 = scmp.lt.s32.totalorder %s26, 1
      %s521 = scalar_select %p520, %s26, 1
      %s522 = smul.addr %s521, 20
      %s523 = smul.addr %s522, 4
      %s524 = scalar_lea.vmem %s1, %s523
      %p525 = scmp.lt.s32.totalorder %s26, 1
      %s526 = scalar_select %p525, %s26, 1
      %s527 = smul.addr %s526, 8
      %s528 = smul.addr %s527, 8
      %s529 = scalar_lea.vmem %s2, %s528
      %p530 = scmp.lt.s32.totalorder %s26, 1
      %s531 = scalar_select %p530, %s26, 1
      %s532 = smul.addr %s531, 8
      %s533 = smul.addr %s532, 8
      %s534 = scalar_lea.vmem %s15, %s533
      %v536 = vld [vmem:[%s519] sm:$0xf]
      %v537 = vld [vmem:[%s519 + $0x8] sm:$0xf]
      %v538 = vld [vmem:[%s519 + $0x10] sm:$0xf]
      %v539 = vld [vmem:[%s519 + $0x18] sm:$0xf]
      %v540 = vld [vmem:[%s519 + $0x20] sm:$0xf]
      %v541 = vld [vmem:[%s519 + $0x28] sm:$0xf]
      %v542 = vld [vmem:[%s519 + $0x30] sm:$0xf]
      %v543 = vld [vmem:[%s519 + $0x38] sm:$0xf]
      %v544 = vld [vmem:[%s3] sm:$0x3]
      %v545 = vld [vmem:[%s519 + $0x4] sm:$0x1]
      %v546 = vld [vmem:[%s519 + $0xc] sm:$0x1]
      %v547 = vld [vmem:[%s519 + $0x14] sm:$0x1]
      %v548 = vld [vmem:[%s519 + $0x1c] sm:$0x1]
      %v549 = vld [vmem:[%s519 + $0x24] sm:$0x1]
      %v550 = vld [vmem:[%s519 + $0x2c] sm:$0x1]
      %v551 = vld [vmem:[%s519 + $0x34] sm:$0x1]
      %v552 = vld [vmem:[%s519 + $0x3c] sm:$0x1]
      %vm553 = vsmask.f32 3328
      %vm554 = vsmask.f32 7440
      %vm555 = vmor %vm553, %vm554
      %v557 = vshrl.u32 %v536, 16
      %v559 = vrot.slane %v557, 4
      %v560 = vshll.u32 %v536, 16
      %v562 = vrot.slane %v560, 5
      %v563 = vor.u32 %v559, %v562
      %v564 = vrot.slane %v563, 4
      %v566 = vshll.u32 %v545, 16
      %v568 = vrot.slane %v566, 5
      %v569 = vsel %vm555, %v564, %v568
      %v571 = vshrl.u32 %v537, 16
      %v573 = vrot.slane %v571, 4
      %v574 = vshll.u32 %v537, 16
      %v576 = vrot.slane %v574, 5
      %v577 = vor.u32 %v573, %v576
      %v578 = vrot.slane %v577, 4
      %v580 = vshll.u32 %v546, 16
      %v582 = vrot.slane %v580, 5
      %v583 = vsel %vm555, %v578, %v582
      %v585 = vshrl.u32 %v538, 16
      %v587 = vrot.slane %v585, 4
      %v588 = vshll.u32 %v538, 16
      %v590 = vrot.slane %v588, 5
      %v591 = vor.u32 %v587, %v590
      %v592 = vrot.slane %v591, 4
      %v594 = vshll.u32 %v547, 16
      %v596 = vrot.slane %v594, 5
      %v597 = vsel %vm555, %v592, %v596
      %v599 = vshrl.u32 %v539, 16
      %v601 = vrot.slane %v599, 4
      %v602 = vshll.u32 %v539, 16
      %v604 = vrot.slane %v602, 5
      %v605 = vor.u32 %v601, %v604
      %v606 = vrot.slane %v605, 4
      %v608 = vshll.u32 %v548, 16
      %v610 = vrot.slane %v608, 5
      %v611 = vsel %vm555, %v606, %v610
      %v613 = vshrl.u32 %v540, 16
      %v615 = vrot.slane %v613, 4
      %v616 = vshll.u32 %v540, 16
      %v618 = vrot.slane %v616, 5
      %v619 = vor.u32 %v615, %v618
      %v620 = vrot.slane %v619, 4
      %v622 = vshll.u32 %v549, 16
      %v624 = vrot.slane %v622, 5
      %v625 = vsel %vm555, %v620, %v624
      %v627 = vshrl.u32 %v541, 16
      %v629 = vrot.slane %v627, 4
      %v630 = vshll.u32 %v541, 16
      %v632 = vrot.slane %v630, 5
      %v633 = vor.u32 %v629, %v632
      %v634 = vrot.slane %v633, 4
      %v636 = vshll.u32 %v550, 16
      %v638 = vrot.slane %v636, 5
      %v639 = vsel %vm555, %v634, %v638
      %v641 = vshrl.u32 %v542, 16
      %v643 = vrot.slane %v641, 4
      %v644 = vshll.u32 %v542, 16
      %v646 = vrot.slane %v644, 5
      %v647 = vor.u32 %v643, %v646
      %v648 = vrot.slane %v647, 4
      %v650 = vshll.u32 %v551, 16
      %v652 = vrot.slane %v650, 5
      %v653 = vsel %vm555, %v648, %v652
      %v655 = vshrl.u32 %v543, 16
      %v657 = vrot.slane %v655, 4
      %v658 = vshll.u32 %v543, 16
      %v660 = vrot.slane %v658, 5
      %v661 = vor.u32 %v657, %v660
      %v662 = vrot.slane %v661, 4
      %v664 = vshll.u32 %v552, 16
      %v666 = vrot.slane %v664, 5
      %v667 = vsel %vm555, %v662, %v666
      %s668 = scalar_lea.vmem %s3, 2
      %v669 = vld [vmem:[%s668] sm:$0x3]
      %v670 = vunpack.c.l.b16 %v569
      %v671 = vunpack.c.l.b16 %v583
      %v672 = vunpack.c.l.b16 %v597
      %v673 = vunpack.c.l.b16 %v611
      %v674 = vunpack.c.l.b16 %v625
      %v675 = vunpack.c.l.b16 %v639
      %v676 = vunpack.c.l.b16 %v653
      %v677 = vunpack.c.l.b16 %v667
      %v678 = vpack.c.b16 %v671, %v670
      %v679 = vpack.c.b16 %v673, %v672
      %v680 = vpack.c.b16 %v675, %v674
      %v681 = vpack.c.b16 %v677, %v676
      %vm682 = vcmask 31744
      %v684 = vsel %vm682, %v678, 0
      %v687 = vsel %vm682, %v679, 0
      %v690 = vsel %vm682, %v680, 0
      %v693 = vsel %vm682, %v681, 0
      %vm695 = vcmask 1041408
      %v697 = vsel %vm695, %v669, 0
      %699 = vmatprep.subr.bf16.mxu0 0
      %700 = vmatpush1.bf16.msra.mxu0 0
      %701 = vmatprep.subr.bf16.mxu0 0
      %702 = vmatpush1.bf16.msra.mxu0 0
      %703 = vmatprep.subr.bf16.mxu0 0
      %704 = vmatpush1.bf16.msra.mxu0 0
      %705 = vmatprep.subr.bf16.mxu0 0
      %706 = vmatpush1.bf16.msra.mxu0 0
      %707 = vmatprep.subr.bf16.mxu0 0
      %708 = vmatpush1.bf16.msra.mxu0 0
      %709 = vmatprep.subr.bf16.mxu0 0
      %710 = vmatpush1.bf16.msra.mxu0 0
      %711 = vmatprep.subr.bf16.mxu0 0
      %712 = vmatpush1.bf16.msra.mxu0 0
      %713 = vmatprep.subr.bf16.mxu0 0
      %714 = vmatpush1.bf16.msra.mxu0 %v697
      %715 = vmatprep.subr.bf16.mxu0 0
      %716 = vmatpush2.bf16.msra.mxu0 0
      %717 = vmatprep.subr.bf16.mxu0 0
      %718 = vmatpush2.bf16.msra.mxu0 0
      %719 = vmatprep.subr.bf16.mxu0 0
      %720 = vmatpush2.bf16.msra.mxu0 0
      %721 = vmatprep.subr.bf16.mxu0 0
      %722 = vmatpush2.bf16.msra.mxu0 0
      %723 = vmatprep.subr.bf16.mxu0 0
      %724 = vmatpush2.bf16.msra.mxu0 0
      %725 = vmatprep.subr.bf16.mxu0 0
      %726 = vmatpush2.bf16.msra.mxu0 0
      %727 = vmatprep.subr.bf16.mxu0 0
      %728 = vmatpush2.bf16.msra.mxu0 0
      %729 = vmatprep.subr.bf16.mxu0 0
      %730 = vmatpush2.bf16.msra.mxu0 0
      %731 = vmatprep.mubr.bf16.mxu0 0
      %732 = vmatmul.mubr.bf16.gmra.mxu0 %v684
      %v733 = vpop.f32.mrf.mxu0
      %v734 = vadd.f32 0.0, %v733
      %v735 = vpop.f32.mrf.mxu0
      %v736 = vpop.f32.mrf.mxu0
      %v737 = vadd.f32 0.0, %v736
      %v738 = vpop.f32.mrf.mxu0
      %739 = vmatprep.mubr.bf16.mxu0 0
      %740 = vmatmul.mubr.bf16.gmra.mxu0 %v687
      %v741 = vpop.f32.mrf.mxu0
      %v742 = vadd.f32 0.0, %v741
      %v743 = vpop.f32.mrf.mxu0
      %v744 = vpop.f32.mrf.mxu0
      %v745 = vadd.f32 0.0, %v744
      %v746 = vpop.f32.mrf.mxu0
      %747 = vmatprep.mubr.bf16.mxu0 0
      %748 = vmatmul.mubr.bf16.gmra.mxu0 %v690
      %v749 = vpop.f32.mrf.mxu0
      %v750 = vadd.f32 0.0, %v749
      %v751 = vpop.f32.mrf.mxu0
      %v752 = vpop.f32.mrf.mxu0
      %v753 = vadd.f32 0.0, %v752
      %v754 = vpop.f32.mrf.mxu0
      %755 = vmatprep.mubr.bf16.mxu0 0
      %756 = vmatmul.mubr.bf16.gmra.mxu0 %v693
      %v757 = vpop.f32.mrf.mxu0
      %v758 = vadd.f32 0.0, %v757
      %v759 = vpop.f32.mrf.mxu0
      %v760 = vpop.f32.mrf.mxu0
      %v761 = vadd.f32 0.0, %v760
      %v762 = vpop.f32.mrf.mxu0
      %763 = vdwg.mxu0
      %v772 = vunpack.c.l.b16 %v536
      %v773 = vunpack.c.l.b16 %v537
      %v774 = vunpack.c.l.b16 %v538
      %v775 = vunpack.c.l.b16 %v539
      %v776 = vunpack.c.l.b16 %v540
      %v777 = vunpack.c.l.b16 %v541
      %v778 = vunpack.c.l.b16 %v542
      %v779 = vunpack.c.l.b16 %v543
      %v780 = vpack.c.b16 %v773, %v772
      %v781 = vpack.c.b16 %v775, %v774
      %v782 = vpack.c.b16 %v777, %v776
      %v783 = vpack.c.b16 %v779, %v778
      %v785 = vsel %vm682, %v780, 0
      %v788 = vsel %vm682, %v781, 0
      %v791 = vsel %vm682, %v782, 0
      %v794 = vsel %vm682, %v783, 0
      %v797 = vsel %vm695, %v544, 0
      %799 = vmatprep.subr.bf16.mxu0 0
      %800 = vmatpush1.bf16.msra.mxu0 0
      %801 = vmatprep.subr.bf16.mxu0 0
      %802 = vmatpush1.bf16.msra.mxu0 0
      %803 = vmatprep.subr.bf16.mxu0 0
      %804 = vmatpush1.bf16.msra.mxu0 0
      %805 = vmatprep.subr.bf16.mxu0 0
      %806 = vmatpush1.bf16.msra.mxu0 0
      %807 = vmatprep.subr.bf16.mxu0 0
      %808 = vmatpush1.bf16.msra.mxu0 0
      %809 = vmatprep.subr.bf16.mxu0 0
      %810 = vmatpush1.bf16.msra.mxu0 0
      %811 = vmatprep.subr.bf16.mxu0 0
      %812 = vmatpush1.bf16.msra.mxu0 0
      %813 = vmatprep.subr.bf16.mxu0 0
      %814 = vmatpush1.bf16.msra.mxu0 %v797
      %815 = vmatprep.subr.bf16.mxu0 0
      %816 = vmatpush2.bf16.msra.mxu0 0
      %817 = vmatprep.subr.bf16.mxu0 0
      %818 = vmatpush2.bf16.msra.mxu0 0
      %819 = vmatprep.subr.bf16.mxu0 0
      %820 = vmatpush2.bf16.msra.mxu0 0
      %821 = vmatprep.subr.bf16.mxu0 0
      %822 = vmatpush2.bf16.msra.mxu0 0
      %823 = vmatprep.subr.bf16.mxu0 0
      %824 = vmatpush2.bf16.msra.mxu0 0
      %825 = vmatprep.subr.bf16.mxu0 0
      %826 = vmatpush2.bf16.msra.mxu0 0
      %827 = vmatprep.subr.bf16.mxu0 0
      %828 = vmatpush2.bf16.msra.mxu0 0
      %829 = vmatprep.subr.bf16.mxu0 0
      %830 = vmatpush2.bf16.msra.mxu0 0
      %831 = vmatprep.mubr.bf16.mxu0 0
      %832 = vmatmul.mubr.bf16.gmra.mxu0 %v785
      %v833 = vpop.f32.mrf.mxu0
      %v834 = vadd.f32 %v734, %v833
      %v835 = vpop.f32.mrf.mxu0
      %v836 = vpop.f32.mrf.mxu0
      %v837 = vadd.f32 %v737, %v836
      %v838 = vpop.f32.mrf.mxu0
      %839 = vmatprep.mubr.bf16.mxu0 0
      %840 = vmatmul.mubr.bf16.gmra.mxu0 %v788
      %v841 = vpop.f32.mrf.mxu0
      %v842 = vadd.f32 %v742, %v841
      %v843 = vpop.f32.mrf.mxu0
      %v844 = vpop.f32.mrf.mxu0
      %v845 = vadd.f32 %v745, %v844
      %v846 = vpop.f32.mrf.mxu0
      %847 = vmatprep.mubr.bf16.mxu0 0
      %848 = vmatmul.mubr.bf16.gmra.mxu0 %v791
      %v849 = vpop.f32.mrf.mxu0
      %v850 = vadd.f32 %v750, %v849
      %v851 = vpop.f32.mrf.mxu0
      %v852 = vpop.f32.mrf.mxu0
      %v853 = vadd.f32 %v753, %v852
      %v854 = vpop.f32.mrf.mxu0
      %855 = vmatprep.mubr.bf16.mxu0 0
      %856 = vmatmul.mubr.bf16.gmra.mxu0 %v794
      %v857 = vpop.f32.mrf.mxu0
      %v858 = vadd.f32 %v758, %v857
      %v859 = vpop.f32.mrf.mxu0
      %v860 = vpop.f32.mrf.mxu0
      %v861 = vadd.f32 %v761, %v860
      %v862 = vpop.f32.mrf.mxu0
      %863 = vdwg.mxu0
      %v864 = vld [vmem:[%s519] sm:$0xe]
      %v865 = vld [vmem:[%s519 + $0x8] sm:$0xe]
      %v866 = vld [vmem:[%s519 + $0x10] sm:$0xe]
      %v867 = vld [vmem:[%s519 + $0x18] sm:$0xe]
      %v868 = vld [vmem:[%s519 + $0x20] sm:$0xe]
      %v869 = vld [vmem:[%s519 + $0x28] sm:$0xe]
      %v870 = vld [vmem:[%s519 + $0x30] sm:$0xe]
      %v871 = vld [vmem:[%s519 + $0x38] sm:$0xe]
      %vm888 = vcmask 1042432
      %vm889 = vcmask 1046532
      %vm890 = vmor %vm888, %vm889
      %v891 = vrot.slane %v864, 5
      %v892 = vrot.slane %v891, 4
      %v893 = vrot.slane %v545, 5
      %v894 = vsel %vm890, %v892, %v893
      %v895 = vrot.slane %v865, 5
      %v896 = vrot.slane %v895, 4
      %v897 = vrot.slane %v546, 5
      %v898 = vsel %vm890, %v896, %v897
      %v899 = vrot.slane %v866, 5
      %v900 = vrot.slane %v899, 4
      %v901 = vrot.slane %v547, 5
      %v902 = vsel %vm890, %v900, %v901
      %v903 = vrot.slane %v867, 5
      %v904 = vrot.slane %v903, 4
      %v905 = vrot.slane %v548, 5
      %v906 = vsel %vm890, %v904, %v905
      %v907 = vrot.slane %v868, 5
      %v908 = vrot.slane %v907, 4
      %v909 = vrot.slane %v549, 5
      %v910 = vsel %vm890, %v908, %v909
      %v911 = vrot.slane %v869, 5
      %v912 = vrot.slane %v911, 4
      %v913 = vrot.slane %v550, 5
      %v914 = vsel %vm890, %v912, %v913
      %v915 = vrot.slane %v870, 5
      %v916 = vrot.slane %v915, 4
      %v917 = vrot.slane %v551, 5
      %v918 = vsel %vm890, %v916, %v917
      %v919 = vrot.slane %v871, 5
      %v920 = vrot.slane %v919, 4
      %v921 = vrot.slane %v552, 5
      %v922 = vsel %vm890, %v920, %v921
      %s923 = scalar_lea.vmem %s3, 4
      %v924 = vld [vmem:[%s923] sm:$0x3]
      %v925 = vunpack.c.l.b16 %v894
      %v926 = vunpack.c.l.b16 %v898
      %v927 = vunpack.c.l.b16 %v902
      %v928 = vunpack.c.l.b16 %v906
      %v929 = vunpack.c.l.b16 %v910
      %v930 = vunpack.c.l.b16 %v914
      %v931 = vunpack.c.l.b16 %v918
      %v932 = vunpack.c.l.b16 %v922
      %v933 = vpack.c.b16 %v926, %v925
      %v934 = vpack.c.b16 %v928, %v927
      %v935 = vpack.c.b16 %v930, %v929
      %v936 = vpack.c.b16 %v932, %v931
      %v938 = vsel %vm682, %v933, 0
      %v941 = vsel %vm682, %v934, 0
      %v944 = vsel %vm682, %v935, 0
      %v947 = vsel %vm682, %v936, 0
      %v950 = vsel %vm695, %v924, 0
      %952 = vmatprep.subr.bf16.mxu0 0
      %953 = vmatpush1.bf16.msra.mxu0 0
      %954 = vmatprep.subr.bf16.mxu0 0
      %955 = vmatpush1.bf16.msra.mxu0 0
      %956 = vmatprep.subr.bf16.mxu0 0
      %957 = vmatpush1.bf16.msra.mxu0 0
      %958 = vmatprep.subr.bf16.mxu0 0
      %959 = vmatpush1.bf16.msra.mxu0 0
      %960 = vmatprep.subr.bf16.mxu0 0
      %961 = vmatpush1.bf16.msra.mxu0 0
      %962 = vmatprep.subr.bf16.mxu0 0
      %963 = vmatpush1.bf16.msra.mxu0 0
      %964 = vmatprep.subr.bf16.mxu0 0
      %965 = vmatpush1.bf16.msra.mxu0 0
      %966 = vmatprep.subr.bf16.mxu0 0
      %967 = vmatpush1.bf16.msra.mxu0 %v950
      %968 = vmatprep.subr.bf16.mxu0 0
      %969 = vmatpush2.bf16.msra.mxu0 0
      %970 = vmatprep.subr.bf16.mxu0 0
      %971 = vmatpush2.bf16.msra.mxu0 0
      %972 = vmatprep.subr.bf16.mxu0 0
      %973 = vmatpush2.bf16.msra.mxu0 0
      %974 = vmatprep.subr.bf16.mxu0 0
      %975 = vmatpush2.bf16.msra.mxu0 0
      %976 = vmatprep.subr.bf16.mxu0 0
      %977 = vmatpush2.bf16.msra.mxu0 0
      %978 = vmatprep.subr.bf16.mxu0 0
      %979 = vmatpush2.bf16.msra.mxu0 0
      %980 = vmatprep.subr.bf16.mxu0 0
      %981 = vmatpush2.bf16.msra.mxu0 0
      %982 = vmatprep.subr.bf16.mxu0 0
      %983 = vmatpush2.bf16.msra.mxu0 0
      %984 = vmatprep.mubr.bf16.mxu0 0
      %985 = vmatmul.mubr.bf16.gmra.mxu0 %v938
      %v986 = vpop.f32.mrf.mxu0
      %v987 = vadd.f32 0.0, %v986
      %v988 = vpop.f32.mrf.mxu0
      %v989 = vpop.f32.mrf.mxu0
      %v990 = vadd.f32 0.0, %v989
      %v991 = vpop.f32.mrf.mxu0
      %992 = vmatprep.mubr.bf16.mxu0 0
      %993 = vmatmul.mubr.bf16.gmra.mxu0 %v941
      %v994 = vpop.f32.mrf.mxu0
      %v995 = vadd.f32 0.0, %v994
      %v996 = vpop.f32.mrf.mxu0
      %v997 = vpop.f32.mrf.mxu0
      %v998 = vadd.f32 0.0, %v997
      %v999 = vpop.f32.mrf.mxu0
      %1000 = vmatprep.mubr.bf16.mxu0 0
      %1001 = vmatmul.mubr.bf16.gmra.mxu0 %v944
      %v1002 = vpop.f32.mrf.mxu0
      %v1003 = vadd.f32 0.0, %v1002
      %v1004 = vpop.f32.mrf.mxu0
      %v1005 = vpop.f32.mrf.mxu0
      %v1006 = vadd.f32 0.0, %v1005
      %v1007 = vpop.f32.mrf.mxu0
      %1008 = vmatprep.mubr.bf16.mxu0 0
      %1009 = vmatmul.mubr.bf16.gmra.mxu0 %v947
      %v1010 = vpop.f32.mrf.mxu0
      %v1011 = vadd.f32 0.0, %v1010
      %v1012 = vpop.f32.mrf.mxu0
      %v1013 = vpop.f32.mrf.mxu0
      %v1014 = vadd.f32 0.0, %v1013
      %v1015 = vpop.f32.mrf.mxu0
      %1016 = vdwg.mxu0
      %v1017 = vadd.f32 %v834, %v987
      %v1018 = vadd.f32 %v837, %v990
      %v1019 = vadd.f32 %v842, %v995
      %v1020 = vadd.f32 %v845, %v998
      %v1021 = vadd.f32 %v850, %v1003
      %v1022 = vadd.f32 %v853, %v1006
      %v1023 = vadd.f32 %v858, %v1011
      %v1024 = vadd.f32 %v861, %v1014
      %s1025 = scalar_lea.vmem %s519, 8
      %v1026 = vld [vmem:[%s1025] sm:$0xf]
      %v1027 = vld [vmem:[%s1025 + $0x8] sm:$0xf]
      %v1028 = vld [vmem:[%s1025 + $0x10] sm:$0xf]
      %v1029 = vld [vmem:[%s1025 + $0x18] sm:$0xf]
      %v1030 = vld [vmem:[%s1025 + $0x20] sm:$0xf]
      %v1031 = vld [vmem:[%s1025 + $0x28] sm:$0xf]
      %v1032 = vld [vmem:[%s1025 + $0x30] sm:$0xf]
      %v1033 = vld [vmem:[%s1025 + $0x38] sm:$0xf]
      %s1034 = scalar_lea.vmem %s3, 6
      %v1035 = vld [vmem:[%s1034] sm:$0x3]
      %v1044 = vunpack.c.l.b16 %v1026
      %v1045 = vunpack.c.l.b16 %v1027
      %v1046 = vunpack.c.l.b16 %v1028
      %v1047 = vunpack.c.l.b16 %v1029
      %v1048 = vunpack.c.l.b16 %v1030
      %v1049 = vunpack.c.l.b16 %v1031
      %v1050 = vunpack.c.l.b16 %v1032
      %v1051 = vunpack.c.l.b16 %v1033
      %v1052 = vpack.c.b16 %v1045, %v1044
      %v1053 = vpack.c.b16 %v1047, %v1046
      %v1054 = vpack.c.b16 %v1049, %v1048
      %v1055 = vpack.c.b16 %v1051, %v1050
      %v1057 = vsel %vm682, %v1052, 0
      %v1060 = vsel %vm682, %v1053, 0
      %v1063 = vsel %vm682, %v1054, 0
      %v1066 = vsel %vm682, %v1055, 0
      %v1069 = vsel %vm695, %v1035, 0
      %1071 = vmatprep.subr.bf16.mxu0 0
      %1072 = vmatpush1.bf16.msra.mxu0 0
      %1073 = vmatprep.subr.bf16.mxu0 0
      %1074 = vmatpush1.bf16.msra.mxu0 0
      %1075 = vmatprep.subr.bf16.mxu0 0
      %1076 = vmatpush1.bf16.msra.mxu0 0
      %1077 = vmatprep.subr.bf16.mxu0 0
      %1078 = vmatpush1.bf16.msra.mxu0 0
      %1079 = vmatprep.subr.bf16.mxu0 0
      %1080 = vmatpush1.bf16.msra.mxu0 0
      %1081 = vmatprep.subr.bf16.mxu0 0
      %1082 = vmatpush1.bf16.msra.mxu0 0
      %1083 = vmatprep.subr.bf16.mxu0 0
      %1084 = vmatpush1.bf16.msra.mxu0 0
      %1085 = vmatprep.subr.bf16.mxu0 0
      %1086 = vmatpush1.bf16.msra.mxu0 %v1069
      %1087 = vmatprep.subr.bf16.mxu0 0
      %1088 = vmatpush2.bf16.msra.mxu0 0
      %1089 = vmatprep.subr.bf16.mxu0 0
      %1090 = vmatpush2.bf16.msra.mxu0 0
      %1091 = vmatprep.subr.bf16.mxu0 0
      %1092 = vmatpush2.bf16.msra.mxu0 0
      %1093 = vmatprep.subr.bf16.mxu0 0
      %1094 = vmatpush2.bf16.msra.mxu0 0
      %1095 = vmatprep.subr.bf16.mxu0 0
      %1096 = vmatpush2.bf16.msra.mxu0 0
      %1097 = vmatprep.subr.bf16.mxu0 0
      %1098 = vmatpush2.bf16.msra.mxu0 0
      %1099 = vmatprep.subr.bf16.mxu0 0
      %1100 = vmatpush2.bf16.msra.mxu0 0
      %1101 = vmatprep.subr.bf16.mxu0 0
      %1102 = vmatpush2.bf16.msra.mxu0 0
      %1103 = vmatprep.mubr.bf16.mxu0 0
      %1104 = vmatmul.mubr.bf16.gmra.mxu0 %v1057
      %v1105 = vpop.f32.mrf.mxu0
      %v1106 = vadd.f32 0.0, %v1105
      %v1107 = vpop.f32.mrf.mxu0
      %v1108 = vpop.f32.mrf.mxu0
      %v1109 = vadd.f32 0.0, %v1108
      %v1110 = vpop.f32.mrf.mxu0
      %1111 = vmatprep.mubr.bf16.mxu0 0
      %1112 = vmatmul.mubr.bf16.gmra.mxu0 %v1060
      %v1113 = vpop.f32.mrf.mxu0
      %v1114 = vadd.f32 0.0, %v1113
      %v1115 = vpop.f32.mrf.mxu0
      %v1116 = vpop.f32.mrf.mxu0
      %v1117 = vadd.f32 0.0, %v1116
      %v1118 = vpop.f32.mrf.mxu0
      %1119 = vmatprep.mubr.bf16.mxu0 0
      %1120 = vmatmul.mubr.bf16.gmra.mxu0 %v1063
      %v1121 = vpop.f32.mrf.mxu0
      %v1122 = vadd.f32 0.0, %v1121
      %v1123 = vpop.f32.mrf.mxu0
      %v1124 = vpop.f32.mrf.mxu0
      %v1125 = vadd.f32 0.0, %v1124
      %v1126 = vpop.f32.mrf.mxu0
      %1127 = vmatprep.mubr.bf16.mxu0 0
      %1128 = vmatmul.mubr.bf16.gmra.mxu0 %v1066
      %v1129 = vpop.f32.mrf.mxu0
      %v1130 = vadd.f32 0.0, %v1129
      %v1131 = vpop.f32.mrf.mxu0
      %v1132 = vpop.f32.mrf.mxu0
      %v1133 = vadd.f32 0.0, %v1132
      %v1134 = vpop.f32.mrf.mxu0
      %1135 = vdwg.mxu0
      %v1136 = vadd.f32 %v1017, %v1106
      %v1137 = vadd.f32 %v1018, %v1109
      %v1138 = vadd.f32 %v1019, %v1114
      %v1139 = vadd.f32 %v1020, %v1117
      %v1140 = vadd.f32 %v1021, %v1122
      %v1141 = vadd.f32 %v1022, %v1125
      %v1142 = vadd.f32 %v1023, %v1130
      %v1143 = vadd.f32 %v1024, %v1133
      %v1144 = vld [vmem:[%s1025] sm:$0xf]
      %v1145 = vld [vmem:[%s1025 + $0x4] sm:$0x1]
      %v1146 = vld [vmem:[%s1025 + $0x8] sm:$0xf]
      %v1147 = vld [vmem:[%s1025 + $0xc] sm:$0x1]
      %v1148 = vld [vmem:[%s1025 + $0x10] sm:$0xf]
      %v1149 = vld [vmem:[%s1025 + $0x14] sm:$0x1]
      %v1150 = vld [vmem:[%s1025 + $0x18] sm:$0xf]
      %v1151 = vld [vmem:[%s1025 + $0x1c] sm:$0x1]
      %v1152 = vld [vmem:[%s1025 + $0x20] sm:$0xf]
      %v1153 = vld [vmem:[%s1025 + $0x24] sm:$0x1]
      %v1154 = vld [vmem:[%s1025 + $0x28] sm:$0xf]
      %v1155 = vld [vmem:[%s1025 + $0x2c] sm:$0x1]
      %v1156 = vld [vmem:[%s1025 + $0x30] sm:$0xf]
      %v1157 = vld [vmem:[%s1025 + $0x34] sm:$0x1]
      %v1158 = vld [vmem:[%s1025 + $0x38] sm:$0xf]
      %v1159 = vld [vmem:[%s1025 + $0x3c] sm:$0x1]
      %v1161 = vshrl.u32 %v1144, 16
      %v1163 = vrot.slane %v1161, 4
      %v1164 = vshll.u32 %v1144, 16
      %v1166 = vrot.slane %v1164, 5
      %v1167 = vor.u32 %v1163, %v1166
      %v1168 = vrot.slane %v1167, 4
      %v1170 = vshll.u32 %v1145, 16
      %v1172 = vrot.slane %v1170, 5
      %v1173 = vsel %vm555, %v1168, %v1172
      %v1175 = vshrl.u32 %v1146, 16
      %v1177 = vrot.slane %v1175, 4
      %v1178 = vshll.u32 %v1146, 16
      %v1180 = vrot.slane %v1178, 5
      %v1181 = vor.u32 %v1177, %v1180
      %v1182 = vrot.slane %v1181, 4
      %v1184 = vshll.u32 %v1147, 16
      %v1186 = vrot.slane %v1184, 5
      %v1187 = vsel %vm555, %v1182, %v1186
      %v1189 = vshrl.u32 %v1148, 16
      %v1191 = vrot.slane %v1189, 4
      %v1192 = vshll.u32 %v1148, 16
      %v1194 = vrot.slane %v1192, 5
      %v1195 = vor.u32 %v1191, %v1194
      %v1196 = vrot.slane %v1195, 4
      %v1198 = vshll.u32 %v1149, 16
      %v1200 = vrot.slane %v1198, 5
      %v1201 = vsel %vm555, %v1196, %v1200
      %v1203 = vshrl.u32 %v1150, 16
      %v1205 = vrot.slane %v1203, 4
      %v1206 = vshll.u32 %v1150, 16
      %v1208 = vrot.slane %v1206, 5
      %v1209 = vor.u32 %v1205, %v1208
      %v1210 = vrot.slane %v1209, 4
      %v1212 = vshll.u32 %v1151, 16
      %v1214 = vrot.slane %v1212, 5
      %v1215 = vsel %vm555, %v1210, %v1214
      %v1217 = vshrl.u32 %v1152, 16
      %v1219 = vrot.slane %v1217, 4
      %v1220 = vshll.u32 %v1152, 16
      %v1222 = vrot.slane %v1220, 5
      %v1223 = vor.u32 %v1219, %v1222
      %v1224 = vrot.slane %v1223, 4
      %v1226 = vshll.u32 %v1153, 16
      %v1228 = vrot.slane %v1226, 5
      %v1229 = vsel %vm555, %v1224, %v1228
      %v1231 = vshrl.u32 %v1154, 16
      %v1233 = vrot.slane %v1231, 4
      %v1234 = vshll.u32 %v1154, 16
      %v1236 = vrot.slane %v1234, 5
      %v1237 = vor.u32 %v1233, %v1236
      %v1238 = vrot.slane %v1237, 4
      %v1240 = vshll.u32 %v1155, 16
      %v1242 = vrot.slane %v1240, 5
      %v1243 = vsel %vm555, %v1238, %v1242
      %v1245 = vshrl.u32 %v1156, 16
      %v1247 = vrot.slane %v1245, 4
      %v1248 = vshll.u32 %v1156, 16
      %v1250 = vrot.slane %v1248, 5
      %v1251 = vor.u32 %v1247, %v1250
      %v1252 = vrot.slane %v1251, 4
      %v1254 = vshll.u32 %v1157, 16
      %v1256 = vrot.slane %v1254, 5
      %v1257 = vsel %vm555, %v1252, %v1256
      %v1259 = vshrl.u32 %v1158, 16
      %v1261 = vrot.slane %v1259, 4
      %v1262 = vshll.u32 %v1158, 16
      %v1264 = vrot.slane %v1262, 5
      %v1265 = vor.u32 %v1261, %v1264
      %v1266 = vrot.slane %v1265, 4
      %v1268 = vshll.u32 %v1159, 16
      %v1270 = vrot.slane %v1268, 5
      %v1271 = vsel %vm555, %v1266, %v1270
      %s1272 = scalar_lea.vmem %s3, 8
      %v1273 = vld [vmem:[%s1272] sm:$0x3]
      %v1274 = vunpack.c.l.b16 %v1173
      %v1275 = vunpack.c.l.b16 %v1187
      %v1276 = vunpack.c.l.b16 %v1201
      %v1277 = vunpack.c.l.b16 %v1215
      %v1278 = vunpack.c.l.b16 %v1229
      %v1279 = vunpack.c.l.b16 %v1243
      %v1280 = vunpack.c.l.b16 %v1257
      %v1281 = vunpack.c.l.b16 %v1271
      %v1282 = vpack.c.b16 %v1275, %v1274
      %v1283 = vpack.c.b16 %v1277, %v1276
      %v1284 = vpack.c.b16 %v1279, %v1278
      %v1285 = vpack.c.b16 %v1281, %v1280
      %v1287 = vsel %vm682, %v1282, 0
      %v1290 = vsel %vm682, %v1283, 0
      %v1293 = vsel %vm682, %v1284, 0
      %v1296 = vsel %vm682, %v1285, 0
      %v1299 = vsel %vm695, %v1273, 0
      %1301 = vmatprep.subr.bf16.mxu0 0
      %1302 = vmatpush1.bf16.msra.mxu0 0
      %1303 = vmatprep.subr.bf16.mxu0 0
      %1304 = vmatpush1.bf16.msra.mxu0 0
      %1305 = vmatprep.subr.bf16.mxu0 0
      %1306 = vmatpush1.bf16.msra.mxu0 0
      %1307 = vmatprep.subr.bf16.mxu0 0
      %1308 = vmatpush1.bf16.msra.mxu0 0
      %1309 = vmatprep.subr.bf16.mxu0 0
      %1310 = vmatpush1.bf16.msra.mxu0 0
      %1311 = vmatprep.subr.bf16.mxu0 0
      %1312 = vmatpush1.bf16.msra.mxu0 0
      %1313 = vmatprep.subr.bf16.mxu0 0
      %1314 = vmatpush1.bf16.msra.mxu0 0
      %1315 = vmatprep.subr.bf16.mxu0 0
      %1316 = vmatpush1.bf16.msra.mxu0 %v1299
      %1317 = vmatprep.subr.bf16.mxu0 0
      %1318 = vmatpush2.bf16.msra.mxu0 0
      %1319 = vmatprep.subr.bf16.mxu0 0
      %1320 = vmatpush2.bf16.msra.mxu0 0
      %1321 = vmatprep.subr.bf16.mxu0 0
      %1322 = vmatpush2.bf16.msra.mxu0 0
      %1323 = vmatprep.subr.bf16.mxu0 0
      %1324 = vmatpush2.bf16.msra.mxu0 0
      %1325 = vmatprep.subr.bf16.mxu0 0
      %1326 = vmatpush2.bf16.msra.mxu0 0
      %1327 = vmatprep.subr.bf16.mxu0 0
      %1328 = vmatpush2.bf16.msra.mxu0 0
      %1329 = vmatprep.subr.bf16.mxu0 0
      %1330 = vmatpush2.bf16.msra.mxu0 0
      %1331 = vmatprep.subr.bf16.mxu0 0
      %1332 = vmatpush2.bf16.msra.mxu0 0
      %1333 = vmatprep.mubr.bf16.mxu0 0
      %1334 = vmatmul.mubr.bf16.gmra.mxu0 %v1287
      %v1335 = vpop.f32.mrf.mxu0
      %v1336 = vadd.f32 0.0, %v1335
      %v1337 = vpop.f32.mrf.mxu0
      %v1338 = vpop.f32.mrf.mxu0
      %v1339 = vadd.f32 0.0, %v1338
      %v1340 = vpop.f32.mrf.mxu0
      %1341 = vmatprep.mubr.bf16.mxu0 0
      %1342 = vmatmul.mubr.bf16.gmra.mxu0 %v1290
      %v1343 = vpop.f32.mrf.mxu0
      %v1344 = vadd.f32 0.0, %v1343
      %v1345 = vpop.f32.mrf.mxu0
      %v1346 = vpop.f32.mrf.mxu0
      %v1347 = vadd.f32 0.0, %v1346
      %v1348 = vpop.f32.mrf.mxu0
      %1349 = vmatprep.mubr.bf16.mxu0 0
      %1350 = vmatmul.mubr.bf16.gmra.mxu0 %v1293
      %v1351 = vpop.f32.mrf.mxu0
      %v1352 = vadd.f32 0.0, %v1351
      %v1353 = vpop.f32.mrf.mxu0
      %v1354 = vpop.f32.mrf.mxu0
      %v1355 = vadd.f32 0.0, %v1354
      %v1356 = vpop.f32.mrf.mxu0
      %1357 = vmatprep.mubr.bf16.mxu0 0
      %1358 = vmatmul.mubr.bf16.gmra.mxu0 %v1296
      %v1359 = vpop.f32.mrf.mxu0
      %v1360 = vadd.f32 0.0, %v1359
      %v1361 = vpop.f32.mrf.mxu0
      %v1362 = vpop.f32.mrf.mxu0
      %v1363 = vadd.f32 0.0, %v1362
      %v1364 = vpop.f32.mrf.mxu0
      %1365 = vdwg.mxu0
      %v1366 = vadd.f32 %v1136, %v1336
      %v1367 = vadd.f32 %v1137, %v1339
      %v1368 = vadd.f32 %v1138, %v1344
      %v1369 = vadd.f32 %v1139, %v1347
      %v1370 = vadd.f32 %v1140, %v1352
      %v1371 = vadd.f32 %v1141, %v1355
      %v1372 = vadd.f32 %v1142, %v1360
      %v1373 = vadd.f32 %v1143, %v1363
      %v1374 = vld [vmem:[%s1025] sm:$0xe]
      %v1375 = vld [vmem:[%s1025 + $0x8] sm:$0xe]
      %v1376 = vld [vmem:[%s1025 + $0x10] sm:$0xe]
      %v1377 = vld [vmem:[%s1025 + $0x18] sm:$0xe]
      %v1378 = vld [vmem:[%s1025 + $0x20] sm:$0xe]
      %v1379 = vld [vmem:[%s1025 + $0x28] sm:$0xe]
      %v1380 = vld [vmem:[%s1025 + $0x30] sm:$0xe]
      %v1381 = vld [vmem:[%s1025 + $0x38] sm:$0xe]
      %v1398 = vrot.slane %v1374, 5
      %v1399 = vrot.slane %v1398, 4
      %v1400 = vrot.slane %v1145, 5
      %v1401 = vsel %vm890, %v1399, %v1400
      %v1402 = vrot.slane %v1375, 5
      %v1403 = vrot.slane %v1402, 4
      %v1404 = vrot.slane %v1147, 5
      %v1405 = vsel %vm890, %v1403, %v1404
      %v1406 = vrot.slane %v1376, 5
      %v1407 = vrot.slane %v1406, 4
      %v1408 = vrot.slane %v1149, 5
      %v1409 = vsel %vm890, %v1407, %v1408
      %v1410 = vrot.slane %v1377, 5
      %v1411 = vrot.slane %v1410, 4
      %v1412 = vrot.slane %v1151, 5
      %v1413 = vsel %vm890, %v1411, %v1412
      %v1414 = vrot.slane %v1378, 5
      %v1415 = vrot.slane %v1414, 4
      %v1416 = vrot.slane %v1153, 5
      %v1417 = vsel %vm890, %v1415, %v1416
      %v1418 = vrot.slane %v1379, 5
      %v1419 = vrot.slane %v1418, 4
      %v1420 = vrot.slane %v1155, 5
      %v1421 = vsel %vm890, %v1419, %v1420
      %v1422 = vrot.slane %v1380, 5
      %v1423 = vrot.slane %v1422, 4
      %v1424 = vrot.slane %v1157, 5
      %v1425 = vsel %vm890, %v1423, %v1424
      %v1426 = vrot.slane %v1381, 5
      %v1427 = vrot.slane %v1426, 4
      %v1428 = vrot.slane %v1159, 5
      %v1429 = vsel %vm890, %v1427, %v1428
      %s1430 = scalar_lea.vmem %s3, 10
      %v1431 = vld [vmem:[%s1430] sm:$0x3]
      %v1432 = vunpack.c.l.b16 %v1401
      %v1433 = vunpack.c.l.b16 %v1405
      %v1434 = vunpack.c.l.b16 %v1409
      %v1435 = vunpack.c.l.b16 %v1413
      %v1436 = vunpack.c.l.b16 %v1417
      %v1437 = vunpack.c.l.b16 %v1421
      %v1438 = vunpack.c.l.b16 %v1425
      %v1439 = vunpack.c.l.b16 %v1429
      %v1440 = vpack.c.b16 %v1433, %v1432
      %v1441 = vpack.c.b16 %v1435, %v1434
      %v1442 = vpack.c.b16 %v1437, %v1436
      %v1443 = vpack.c.b16 %v1439, %v1438
      %v1445 = vsel %vm682, %v1440, 0
      %v1448 = vsel %vm682, %v1441, 0
      %v1451 = vsel %vm682, %v1442, 0
      %v1454 = vsel %vm682, %v1443, 0
      %v1457 = vsel %vm695, %v1431, 0
      %1459 = vmatprep.subr.bf16.mxu0 0
      %1460 = vmatpush1.bf16.msra.mxu0 0
      %1461 = vmatprep.subr.bf16.mxu0 0
      %1462 = vmatpush1.bf16.msra.mxu0 0
      %1463 = vmatprep.subr.bf16.mxu0 0
      %1464 = vmatpush1.bf16.msra.mxu0 0
      %1465 = vmatprep.subr.bf16.mxu0 0
      %1466 = vmatpush1.bf16.msra.mxu0 0
      %1467 = vmatprep.subr.bf16.mxu0 0
      %1468 = vmatpush1.bf16.msra.mxu0 0
      %1469 = vmatprep.subr.bf16.mxu0 0
      %1470 = vmatpush1.bf16.msra.mxu0 0
      %1471 = vmatprep.subr.bf16.mxu0 0
      %1472 = vmatpush1.bf16.msra.mxu0 0
      %1473 = vmatprep.subr.bf16.mxu0 0
      %1474 = vmatpush1.bf16.msra.mxu0 %v1457
      %1475 = vmatprep.subr.bf16.mxu0 0
      %1476 = vmatpush2.bf16.msra.mxu0 0
      %1477 = vmatprep.subr.bf16.mxu0 0
      %1478 = vmatpush2.bf16.msra.mxu0 0
      %1479 = vmatprep.subr.bf16.mxu0 0
      %1480 = vmatpush2.bf16.msra.mxu0 0
      %1481 = vmatprep.subr.bf16.mxu0 0
      %1482 = vmatpush2.bf16.msra.mxu0 0
      %1483 = vmatprep.subr.bf16.mxu0 0
      %1484 = vmatpush2.bf16.msra.mxu0 0
      %1485 = vmatprep.subr.bf16.mxu0 0
      %1486 = vmatpush2.bf16.msra.mxu0 0
      %1487 = vmatprep.subr.bf16.mxu0 0
      %1488 = vmatpush2.bf16.msra.mxu0 0
      %1489 = vmatprep.subr.bf16.mxu0 0
      %1490 = vmatpush2.bf16.msra.mxu0 0
      %1491 = vmatprep.mubr.bf16.mxu0 0
      %1492 = vmatmul.mubr.bf16.gmra.mxu0 %v1445
      %v1493 = vpop.f32.mrf.mxu0
      %v1494 = vadd.f32 0.0, %v1493
      %v1495 = vpop.f32.mrf.mxu0
      %v1496 = vpop.f32.mrf.mxu0
      %v1497 = vadd.f32 0.0, %v1496
      %v1498 = vpop.f32.mrf.mxu0
      %1499 = vmatprep.mubr.bf16.mxu0 0
      %1500 = vmatmul.mubr.bf16.gmra.mxu0 %v1448
      %v1501 = vpop.f32.mrf.mxu0
      %v1502 = vadd.f32 0.0, %v1501
      %v1503 = vpop.f32.mrf.mxu0
      %v1504 = vpop.f32.mrf.mxu0
      %v1505 = vadd.f32 0.0, %v1504
      %v1506 = vpop.f32.mrf.mxu0
      %1507 = vmatprep.mubr.bf16.mxu0 0
      %1508 = vmatmul.mubr.bf16.gmra.mxu0 %v1451
      %v1509 = vpop.f32.mrf.mxu0
      %v1510 = vadd.f32 0.0, %v1509
      %v1511 = vpop.f32.mrf.mxu0
      %v1512 = vpop.f32.mrf.mxu0
      %v1513 = vadd.f32 0.0, %v1512
      %v1514 = vpop.f32.mrf.mxu0
      %1515 = vmatprep.mubr.bf16.mxu0 0
      %1516 = vmatmul.mubr.bf16.gmra.mxu0 %v1454
      %v1517 = vpop.f32.mrf.mxu0
      %v1518 = vadd.f32 0.0, %v1517
      %v1519 = vpop.f32.mrf.mxu0
      %v1520 = vpop.f32.mrf.mxu0
      %v1521 = vadd.f32 0.0, %v1520
      %v1522 = vpop.f32.mrf.mxu0
      %1523 = vdwg.mxu0
      %v1524 = vadd.f32 %v1366, %v1494
      %v1525 = vadd.f32 %v1367, %v1497
      %v1526 = vadd.f32 %v1368, %v1502
      %v1527 = vadd.f32 %v1369, %v1505
      %v1528 = vadd.f32 %v1370, %v1510
      %v1529 = vadd.f32 %v1371, %v1513
      %v1530 = vadd.f32 %v1372, %v1518
      %v1531 = vadd.f32 %v1373, %v1521
      %s1532 = scalar_lea.vmem %s519, 16
      %v1533 = vld [vmem:[%s1532] sm:$0xf]
      %v1534 = vld [vmem:[%s1532 + $0x8] sm:$0xf]
      %v1535 = vld [vmem:[%s1532 + $0x10] sm:$0xf]
      %v1536 = vld [vmem:[%s1532 + $0x18] sm:$0xf]
      %v1537 = vld [vmem:[%s1532 + $0x20] sm:$0xf]
      %v1538 = vld [vmem:[%s1532 + $0x28] sm:$0xf]
      %v1539 = vld [vmem:[%s1532 + $0x30] sm:$0xf]
      %v1540 = vld [vmem:[%s1532 + $0x38] sm:$0xf]
      %s1541 = scalar_lea.vmem %s3, 12
      %v1542 = vld [vmem:[%s1541] sm:$0x3]
      %v1551 = vunpack.c.l.b16 %v1533
      %v1552 = vunpack.c.l.b16 %v1534
      %v1553 = vunpack.c.l.b16 %v1535
      %v1554 = vunpack.c.l.b16 %v1536
      %v1555 = vunpack.c.l.b16 %v1537
      %v1556 = vunpack.c.l.b16 %v1538
      %v1557 = vunpack.c.l.b16 %v1539
      %v1558 = vunpack.c.l.b16 %v1540
      %v1559 = vpack.c.b16 %v1552, %v1551
      %v1560 = vpack.c.b16 %v1554, %v1553
      %v1561 = vpack.c.b16 %v1556, %v1555
      %v1562 = vpack.c.b16 %v1558, %v1557
      %v1564 = vsel %vm682, %v1559, 0
      %v1567 = vsel %vm682, %v1560, 0
      %v1570 = vsel %vm682, %v1561, 0
      %v1573 = vsel %vm682, %v1562, 0
      %v1576 = vsel %vm695, %v1542, 0
      %1578 = vmatprep.subr.bf16.mxu0 0
      %1579 = vmatpush1.bf16.msra.mxu0 0
      %1580 = vmatprep.subr.bf16.mxu0 0
      %1581 = vmatpush1.bf16.msra.mxu0 0
      %1582 = vmatprep.subr.bf16.mxu0 0
      %1583 = vmatpush1.bf16.msra.mxu0 0
      %1584 = vmatprep.subr.bf16.mxu0 0
      %1585 = vmatpush1.bf16.msra.mxu0 0
      %1586 = vmatprep.subr.bf16.mxu0 0
      %1587 = vmatpush1.bf16.msra.mxu0 0
      %1588 = vmatprep.subr.bf16.mxu0 0
      %1589 = vmatpush1.bf16.msra.mxu0 0
      %1590 = vmatprep.subr.bf16.mxu0 0
      %1591 = vmatpush1.bf16.msra.mxu0 0
      %1592 = vmatprep.subr.bf16.mxu0 0
      %1593 = vmatpush1.bf16.msra.mxu0 %v1576
      %1594 = vmatprep.subr.bf16.mxu0 0
      %1595 = vmatpush2.bf16.msra.mxu0 0
      %1596 = vmatprep.subr.bf16.mxu0 0
      %1597 = vmatpush2.bf16.msra.mxu0 0
      %1598 = vmatprep.subr.bf16.mxu0 0
      %1599 = vmatpush2.bf16.msra.mxu0 0
      %1600 = vmatprep.subr.bf16.mxu0 0
      %1601 = vmatpush2.bf16.msra.mxu0 0
      %1602 = vmatprep.subr.bf16.mxu0 0
      %1603 = vmatpush2.bf16.msra.mxu0 0
      %1604 = vmatprep.subr.bf16.mxu0 0
      %1605 = vmatpush2.bf16.msra.mxu0 0
      %1606 = vmatprep.subr.bf16.mxu0 0
      %1607 = vmatpush2.bf16.msra.mxu0 0
      %1608 = vmatprep.subr.bf16.mxu0 0
      %1609 = vmatpush2.bf16.msra.mxu0 0
      %1610 = vmatprep.mubr.bf16.mxu0 0
      %1611 = vmatmul.mubr.bf16.gmra.mxu0 %v1564
      %v1612 = vpop.f32.mrf.mxu0
      %v1613 = vadd.f32 0.0, %v1612
      %v1614 = vpop.f32.mrf.mxu0
      %v1615 = vpop.f32.mrf.mxu0
      %v1616 = vadd.f32 0.0, %v1615
      %v1617 = vpop.f32.mrf.mxu0
      %1618 = vmatprep.mubr.bf16.mxu0 0
      %1619 = vmatmul.mubr.bf16.gmra.mxu0 %v1567
      %v1620 = vpop.f32.mrf.mxu0
      %v1621 = vadd.f32 0.0, %v1620
      %v1622 = vpop.f32.mrf.mxu0
      %v1623 = vpop.f32.mrf.mxu0
      %v1624 = vadd.f32 0.0, %v1623
      %v1625 = vpop.f32.mrf.mxu0
      %1626 = vmatprep.mubr.bf16.mxu0 0
      %1627 = vmatmul.mubr.bf16.gmra.mxu0 %v1570
      %v1628 = vpop.f32.mrf.mxu0
      %v1629 = vadd.f32 0.0, %v1628
      %v1630 = vpop.f32.mrf.mxu0
      %v1631 = vpop.f32.mrf.mxu0
      %v1632 = vadd.f32 0.0, %v1631
      %v1633 = vpop.f32.mrf.mxu0
      %1634 = vmatprep.mubr.bf16.mxu0 0
      %1635 = vmatmul.mubr.bf16.gmra.mxu0 %v1573
      %v1636 = vpop.f32.mrf.mxu0
      %v1637 = vadd.f32 0.0, %v1636
      %v1638 = vpop.f32.mrf.mxu0
      %v1639 = vpop.f32.mrf.mxu0
      %v1640 = vadd.f32 0.0, %v1639
      %v1641 = vpop.f32.mrf.mxu0
      %1642 = vdwg.mxu0
      %v1643 = vadd.f32 %v1524, %v1613
      %v1644 = vadd.f32 %v1525, %v1616
      %v1645 = vadd.f32 %v1526, %v1621
      %v1646 = vadd.f32 %v1527, %v1624
      %v1647 = vadd.f32 %v1528, %v1629
      %v1648 = vadd.f32 %v1529, %v1632
      %v1649 = vadd.f32 %v1530, %v1637
      %v1650 = vadd.f32 %v1531, %v1640
      %v1651 = vld [vmem:[%s1532] sm:$0xf]
      %v1652 = vld [vmem:[%s1532 + $0x4] sm:$0x1]
      %v1653 = vld [vmem:[%s1532 + $0x8] sm:$0xf]
      %v1654 = vld [vmem:[%s1532 + $0xc] sm:$0x1]
      %v1655 = vld [vmem:[%s1532 + $0x10] sm:$0xf]
      %v1656 = vld [vmem:[%s1532 + $0x14] sm:$0x1]
      %v1657 = vld [vmem:[%s1532 + $0x18] sm:$0xf]
      %v1658 = vld [vmem:[%s1532 + $0x1c] sm:$0x1]
      %v1659 = vld [vmem:[%s1532 + $0x20] sm:$0xf]
      %v1660 = vld [vmem:[%s1532 + $0x24] sm:$0x1]
      %v1661 = vld [vmem:[%s1532 + $0x28] sm:$0xf]
      %v1662 = vld [vmem:[%s1532 + $0x2c] sm:$0x1]
      %v1663 = vld [vmem:[%s1532 + $0x30] sm:$0xf]
      %v1664 = vld [vmem:[%s1532 + $0x34] sm:$0x1]
      %v1665 = vld [vmem:[%s1532 + $0x38] sm:$0xf]
      %v1666 = vld [vmem:[%s1532 + $0x3c] sm:$0x1]
      %v1668 = vshrl.u32 %v1651, 16
      %v1670 = vrot.slane %v1668, 4
      %v1671 = vshll.u32 %v1651, 16
      %v1673 = vrot.slane %v1671, 5
      %v1674 = vor.u32 %v1670, %v1673
      %v1675 = vrot.slane %v1674, 4
      %v1677 = vshll.u32 %v1652, 16
      %v1679 = vrot.slane %v1677, 5
      %v1680 = vsel %vm555, %v1675, %v1679
      %v1682 = vshrl.u32 %v1653, 16
      %v1684 = vrot.slane %v1682, 4
      %v1685 = vshll.u32 %v1653, 16
      %v1687 = vrot.slane %v1685, 5
      %v1688 = vor.u32 %v1684, %v1687
      %v1689 = vrot.slane %v1688, 4
      %v1691 = vshll.u32 %v1654, 16
      %v1693 = vrot.slane %v1691, 5
      %v1694 = vsel %vm555, %v1689, %v1693
      %v1696 = vshrl.u32 %v1655, 16
      %v1698 = vrot.slane %v1696, 4
      %v1699 = vshll.u32 %v1655, 16
      %v1701 = vrot.slane %v1699, 5
      %v1702 = vor.u32 %v1698, %v1701
      %v1703 = vrot.slane %v1702, 4
      %v1705 = vshll.u32 %v1656, 16
      %v1707 = vrot.slane %v1705, 5
      %v1708 = vsel %vm555, %v1703, %v1707
      %v1710 = vshrl.u32 %v1657, 16
      %v1712 = vrot.slane %v1710, 4
      %v1713 = vshll.u32 %v1657, 16
      %v1715 = vrot.slane %v1713, 5
      %v1716 = vor.u32 %v1712, %v1715
      %v1717 = vrot.slane %v1716, 4
      %v1719 = vshll.u32 %v1658, 16
      %v1721 = vrot.slane %v1719, 5
      %v1722 = vsel %vm555, %v1717, %v1721
      %v1724 = vshrl.u32 %v1659, 16
      %v1726 = vrot.slane %v1724, 4
      %v1727 = vshll.u32 %v1659, 16
      %v1729 = vrot.slane %v1727, 5
      %v1730 = vor.u32 %v1726, %v1729
      %v1731 = vrot.slane %v1730, 4
      %v1733 = vshll.u32 %v1660, 16
      %v1735 = vrot.slane %v1733, 5
      %v1736 = vsel %vm555, %v1731, %v1735
      %v1738 = vshrl.u32 %v1661, 16
      %v1740 = vrot.slane %v1738, 4
      %v1741 = vshll.u32 %v1661, 16
      %v1743 = vrot.slane %v1741, 5
      %v1744 = vor.u32 %v1740, %v1743
      %v1745 = vrot.slane %v1744, 4
      %v1747 = vshll.u32 %v1662, 16
      %v1749 = vrot.slane %v1747, 5
      %v1750 = vsel %vm555, %v1745, %v1749
      %v1752 = vshrl.u32 %v1663, 16
      %v1754 = vrot.slane %v1752, 4
      %v1755 = vshll.u32 %v1663, 16
      %v1757 = vrot.slane %v1755, 5
      %v1758 = vor.u32 %v1754, %v1757
      %v1759 = vrot.slane %v1758, 4
      %v1761 = vshll.u32 %v1664, 16
      %v1763 = vrot.slane %v1761, 5
      %v1764 = vsel %vm555, %v1759, %v1763
      %v1766 = vshrl.u32 %v1665, 16
      %v1768 = vrot.slane %v1766, 4
      %v1769 = vshll.u32 %v1665, 16
      %v1771 = vrot.slane %v1769, 5
      %v1772 = vor.u32 %v1768, %v1771
      %v1773 = vrot.slane %v1772, 4
      %v1775 = vshll.u32 %v1666, 16
      %v1777 = vrot.slane %v1775, 5
      %v1778 = vsel %vm555, %v1773, %v1777
      %s1779 = scalar_lea.vmem %s3, 14
      %v1780 = vld [vmem:[%s1779] sm:$0x3]
      %v1781 = vunpack.c.l.b16 %v1680
      %v1782 = vunpack.c.l.b16 %v1694
      %v1783 = vunpack.c.l.b16 %v1708
      %v1784 = vunpack.c.l.b16 %v1722
      %v1785 = vunpack.c.l.b16 %v1736
      %v1786 = vunpack.c.l.b16 %v1750
      %v1787 = vunpack.c.l.b16 %v1764
      %v1788 = vunpack.c.l.b16 %v1778
      %v1789 = vpack.c.b16 %v1782, %v1781
      %v1790 = vpack.c.b16 %v1784, %v1783
      %v1791 = vpack.c.b16 %v1786, %v1785
      %v1792 = vpack.c.b16 %v1788, %v1787
      %v1794 = vsel %vm682, %v1789, 0
      %v1797 = vsel %vm682, %v1790, 0
      %v1800 = vsel %vm682, %v1791, 0
      %v1803 = vsel %vm682, %v1792, 0
      %v1806 = vsel %vm695, %v1780, 0
      %1808 = vmatprep.subr.bf16.mxu0 0
      %1809 = vmatpush1.bf16.msra.mxu0 0
      %1810 = vmatprep.subr.bf16.mxu0 0
      %1811 = vmatpush1.bf16.msra.mxu0 0
      %1812 = vmatprep.subr.bf16.mxu0 0
      %1813 = vmatpush1.bf16.msra.mxu0 0
      %1814 = vmatprep.subr.bf16.mxu0 0
      %1815 = vmatpush1.bf16.msra.mxu0 0
      %1816 = vmatprep.subr.bf16.mxu0 0
      %1817 = vmatpush1.bf16.msra.mxu0 0
      %1818 = vmatprep.subr.bf16.mxu0 0
      %1819 = vmatpush1.bf16.msra.mxu0 0
      %1820 = vmatprep.subr.bf16.mxu0 0
      %1821 = vmatpush1.bf16.msra.mxu0 0
      %1822 = vmatprep.subr.bf16.mxu0 0
      %1823 = vmatpush1.bf16.msra.mxu0 %v1806
      %1824 = vmatprep.subr.bf16.mxu0 0
      %1825 = vmatpush2.bf16.msra.mxu0 0
      %1826 = vmatprep.subr.bf16.mxu0 0
      %1827 = vmatpush2.bf16.msra.mxu0 0
      %1828 = vmatprep.subr.bf16.mxu0 0
      %1829 = vmatpush2.bf16.msra.mxu0 0
      %1830 = vmatprep.subr.bf16.mxu0 0
      %1831 = vmatpush2.bf16.msra.mxu0 0
      %1832 = vmatprep.subr.bf16.mxu0 0
      %1833 = vmatpush2.bf16.msra.mxu0 0
      %1834 = vmatprep.subr.bf16.mxu0 0
      %1835 = vmatpush2.bf16.msra.mxu0 0
      %1836 = vmatprep.subr.bf16.mxu0 0
      %1837 = vmatpush2.bf16.msra.mxu0 0
      %1838 = vmatprep.subr.bf16.mxu0 0
      %1839 = vmatpush2.bf16.msra.mxu0 0
      %1840 = vmatprep.mubr.bf16.mxu0 0
      %1841 = vmatmul.mubr.bf16.gmra.mxu0 %v1794
      %v1842 = vpop.f32.mrf.mxu0
      %v1843 = vadd.f32 0.0, %v1842
      %v1844 = vpop.f32.mrf.mxu0
      %v1845 = vpop.f32.mrf.mxu0
      %v1846 = vadd.f32 0.0, %v1845
      %v1847 = vpop.f32.mrf.mxu0
      %1848 = vmatprep.mubr.bf16.mxu0 0
      %1849 = vmatmul.mubr.bf16.gmra.mxu0 %v1797
      %v1850 = vpop.f32.mrf.mxu0
      %v1851 = vadd.f32 0.0, %v1850
      %v1852 = vpop.f32.mrf.mxu0
      %v1853 = vpop.f32.mrf.mxu0
      %v1854 = vadd.f32 0.0, %v1853
      %v1855 = vpop.f32.mrf.mxu0
      %1856 = vmatprep.mubr.bf16.mxu0 0
      %1857 = vmatmul.mubr.bf16.gmra.mxu0 %v1800
      %v1858 = vpop.f32.mrf.mxu0
      %v1859 = vadd.f32 0.0, %v1858
      %v1860 = vpop.f32.mrf.mxu0
      %v1861 = vpop.f32.mrf.mxu0
      %v1862 = vadd.f32 0.0, %v1861
      %v1863 = vpop.f32.mrf.mxu0
      %1864 = vmatprep.mubr.bf16.mxu0 0
      %1865 = vmatmul.mubr.bf16.gmra.mxu0 %v1803
      %v1866 = vpop.f32.mrf.mxu0
      %v1867 = vadd.f32 0.0, %v1866
      %v1868 = vpop.f32.mrf.mxu0
      %v1869 = vpop.f32.mrf.mxu0
      %v1870 = vadd.f32 0.0, %v1869
      %v1871 = vpop.f32.mrf.mxu0
      %1872 = vdwg.mxu0
      %v1873 = vadd.f32 %v1643, %v1843
      %v1874 = vadd.f32 %v1644, %v1846
      %v1875 = vadd.f32 %v1645, %v1851
      %v1876 = vadd.f32 %v1646, %v1854
      %v1877 = vadd.f32 %v1647, %v1859
      %v1878 = vadd.f32 %v1648, %v1862
      %v1879 = vadd.f32 %v1649, %v1867
      %v1880 = vadd.f32 %v1650, %v1870
      %v1881 = vld [vmem:[%s1532] sm:$0xe]
      %v1882 = vld [vmem:[%s1532 + $0x8] sm:$0xe]
      %v1883 = vld [vmem:[%s1532 + $0x10] sm:$0xe]
      %v1884 = vld [vmem:[%s1532 + $0x18] sm:$0xe]
      %v1885 = vld [vmem:[%s1532 + $0x20] sm:$0xe]
      %v1886 = vld [vmem:[%s1532 + $0x28] sm:$0xe]
      %v1887 = vld [vmem:[%s1532 + $0x30] sm:$0xe]
      %v1888 = vld [vmem:[%s1532 + $0x38] sm:$0xe]
      %v1905 = vrot.slane %v1881, 5
      %v1906 = vrot.slane %v1905, 4
      %v1907 = vrot.slane %v1652, 5
      %v1908 = vsel %vm890, %v1906, %v1907
      %v1909 = vrot.slane %v1882, 5
      %v1910 = vrot.slane %v1909, 4
      %v1911 = vrot.slane %v1654, 5
      %v1912 = vsel %vm890, %v1910, %v1911
      %v1913 = vrot.slane %v1883, 5
      %v1914 = vrot.slane %v1913, 4
      %v1915 = vrot.slane %v1656, 5
      %v1916 = vsel %vm890, %v1914, %v1915
      %v1917 = vrot.slane %v1884, 5
      %v1918 = vrot.slane %v1917, 4
      %v1919 = vrot.slane %v1658, 5
      %v1920 = vsel %vm890, %v1918, %v1919
      %v1921 = vrot.slane %v1885, 5
      %v1922 = vrot.slane %v1921, 4
      %v1923 = vrot.slane %v1660, 5
      %v1924 = vsel %vm890, %v1922, %v1923
      %v1925 = vrot.slane %v1886, 5
      %v1926 = vrot.slane %v1925, 4
      %v1927 = vrot.slane %v1662, 5
      %v1928 = vsel %vm890, %v1926, %v1927
      %v1929 = vrot.slane %v1887, 5
      %v1930 = vrot.slane %v1929, 4
      %v1931 = vrot.slane %v1664, 5
      %v1932 = vsel %vm890, %v1930, %v1931
      %v1933 = vrot.slane %v1888, 5
      %v1934 = vrot.slane %v1933, 4
      %v1935 = vrot.slane %v1666, 5
      %v1936 = vsel %vm890, %v1934, %v1935
      %s1937 = scalar_lea.vmem %s3, 16
      %v1938 = vld [vmem:[%s1937] sm:$0x3]
      %v1939 = vunpack.c.l.b16 %v1908
      %v1940 = vunpack.c.l.b16 %v1912
      %v1941 = vunpack.c.l.b16 %v1916
      %v1942 = vunpack.c.l.b16 %v1920
      %v1943 = vunpack.c.l.b16 %v1924
      %v1944 = vunpack.c.l.b16 %v1928
      %v1945 = vunpack.c.l.b16 %v1932
      %v1946 = vunpack.c.l.b16 %v1936
      %v1947 = vpack.c.b16 %v1940, %v1939
      %v1948 = vpack.c.b16 %v1942, %v1941
      %v1949 = vpack.c.b16 %v1944, %v1943
      %v1950 = vpack.c.b16 %v1946, %v1945
      %v1952 = vsel %vm682, %v1947, 0
      %v1955 = vsel %vm682, %v1948, 0
      %v1958 = vsel %vm682, %v1949, 0
      %v1961 = vsel %vm682, %v1950, 0
      %v1964 = vsel %vm695, %v1938, 0
      %1966 = vmatprep.subr.bf16.mxu0 0
      %1967 = vmatpush1.bf16.msra.mxu0 0
      %1968 = vmatprep.subr.bf16.mxu0 0
      %1969 = vmatpush1.bf16.msra.mxu0 0
      %1970 = vmatprep.subr.bf16.mxu0 0
      %1971 = vmatpush1.bf16.msra.mxu0 0
      %1972 = vmatprep.subr.bf16.mxu0 0
      %1973 = vmatpush1.bf16.msra.mxu0 0
      %1974 = vmatprep.subr.bf16.mxu0 0
      %1975 = vmatpush1.bf16.msra.mxu0 0
      %1976 = vmatprep.subr.bf16.mxu0 0
      %1977 = vmatpush1.bf16.msra.mxu0 0
      %1978 = vmatprep.subr.bf16.mxu0 0
      %1979 = vmatpush1.bf16.msra.mxu0 0
      %1980 = vmatprep.subr.bf16.mxu0 0
      %1981 = vmatpush1.bf16.msra.mxu0 %v1964
      %1982 = vmatprep.subr.bf16.mxu0 0
      %1983 = vmatpush2.bf16.msra.mxu0 0
      %1984 = vmatprep.subr.bf16.mxu0 0
      %1985 = vmatpush2.bf16.msra.mxu0 0
      %1986 = vmatprep.subr.bf16.mxu0 0
      %1987 = vmatpush2.bf16.msra.mxu0 0
      %1988 = vmatprep.subr.bf16.mxu0 0
      %1989 = vmatpush2.bf16.msra.mxu0 0
      %1990 = vmatprep.subr.bf16.mxu0 0
      %1991 = vmatpush2.bf16.msra.mxu0 0
      %1992 = vmatprep.subr.bf16.mxu0 0
      %1993 = vmatpush2.bf16.msra.mxu0 0
      %1994 = vmatprep.subr.bf16.mxu0 0
      %1995 = vmatpush2.bf16.msra.mxu0 0
      %1996 = vmatprep.subr.bf16.mxu0 0
      %1997 = vmatpush2.bf16.msra.mxu0 0
      %1998 = vmatprep.mubr.bf16.mxu0 0
      %1999 = vmatmul.mubr.bf16.gmra.mxu0 %v1952
      %v2000 = vpop.f32.mrf.mxu0
      %v2001 = vadd.f32 0.0, %v2000
      %v2002 = vpop.f32.mrf.mxu0
      %v2003 = vpop.f32.mrf.mxu0
      %v2004 = vadd.f32 0.0, %v2003
      %v2005 = vpop.f32.mrf.mxu0
      %2006 = vmatprep.mubr.bf16.mxu0 0
      %2007 = vmatmul.mubr.bf16.gmra.mxu0 %v1955
      %v2008 = vpop.f32.mrf.mxu0
      %v2009 = vadd.f32 0.0, %v2008
      %v2010 = vpop.f32.mrf.mxu0
      %v2011 = vpop.f32.mrf.mxu0
      %v2012 = vadd.f32 0.0, %v2011
      %v2013 = vpop.f32.mrf.mxu0
      %2014 = vmatprep.mubr.bf16.mxu0 0
      %2015 = vmatmul.mubr.bf16.gmra.mxu0 %v1958
      %v2016 = vpop.f32.mrf.mxu0
      %v2017 = vadd.f32 0.0, %v2016
      %v2018 = vpop.f32.mrf.mxu0
      %v2019 = vpop.f32.mrf.mxu0
      %v2020 = vadd.f32 0.0, %v2019
      %v2021 = vpop.f32.mrf.mxu0
      %2022 = vmatprep.mubr.bf16.mxu0 0
      %2023 = vmatmul.mubr.bf16.gmra.mxu0 %v1961
      %v2024 = vpop.f32.mrf.mxu0
      %v2025 = vadd.f32 0.0, %v2024
      %v2026 = vpop.f32.mrf.mxu0
      %v2027 = vpop.f32.mrf.mxu0
      %v2028 = vadd.f32 0.0, %v2027
      %v2029 = vpop.f32.mrf.mxu0
      %2030 = vdwg.mxu0
      %v2031 = vadd.f32 %v1873, %v2001
      %v2032 = vadd.f32 %v1874, %v2004
      %v2033 = vadd.f32 %v1875, %v2009
      %v2034 = vadd.f32 %v1876, %v2012
      %v2035 = vadd.f32 %v1877, %v2017
      %v2036 = vadd.f32 %v1878, %v2020
      %v2037 = vadd.f32 %v1879, %v2025
      %v2038 = vadd.f32 %v1880, %v2028
      %v2039 = vld [vmem:[%s4] sm:$0x1]
      %v2040 = vlaneseq
      %v2041 = vshrl.u32 %v2040, 7
      %v2042 = vsub.s32 0, %v2041
      %v2043 = vrot.slane %v2039, %v2042
      %v2044 = vmul.f32 %v2031, %v2043
      %v2045 = vmul.f32 %v2032, %v2043
      %v2046 = vmul.f32 %v2033, %v2043
      %v2047 = vmul.f32 %v2034, %v2043
      %v2048 = vmul.f32 %v2035, %v2043
      %v2049 = vmul.f32 %v2036, %v2043
      %v2050 = vmul.f32 %v2037, %v2043
      %v2051 = vmul.f32 %v2038, %v2043
      %v2052 = vld [vmem:[%s5] sm:$0x1]
      %v2053 = vlaneseq
      %v2054 = vshrl.u32 %v2053, 7
      %v2055 = vsub.s32 0, %v2054
      %v2056 = vrot.slane %v2052, %v2055
      %v2057 = vadd.f32 %v2044, %v2056
      %v2058 = vadd.f32 %v2045, %v2056
      %v2059 = vadd.f32 %v2046, %v2056
      %v2060 = vadd.f32 %v2047, %v2056
      %v2061 = vadd.f32 %v2048, %v2056
      %v2062 = vadd.f32 %v2049, %v2056
      %v2063 = vadd.f32 %v2050, %v2056
      %v2064 = vadd.f32 %v2051, %v2056
      %v2065 = vmax.f32 %v2057, 0.0
      %v2066 = vmax.f32 %v2058, 0.0
      %v2067 = vmax.f32 %v2059, 0.0
      %v2068 = vmax.f32 %v2060, 0.0
      %v2069 = vmax.f32 %v2061, 0.0
      %v2070 = vmax.f32 %v2062, 0.0
      %v2071 = vmax.f32 %v2063, 0.0
      %v2072 = vmax.f32 %v2064, 0.0
      %v2073 = vpack.c.bf16 %v2066, %v2065
      %v2074 = vpack.c.bf16 %v2068, %v2067
      %v2075 = vpack.c.bf16 %v2070, %v2069
      %v2076 = vpack.c.bf16 %v2072, %v2071
      %v2081 = vunpack.c.l.b16 %v2073
      %v2082 = vunpack.c.h.b16 %v2073
      %v2083 = vunpack.c.l.b16 %v2074
      %v2084 = vunpack.c.h.b16 %v2074
      %v2085 = vunpack.c.l.b16 %v2075
      %v2086 = vunpack.c.h.b16 %v2075
      %v2087 = vunpack.c.l.b16 %v2076
      %v2088 = vunpack.c.h.b16 %v2076
      %v2089 = vpack.c.b16 %v2081, %v2081
      %v2090 = vpack.c.b16 %v2082, %v2082
      %v2091 = vpack.c.b16 %v2083, %v2083
      %v2092 = vpack.c.b16 %v2084, %v2084
      %v2093 = vpack.c.b16 %v2085, %v2085
      %v2094 = vpack.c.b16 %v2086, %v2086
      %v2095 = vpack.c.b16 %v2087, %v2087
      %v2096 = vpack.c.b16 %v2088, %v2088
      %vm2105 = vcmask 60416
      %2106 = vst.msk [vmem:[#allocation2] sm:$0xf] %vm2105, %v2089
      %2107 = vst.msk [vmem:[#allocation2 + $0x4] sm:$0xf] %vm2105, %v2090
      %2108 = vst.msk [vmem:[#allocation2 + $0x8] sm:$0xf] %vm2105, %v2091
      %2109 = vst.msk [vmem:[#allocation2 + $0xc] sm:$0xf] %vm2105, %v2092
      %2110 = vst.msk [vmem:[#allocation2 + $0x10] sm:$0xf] %vm2105, %v2093
      %2111 = vst.msk [vmem:[#allocation2 + $0x14] sm:$0xf] %vm2105, %v2094
      %2112 = vst.msk [vmem:[#allocation2 + $0x18] sm:$0xf] %vm2105, %v2095
      %2113 = vst.msk [vmem:[#allocation2 + $0x1c] sm:$0xf] %vm2105, %v2096
      %vm2114 = vcmask 64512
      %v2115 = vsel %vm2114, %v2065, 0.0
      %v2116 = vsel %vm2114, %v2066, 0.0
      %v2117 = vadd.f32 %v2115, %v2116
      %v2118 = vsel %vm2114, %v2067, 0.0
      %v2119 = vadd.f32 %v2117, %v2118
      %v2120 = vsel %vm2114, %v2068, 0.0
      %v2121 = vadd.f32 %v2119, %v2120
      %v2122 = vsel %vm2114, %v2069, 0.0
      %v2123 = vadd.f32 %v2121, %v2122
      %v2124 = vsel %vm2114, %v2070, 0.0
      %v2125 = vadd.f32 %v2123, %v2124
      %v2126 = vsel %vm2114, %v2071, 0.0
      %v2127 = vadd.f32 %v2125, %v2126
      %v2128 = vsel %vm2114, %v2072, 0.0
      %v2129 = vadd.f32 %v2127, %v2128
      %v2130 = vrot.slane %v2129, 4
      %v2131 = vadd.f32 %v2129, %v2130
      %v2132 = vrot.slane %v2131, 2
      %v2133 = vadd.f32 %v2131, %v2132
      %v2134 = vrot.slane %v2133, 1
      %v2135 = vadd.f32 %v2133, %v2134
      %v2136 = vld [vmem:[%s524] sm:$0xf]
      %v2137 = vld [vmem:[%s524 + $0x8] sm:$0xf]
      %v2138 = vld [vmem:[%s524 + $0x10] sm:$0xf]
      %v2139 = vld [vmem:[%s524 + $0x18] sm:$0xf]
      %v2140 = vld [vmem:[%s524 + $0x20] sm:$0xf]
      %v2141 = vld [vmem:[%s524 + $0x28] sm:$0xf]
      %v2142 = vld [vmem:[%s524 + $0x30] sm:$0xf]
      %v2143 = vld [vmem:[%s524 + $0x38] sm:$0xf]
      %s2144 = scalar_lea.vmem %s3, 18
      %v2145 = vld [vmem:[%s2144] sm:$0x3]
      %v2146 = vld [vmem:[%s524 + $0x4] sm:$0x1]
      %v2147 = vld [vmem:[%s524 + $0xc] sm:$0x1]
      %v2148 = vld [vmem:[%s524 + $0x14] sm:$0x1]
      %v2149 = vld [vmem:[%s524 + $0x1c] sm:$0x1]
      %v2150 = vld [vmem:[%s524 + $0x24] sm:$0x1]
      %v2151 = vld [vmem:[%s524 + $0x2c] sm:$0x1]
      %v2152 = vld [vmem:[%s524 + $0x34] sm:$0x1]
      %v2153 = vld [vmem:[%s524 + $0x3c] sm:$0x1]
      %v2155 = vshrl.u32 %v2136, 16
      %v2157 = vrot.slane %v2155, 4
      %v2158 = vshll.u32 %v2136, 16
      %v2160 = vrot.slane %v2158, 5
      %v2161 = vor.u32 %v2157, %v2160
      %v2162 = vrot.slane %v2161, 4
      %v2164 = vshll.u32 %v2146, 16
      %v2166 = vrot.slane %v2164, 5
      %v2167 = vsel %vm555, %v2162, %v2166
      %v2169 = vshrl.u32 %v2137, 16
      %v2171 = vrot.slane %v2169, 4
      %v2172 = vshll.u32 %v2137, 16
      %v2174 = vrot.slane %v2172, 5
      %v2175 = vor.u32 %v2171, %v2174
      %v2176 = vrot.slane %v2175, 4
      %v2178 = vshll.u32 %v2147, 16
      %v2180 = vrot.slane %v2178, 5
      %v2181 = vsel %vm555, %v2176, %v2180
      %v2183 = vshrl.u32 %v2138, 16
      %v2185 = vrot.slane %v2183, 4
      %v2186 = vshll.u32 %v2138, 16
      %v2188 = vrot.slane %v2186, 5
      %v2189 = vor.u32 %v2185, %v2188
      %v2190 = vrot.slane %v2189, 4
      %v2192 = vshll.u32 %v2148, 16
      %v2194 = vrot.slane %v2192, 5
      %v2195 = vsel %vm555, %v2190, %v2194
      %v2197 = vshrl.u32 %v2139, 16
      %v2199 = vrot.slane %v2197, 4
      %v2200 = vshll.u32 %v2139, 16
      %v2202 = vrot.slane %v2200, 5
      %v2203 = vor.u32 %v2199, %v2202
      %v2204 = vrot.slane %v2203, 4
      %v2206 = vshll.u32 %v2149, 16
      %v2208 = vrot.slane %v2206, 5
      %v2209 = vsel %vm555, %v2204, %v2208
      %v2211 = vshrl.u32 %v2140, 16
      %v2213 = vrot.slane %v2211, 4
      %v2214 = vshll.u32 %v2140, 16
      %v2216 = vrot.slane %v2214, 5
      %v2217 = vor.u32 %v2213, %v2216
      %v2218 = vrot.slane %v2217, 4
      %v2220 = vshll.u32 %v2150, 16
      %v2222 = vrot.slane %v2220, 5
      %v2223 = vsel %vm555, %v2218, %v2222
      %v2225 = vshrl.u32 %v2141, 16
      %v2227 = vrot.slane %v2225, 4
      %v2228 = vshll.u32 %v2141, 16
      %v2230 = vrot.slane %v2228, 5
      %v2231 = vor.u32 %v2227, %v2230
      %v2232 = vrot.slane %v2231, 4
      %v2234 = vshll.u32 %v2151, 16
      %v2236 = vrot.slane %v2234, 5
      %v2237 = vsel %vm555, %v2232, %v2236
      %v2239 = vshrl.u32 %v2142, 16
      %v2241 = vrot.slane %v2239, 4
      %v2242 = vshll.u32 %v2142, 16
      %v2244 = vrot.slane %v2242, 5
      %v2245 = vor.u32 %v2241, %v2244
      %v2246 = vrot.slane %v2245, 4
      %v2248 = vshll.u32 %v2152, 16
      %v2250 = vrot.slane %v2248, 5
      %v2251 = vsel %vm555, %v2246, %v2250
      %v2253 = vshrl.u32 %v2143, 16
      %v2255 = vrot.slane %v2253, 4
      %v2256 = vshll.u32 %v2143, 16
      %v2258 = vrot.slane %v2256, 5
      %v2259 = vor.u32 %v2255, %v2258
      %v2260 = vrot.slane %v2259, 4
      %v2262 = vshll.u32 %v2153, 16
      %v2264 = vrot.slane %v2262, 5
      %v2265 = vsel %vm555, %v2260, %v2264
      %s2266 = scalar_lea.vmem %s3, 20
      %v2267 = vld [vmem:[%s2266] sm:$0x3]
      %v2268 = vunpack.c.l.b16 %v2167
      %v2269 = vunpack.c.l.b16 %v2181
      %v2270 = vunpack.c.l.b16 %v2195
      %v2271 = vunpack.c.l.b16 %v2209
      %v2272 = vunpack.c.l.b16 %v2223
      %v2273 = vunpack.c.l.b16 %v2237
      %v2274 = vunpack.c.l.b16 %v2251
      %v2275 = vunpack.c.l.b16 %v2265
      %v2276 = vpack.c.b16 %v2269, %v2268
      %v2277 = vpack.c.b16 %v2271, %v2270
      %v2278 = vpack.c.b16 %v2273, %v2272
      %v2279 = vpack.c.b16 %v2275, %v2274
      %v2281 = vsel %vm682, %v2276, 0
      %v2284 = vsel %vm682, %v2277, 0
      %v2287 = vsel %vm682, %v2278, 0
      %v2290 = vsel %vm682, %v2279, 0
      %v2293 = vsel %vm695, %v2267, 0
      %2295 = vmatprep.subr.bf16.mxu0 0
      %2296 = vmatpush1.bf16.msra.mxu0 0
      %2297 = vmatprep.subr.bf16.mxu0 0
      %2298 = vmatpush1.bf16.msra.mxu0 0
      %2299 = vmatprep.subr.bf16.mxu0 0
      %2300 = vmatpush1.bf16.msra.mxu0 0
      %2301 = vmatprep.subr.bf16.mxu0 0
      %2302 = vmatpush1.bf16.msra.mxu0 0
      %2303 = vmatprep.subr.bf16.mxu0 0
      %2304 = vmatpush1.bf16.msra.mxu0 0
      %2305 = vmatprep.subr.bf16.mxu0 0
      %2306 = vmatpush1.bf16.msra.mxu0 0
      %2307 = vmatprep.subr.bf16.mxu0 0
      %2308 = vmatpush1.bf16.msra.mxu0 0
      %2309 = vmatprep.subr.bf16.mxu0 0
      %2310 = vmatpush1.bf16.msra.mxu0 %v2293
      %2311 = vmatprep.subr.bf16.mxu0 0
      %2312 = vmatpush2.bf16.msra.mxu0 0
      %2313 = vmatprep.subr.bf16.mxu0 0
      %2314 = vmatpush2.bf16.msra.mxu0 0
      %2315 = vmatprep.subr.bf16.mxu0 0
      %2316 = vmatpush2.bf16.msra.mxu0 0
      %2317 = vmatprep.subr.bf16.mxu0 0
      %2318 = vmatpush2.bf16.msra.mxu0 0
      %2319 = vmatprep.subr.bf16.mxu0 0
      %2320 = vmatpush2.bf16.msra.mxu0 0
      %2321 = vmatprep.subr.bf16.mxu0 0
      %2322 = vmatpush2.bf16.msra.mxu0 0
      %2323 = vmatprep.subr.bf16.mxu0 0
      %2324 = vmatpush2.bf16.msra.mxu0 0
      %2325 = vmatprep.subr.bf16.mxu0 0
      %2326 = vmatpush2.bf16.msra.mxu0 0
      %2327 = vmatprep.mubr.bf16.mxu0 0
      %2328 = vmatmul.mubr.bf16.gmra.mxu0 %v2281
      %v2329 = vpop.f32.mrf.mxu0
      %v2330 = vadd.f32 0.0, %v2329
      %v2331 = vpop.f32.mrf.mxu0
      %v2332 = vpop.f32.mrf.mxu0
      %v2333 = vadd.f32 0.0, %v2332
      %v2334 = vpop.f32.mrf.mxu0
      %2335 = vmatprep.mubr.bf16.mxu0 0
      %2336 = vmatmul.mubr.bf16.gmra.mxu0 %v2284
      %v2337 = vpop.f32.mrf.mxu0
      %v2338 = vadd.f32 0.0, %v2337
      %v2339 = vpop.f32.mrf.mxu0
      %v2340 = vpop.f32.mrf.mxu0
      %v2341 = vadd.f32 0.0, %v2340
      %v2342 = vpop.f32.mrf.mxu0
      %2343 = vmatprep.mubr.bf16.mxu0 0
      %2344 = vmatmul.mubr.bf16.gmra.mxu0 %v2287
      %v2345 = vpop.f32.mrf.mxu0
      %v2346 = vadd.f32 0.0, %v2345
      %v2347 = vpop.f32.mrf.mxu0
      %v2348 = vpop.f32.mrf.mxu0
      %v2349 = vadd.f32 0.0, %v2348
      %v2350 = vpop.f32.mrf.mxu0
      %2351 = vmatprep.mubr.bf16.mxu0 0
      %2352 = vmatmul.mubr.bf16.gmra.mxu0 %v2290
      %v2353 = vpop.f32.mrf.mxu0
      %v2354 = vadd.f32 0.0, %v2353
      %v2355 = vpop.f32.mrf.mxu0
      %v2356 = vpop.f32.mrf.mxu0
      %v2357 = vadd.f32 0.0, %v2356
      %v2358 = vpop.f32.mrf.mxu0
      %2359 = vdwg.mxu0
      %v2368 = vunpack.c.l.b16 %v2136
      %v2369 = vunpack.c.l.b16 %v2137
      %v2370 = vunpack.c.l.b16 %v2138
      %v2371 = vunpack.c.l.b16 %v2139
      %v2372 = vunpack.c.l.b16 %v2140
      %v2373 = vunpack.c.l.b16 %v2141
      %v2374 = vunpack.c.l.b16 %v2142
      %v2375 = vunpack.c.l.b16 %v2143
      %v2376 = vpack.c.b16 %v2369, %v2368
      %v2377 = vpack.c.b16 %v2371, %v2370
      %v2378 = vpack.c.b16 %v2373, %v2372
      %v2379 = vpack.c.b16 %v2375, %v2374
      %v2381 = vsel %vm682, %v2376, 0
      %v2384 = vsel %vm682, %v2377, 0
      %v2387 = vsel %vm682, %v2378, 0
      %v2390 = vsel %vm682, %v2379, 0
      %v2393 = vsel %vm695, %v2145, 0
      %2395 = vmatprep.subr.bf16.mxu0 0
      %2396 = vmatpush1.bf16.msra.mxu0 0
      %2397 = vmatprep.subr.bf16.mxu0 0
      %2398 = vmatpush1.bf16.msra.mxu0 0
      %2399 = vmatprep.subr.bf16.mxu0 0
      %2400 = vmatpush1.bf16.msra.mxu0 0
      %2401 = vmatprep.subr.bf16.mxu0 0
      %2402 = vmatpush1.bf16.msra.mxu0 0
      %2403 = vmatprep.subr.bf16.mxu0 0
      %2404 = vmatpush1.bf16.msra.mxu0 0
      %2405 = vmatprep.subr.bf16.mxu0 0
      %2406 = vmatpush1.bf16.msra.mxu0 0
      %2407 = vmatprep.subr.bf16.mxu0 0
      %2408 = vmatpush1.bf16.msra.mxu0 0
      %2409 = vmatprep.subr.bf16.mxu0 0
      %2410 = vmatpush1.bf16.msra.mxu0 %v2393
      %2411 = vmatprep.subr.bf16.mxu0 0
      %2412 = vmatpush2.bf16.msra.mxu0 0
      %2413 = vmatprep.subr.bf16.mxu0 0
      %2414 = vmatpush2.bf16.msra.mxu0 0
      %2415 = vmatprep.subr.bf16.mxu0 0
      %2416 = vmatpush2.bf16.msra.mxu0 0
      %2417 = vmatprep.subr.bf16.mxu0 0
      %2418 = vmatpush2.bf16.msra.mxu0 0
      %2419 = vmatprep.subr.bf16.mxu0 0
      %2420 = vmatpush2.bf16.msra.mxu0 0
      %2421 = vmatprep.subr.bf16.mxu0 0
      %2422 = vmatpush2.bf16.msra.mxu0 0
      %2423 = vmatprep.subr.bf16.mxu0 0
      %2424 = vmatpush2.bf16.msra.mxu0 0
      %2425 = vmatprep.subr.bf16.mxu0 0
      %2426 = vmatpush2.bf16.msra.mxu0 0
      %2427 = vmatprep.mubr.bf16.mxu0 0
      %2428 = vmatmul.mubr.bf16.gmra.mxu0 %v2381
      %v2429 = vpop.f32.mrf.mxu0
      %v2430 = vadd.f32 %v2330, %v2429
      %v2431 = vpop.f32.mrf.mxu0
      %v2432 = vpop.f32.mrf.mxu0
      %v2433 = vadd.f32 %v2333, %v2432
      %v2434 = vpop.f32.mrf.mxu0
      %2435 = vmatprep.mubr.bf16.mxu0 0
      %2436 = vmatmul.mubr.bf16.gmra.mxu0 %v2384
      %v2437 = vpop.f32.mrf.mxu0
      %v2438 = vadd.f32 %v2338, %v2437
      %v2439 = vpop.f32.mrf.mxu0
      %v2440 = vpop.f32.mrf.mxu0
      %v2441 = vadd.f32 %v2341, %v2440
      %v2442 = vpop.f32.mrf.mxu0
      %2443 = vmatprep.mubr.bf16.mxu0 0
      %2444 = vmatmul.mubr.bf16.gmra.mxu0 %v2387
      %v2445 = vpop.f32.mrf.mxu0
      %v2446 = vadd.f32 %v2346, %v2445
      %v2447 = vpop.f32.mrf.mxu0
      %v2448 = vpop.f32.mrf.mxu0
      %v2449 = vadd.f32 %v2349, %v2448
      %v2450 = vpop.f32.mrf.mxu0
      %2451 = vmatprep.mubr.bf16.mxu0 0
      %2452 = vmatmul.mubr.bf16.gmra.mxu0 %v2390
      %v2453 = vpop.f32.mrf.mxu0
      %v2454 = vadd.f32 %v2354, %v2453
      %v2455 = vpop.f32.mrf.mxu0
      %v2456 = vpop.f32.mrf.mxu0
      %v2457 = vadd.f32 %v2357, %v2456
      %v2458 = vpop.f32.mrf.mxu0
      %2459 = vdwg.mxu0
      %v2460 = vld [vmem:[%s524] sm:$0xe]
      %v2461 = vld [vmem:[%s524 + $0x8] sm:$0xe]
      %v2462 = vld [vmem:[%s524 + $0x10] sm:$0xe]
      %v2463 = vld [vmem:[%s524 + $0x18] sm:$0xe]
      %v2464 = vld [vmem:[%s524 + $0x20] sm:$0xe]
      %v2465 = vld [vmem:[%s524 + $0x28] sm:$0xe]
      %v2466 = vld [vmem:[%s524 + $0x30] sm:$0xe]
      %v2467 = vld [vmem:[%s524 + $0x38] sm:$0xe]
      %v2484 = vrot.slane %v2460, 5
      %v2485 = vrot.slane %v2484, 4
      %v2486 = vrot.slane %v2146, 5
      %v2487 = vsel %vm890, %v2485, %v2486
      %v2488 = vrot.slane %v2461, 5
      %v2489 = vrot.slane %v2488, 4
      %v2490 = vrot.slane %v2147, 5
      %v2491 = vsel %vm890, %v2489, %v2490
      %v2492 = vrot.slane %v2462, 5
      %v2493 = vrot.slane %v2492, 4
      %v2494 = vrot.slane %v2148, 5
      %v2495 = vsel %vm890, %v2493, %v2494
      %v2496 = vrot.slane %v2463, 5
      %v2497 = vrot.slane %v2496, 4
      %v2498 = vrot.slane %v2149, 5
      %v2499 = vsel %vm890, %v2497, %v2498
      %v2500 = vrot.slane %v2464, 5
      %v2501 = vrot.slane %v2500, 4
      %v2502 = vrot.slane %v2150, 5
      %v2503 = vsel %vm890, %v2501, %v2502
      %v2504 = vrot.slane %v2465, 5
      %v2505 = vrot.slane %v2504, 4
      %v2506 = vrot.slane %v2151, 5
      %v2507 = vsel %vm890, %v2505, %v2506
      %v2508 = vrot.slane %v2466, 5
      %v2509 = vrot.slane %v2508, 4
      %v2510 = vrot.slane %v2152, 5
      %v2511 = vsel %vm890, %v2509, %v2510
      %v2512 = vrot.slane %v2467, 5
      %v2513 = vrot.slane %v2512, 4
      %v2514 = vrot.slane %v2153, 5
      %v2515 = vsel %vm890, %v2513, %v2514
      %s2516 = scalar_lea.vmem %s3, 22
      %v2517 = vld [vmem:[%s2516] sm:$0x3]
      %v2518 = vunpack.c.l.b16 %v2487
      %v2519 = vunpack.c.l.b16 %v2491
      %v2520 = vunpack.c.l.b16 %v2495
      %v2521 = vunpack.c.l.b16 %v2499
      %v2522 = vunpack.c.l.b16 %v2503
      %v2523 = vunpack.c.l.b16 %v2507
      %v2524 = vunpack.c.l.b16 %v2511
      %v2525 = vunpack.c.l.b16 %v2515
      %v2526 = vpack.c.b16 %v2519, %v2518
      %v2527 = vpack.c.b16 %v2521, %v2520
      %v2528 = vpack.c.b16 %v2523, %v2522
      %v2529 = vpack.c.b16 %v2525, %v2524
      %v2531 = vsel %vm682, %v2526, 0
      %v2534 = vsel %vm682, %v2527, 0
      %v2537 = vsel %vm682, %v2528, 0
      %v2540 = vsel %vm682, %v2529, 0
      %v2543 = vsel %vm695, %v2517, 0
      %2545 = vmatprep.subr.bf16.mxu0 0
      %2546 = vmatpush1.bf16.msra.mxu0 0
      %2547 = vmatprep.subr.bf16.mxu0 0
      %2548 = vmatpush1.bf16.msra.mxu0 0
      %2549 = vmatprep.subr.bf16.mxu0 0
      %2550 = vmatpush1.bf16.msra.mxu0 0
      %2551 = vmatprep.subr.bf16.mxu0 0
      %2552 = vmatpush1.bf16.msra.mxu0 0
      %2553 = vmatprep.subr.bf16.mxu0 0
      %2554 = vmatpush1.bf16.msra.mxu0 0
      %2555 = vmatprep.subr.bf16.mxu0 0
      %2556 = vmatpush1.bf16.msra.mxu0 0
      %2557 = vmatprep.subr.bf16.mxu0 0
      %2558 = vmatpush1.bf16.msra.mxu0 0
      %2559 = vmatprep.subr.bf16.mxu0 0
      %2560 = vmatpush1.bf16.msra.mxu0 %v2543
      %2561 = vmatprep.subr.bf16.mxu0 0
      %2562 = vmatpush2.bf16.msra.mxu0 0
      %2563 = vmatprep.subr.bf16.mxu0 0
      %2564 = vmatpush2.bf16.msra.mxu0 0
      %2565 = vmatprep.subr.bf16.mxu0 0
      %2566 = vmatpush2.bf16.msra.mxu0 0
      %2567 = vmatprep.subr.bf16.mxu0 0
      %2568 = vmatpush2.bf16.msra.mxu0 0
      %2569 = vmatprep.subr.bf16.mxu0 0
      %2570 = vmatpush2.bf16.msra.mxu0 0
      %2571 = vmatprep.subr.bf16.mxu0 0
      %2572 = vmatpush2.bf16.msra.mxu0 0
      %2573 = vmatprep.subr.bf16.mxu0 0
      %2574 = vmatpush2.bf16.msra.mxu0 0
      %2575 = vmatprep.subr.bf16.mxu0 0
      %2576 = vmatpush2.bf16.msra.mxu0 0
      %2577 = vmatprep.mubr.bf16.mxu0 0
      %2578 = vmatmul.mubr.bf16.gmra.mxu0 %v2531
      %v2579 = vpop.f32.mrf.mxu0
      %v2580 = vadd.f32 0.0, %v2579
      %v2581 = vpop.f32.mrf.mxu0
      %v2582 = vpop.f32.mrf.mxu0
      %v2583 = vadd.f32 0.0, %v2582
      %v2584 = vpop.f32.mrf.mxu0
      %2585 = vmatprep.mubr.bf16.mxu0 0
      %2586 = vmatmul.mubr.bf16.gmra.mxu0 %v2534
      %v2587 = vpop.f32.mrf.mxu0
      %v2588 = vadd.f32 0.0, %v2587
      %v2589 = vpop.f32.mrf.mxu0
      %v2590 = vpop.f32.mrf.mxu0
      %v2591 = vadd.f32 0.0, %v2590
      %v2592 = vpop.f32.mrf.mxu0
      %2593 = vmatprep.mubr.bf16.mxu0 0
      %2594 = vmatmul.mubr.bf16.gmra.mxu0 %v2537
      %v2595 = vpop.f32.mrf.mxu0
      %v2596 = vadd.f32 0.0, %v2595
      %v2597 = vpop.f32.mrf.mxu0
      %v2598 = vpop.f32.mrf.mxu0
      %v2599 = vadd.f32 0.0, %v2598
      %v2600 = vpop.f32.mrf.mxu0
      %2601 = vmatprep.mubr.bf16.mxu0 0
      %2602 = vmatmul.mubr.bf16.gmra.mxu0 %v2540
      %v2603 = vpop.f32.mrf.mxu0
      %v2604 = vadd.f32 0.0, %v2603
      %v2605 = vpop.f32.mrf.mxu0
      %v2606 = vpop.f32.mrf.mxu0
      %v2607 = vadd.f32 0.0, %v2606
      %v2608 = vpop.f32.mrf.mxu0
      %2609 = vdwg.mxu0
      %v2610 = vadd.f32 %v2430, %v2580
      %v2611 = vadd.f32 %v2433, %v2583
      %v2612 = vadd.f32 %v2438, %v2588
      %v2613 = vadd.f32 %v2441, %v2591
      %v2614 = vadd.f32 %v2446, %v2596
      %v2615 = vadd.f32 %v2449, %v2599
      %v2616 = vadd.f32 %v2454, %v2604
      %v2617 = vadd.f32 %v2457, %v2607
      %s2618 = scalar_lea.vmem %s524, 8
      %v2619 = vld [vmem:[%s2618] sm:$0xf]
      %v2620 = vld [vmem:[%s2618 + $0x8] sm:$0xf]
      %v2621 = vld [vmem:[%s2618 + $0x10] sm:$0xf]
      %v2622 = vld [vmem:[%s2618 + $0x18] sm:$0xf]
      %v2623 = vld [vmem:[%s2618 + $0x20] sm:$0xf]
      %v2624 = vld [vmem:[%s2618 + $0x28] sm:$0xf]
      %v2625 = vld [vmem:[%s2618 + $0x30] sm:$0xf]
      %v2626 = vld [vmem:[%s2618 + $0x38] sm:$0xf]
      %s2627 = scalar_lea.vmem %s3, 24
      %v2628 = vld [vmem:[%s2627] sm:$0x3]
      %v2637 = vunpack.c.l.b16 %v2619
      %v2638 = vunpack.c.l.b16 %v2620
      %v2639 = vunpack.c.l.b16 %v2621
      %v2640 = vunpack.c.l.b16 %v2622
      %v2641 = vunpack.c.l.b16 %v2623
      %v2642 = vunpack.c.l.b16 %v2624
      %v2643 = vunpack.c.l.b16 %v2625
      %v2644 = vunpack.c.l.b16 %v2626
      %v2645 = vpack.c.b16 %v2638, %v2637
      %v2646 = vpack.c.b16 %v2640, %v2639
      %v2647 = vpack.c.b16 %v2642, %v2641
      %v2648 = vpack.c.b16 %v2644, %v2643
      %v2650 = vsel %vm682, %v2645, 0
      %v2653 = vsel %vm682, %v2646, 0
      %v2656 = vsel %vm682, %v2647, 0
      %v2659 = vsel %vm682, %v2648, 0
      %v2662 = vsel %vm695, %v2628, 0
      %2664 = vmatprep.subr.bf16.mxu0 0
      %2665 = vmatpush1.bf16.msra.mxu0 0
      %2666 = vmatprep.subr.bf16.mxu0 0
      %2667 = vmatpush1.bf16.msra.mxu0 0
      %2668 = vmatprep.subr.bf16.mxu0 0
      %2669 = vmatpush1.bf16.msra.mxu0 0
      %2670 = vmatprep.subr.bf16.mxu0 0
      %2671 = vmatpush1.bf16.msra.mxu0 0
      %2672 = vmatprep.subr.bf16.mxu0 0
      %2673 = vmatpush1.bf16.msra.mxu0 0
      %2674 = vmatprep.subr.bf16.mxu0 0
      %2675 = vmatpush1.bf16.msra.mxu0 0
      %2676 = vmatprep.subr.bf16.mxu0 0
      %2677 = vmatpush1.bf16.msra.mxu0 0
      %2678 = vmatprep.subr.bf16.mxu0 0
      %2679 = vmatpush1.bf16.msra.mxu0 %v2662
      %2680 = vmatprep.subr.bf16.mxu0 0
      %2681 = vmatpush2.bf16.msra.mxu0 0
      %2682 = vmatprep.subr.bf16.mxu0 0
      %2683 = vmatpush2.bf16.msra.mxu0 0
      %2684 = vmatprep.subr.bf16.mxu0 0
      %2685 = vmatpush2.bf16.msra.mxu0 0
      %2686 = vmatprep.subr.bf16.mxu0 0
      %2687 = vmatpush2.bf16.msra.mxu0 0
      %2688 = vmatprep.subr.bf16.mxu0 0
      %2689 = vmatpush2.bf16.msra.mxu0 0
      %2690 = vmatprep.subr.bf16.mxu0 0
      %2691 = vmatpush2.bf16.msra.mxu0 0
      %2692 = vmatprep.subr.bf16.mxu0 0
      %2693 = vmatpush2.bf16.msra.mxu0 0
      %2694 = vmatprep.subr.bf16.mxu0 0
      %2695 = vmatpush2.bf16.msra.mxu0 0
      %2696 = vmatprep.mubr.bf16.mxu0 0
      %2697 = vmatmul.mubr.bf16.gmra.mxu0 %v2650
      %v2698 = vpop.f32.mrf.mxu0
      %v2699 = vadd.f32 0.0, %v2698
      %v2700 = vpop.f32.mrf.mxu0
      %v2701 = vpop.f32.mrf.mxu0
      %v2702 = vadd.f32 0.0, %v2701
      %v2703 = vpop.f32.mrf.mxu0
      %2704 = vmatprep.mubr.bf16.mxu0 0
      %2705 = vmatmul.mubr.bf16.gmra.mxu0 %v2653
      %v2706 = vpop.f32.mrf.mxu0
      %v2707 = vadd.f32 0.0, %v2706
      %v2708 = vpop.f32.mrf.mxu0
      %v2709 = vpop.f32.mrf.mxu0
      %v2710 = vadd.f32 0.0, %v2709
      %v2711 = vpop.f32.mrf.mxu0
      %2712 = vmatprep.mubr.bf16.mxu0 0
      %2713 = vmatmul.mubr.bf16.gmra.mxu0 %v2656
      %v2714 = vpop.f32.mrf.mxu0
      %v2715 = vadd.f32 0.0, %v2714
      %v2716 = vpop.f32.mrf.mxu0
      %v2717 = vpop.f32.mrf.mxu0
      %v2718 = vadd.f32 0.0, %v2717
      %v2719 = vpop.f32.mrf.mxu0
      %2720 = vmatprep.mubr.bf16.mxu0 0
      %2721 = vmatmul.mubr.bf16.gmra.mxu0 %v2659
      %v2722 = vpop.f32.mrf.mxu0
      %v2723 = vadd.f32 0.0, %v2722
      %v2724 = vpop.f32.mrf.mxu0
      %v2725 = vpop.f32.mrf.mxu0
      %v2726 = vadd.f32 0.0, %v2725
      %v2727 = vpop.f32.mrf.mxu0
      %2728 = vdwg.mxu0
      %v2729 = vadd.f32 %v2610, %v2699
      %v2730 = vadd.f32 %v2611, %v2702
      %v2731 = vadd.f32 %v2612, %v2707
      %v2732 = vadd.f32 %v2613, %v2710
      %v2733 = vadd.f32 %v2614, %v2715
      %v2734 = vadd.f32 %v2615, %v2718
      %v2735 = vadd.f32 %v2616, %v2723
      %v2736 = vadd.f32 %v2617, %v2726
      %v2737 = vld [vmem:[%s2618] sm:$0xf]
      %v2738 = vld [vmem:[%s2618 + $0x4] sm:$0x1]
      %v2739 = vld [vmem:[%s2618 + $0x8] sm:$0xf]
      %v2740 = vld [vmem:[%s2618 + $0xc] sm:$0x1]
      %v2741 = vld [vmem:[%s2618 + $0x10] sm:$0xf]
      %v2742 = vld [vmem:[%s2618 + $0x14] sm:$0x1]
      %v2743 = vld [vmem:[%s2618 + $0x18] sm:$0xf]
      %v2744 = vld [vmem:[%s2618 + $0x1c] sm:$0x1]
      %v2745 = vld [vmem:[%s2618 + $0x20] sm:$0xf]
      %v2746 = vld [vmem:[%s2618 + $0x24] sm:$0x1]
      %v2747 = vld [vmem:[%s2618 + $0x28] sm:$0xf]
      %v2748 = vld [vmem:[%s2618 + $0x2c] sm:$0x1]
      %v2749 = vld [vmem:[%s2618 + $0x30] sm:$0xf]
      %v2750 = vld [vmem:[%s2618 + $0x34] sm:$0x1]
      %v2751 = vld [vmem:[%s2618 + $0x38] sm:$0xf]
      %v2752 = vld [vmem:[%s2618 + $0x3c] sm:$0x1]
      %v2754 = vshrl.u32 %v2737, 16
      %v2756 = vrot.slane %v2754, 4
      %v2757 = vshll.u32 %v2737, 16
      %v2759 = vrot.slane %v2757, 5
      %v2760 = vor.u32 %v2756, %v2759
      %v2761 = vrot.slane %v2760, 4
      %v2763 = vshll.u32 %v2738, 16
      %v2765 = vrot.slane %v2763, 5
      %v2766 = vsel %vm555, %v2761, %v2765
      %v2768 = vshrl.u32 %v2739, 16
      %v2770 = vrot.slane %v2768, 4
      %v2771 = vshll.u32 %v2739, 16
      %v2773 = vrot.slane %v2771, 5
      %v2774 = vor.u32 %v2770, %v2773
      %v2775 = vrot.slane %v2774, 4
      %v2777 = vshll.u32 %v2740, 16
      %v2779 = vrot.slane %v2777, 5
      %v2780 = vsel %vm555, %v2775, %v2779
      %v2782 = vshrl.u32 %v2741, 16
      %v2784 = vrot.slane %v2782, 4
      %v2785 = vshll.u32 %v2741, 16
      %v2787 = vrot.slane %v2785, 5
      %v2788 = vor.u32 %v2784, %v2787
      %v2789 = vrot.slane %v2788, 4
      %v2791 = vshll.u32 %v2742, 16
      %v2793 = vrot.slane %v2791, 5
      %v2794 = vsel %vm555, %v2789, %v2793
      %v2796 = vshrl.u32 %v2743, 16
      %v2798 = vrot.slane %v2796, 4
      %v2799 = vshll.u32 %v2743, 16
      %v2801 = vrot.slane %v2799, 5
      %v2802 = vor.u32 %v2798, %v2801
      %v2803 = vrot.slane %v2802, 4
      %v2805 = vshll.u32 %v2744, 16
      %v2807 = vrot.slane %v2805, 5
      %v2808 = vsel %vm555, %v2803, %v2807
      %v2810 = vshrl.u32 %v2745, 16
      %v2812 = vrot.slane %v2810, 4
      %v2813 = vshll.u32 %v2745, 16
      %v2815 = vrot.slane %v2813, 5
      %v2816 = vor.u32 %v2812, %v2815
      %v2817 = vrot.slane %v2816, 4
      %v2819 = vshll.u32 %v2746, 16
      %v2821 = vrot.slane %v2819, 5
      %v2822 = vsel %vm555, %v2817, %v2821
      %v2824 = vshrl.u32 %v2747, 16
      %v2826 = vrot.slane %v2824, 4
      %v2827 = vshll.u32 %v2747, 16
      %v2829 = vrot.slane %v2827, 5
      %v2830 = vor.u32 %v2826, %v2829
      %v2831 = vrot.slane %v2830, 4
      %v2833 = vshll.u32 %v2748, 16
      %v2835 = vrot.slane %v2833, 5
      %v2836 = vsel %vm555, %v2831, %v2835
      %v2838 = vshrl.u32 %v2749, 16
      %v2840 = vrot.slane %v2838, 4
      %v2841 = vshll.u32 %v2749, 16
      %v2843 = vrot.slane %v2841, 5
      %v2844 = vor.u32 %v2840, %v2843
      %v2845 = vrot.slane %v2844, 4
      %v2847 = vshll.u32 %v2750, 16
      %v2849 = vrot.slane %v2847, 5
      %v2850 = vsel %vm555, %v2845, %v2849
      %v2852 = vshrl.u32 %v2751, 16
      %v2854 = vrot.slane %v2852, 4
      %v2855 = vshll.u32 %v2751, 16
      %v2857 = vrot.slane %v2855, 5
      %v2858 = vor.u32 %v2854, %v2857
      %v2859 = vrot.slane %v2858, 4
      %v2861 = vshll.u32 %v2752, 16
      %v2863 = vrot.slane %v2861, 5
      %v2864 = vsel %vm555, %v2859, %v2863
      %s2865 = scalar_lea.vmem %s3, 26
      %v2866 = vld [vmem:[%s2865] sm:$0x3]
      %v2867 = vunpack.c.l.b16 %v2766
      %v2868 = vunpack.c.l.b16 %v2780
      %v2869 = vunpack.c.l.b16 %v2794
      %v2870 = vunpack.c.l.b16 %v2808
      %v2871 = vunpack.c.l.b16 %v2822
      %v2872 = vunpack.c.l.b16 %v2836
      %v2873 = vunpack.c.l.b16 %v2850
      %v2874 = vunpack.c.l.b16 %v2864
      %v2875 = vpack.c.b16 %v2868, %v2867
      %v2876 = vpack.c.b16 %v2870, %v2869
      %v2877 = vpack.c.b16 %v2872, %v2871
      %v2878 = vpack.c.b16 %v2874, %v2873
      %v2880 = vsel %vm682, %v2875, 0
      %v2883 = vsel %vm682, %v2876, 0
      %v2886 = vsel %vm682, %v2877, 0
      %v2889 = vsel %vm682, %v2878, 0
      %v2892 = vsel %vm695, %v2866, 0
      %2894 = vmatprep.subr.bf16.mxu0 0
      %2895 = vmatpush1.bf16.msra.mxu0 0
      %2896 = vmatprep.subr.bf16.mxu0 0
      %2897 = vmatpush1.bf16.msra.mxu0 0
      %2898 = vmatprep.subr.bf16.mxu0 0
      %2899 = vmatpush1.bf16.msra.mxu0 0
      %2900 = vmatprep.subr.bf16.mxu0 0
      %2901 = vmatpush1.bf16.msra.mxu0 0
      %2902 = vmatprep.subr.bf16.mxu0 0
      %2903 = vmatpush1.bf16.msra.mxu0 0
      %2904 = vmatprep.subr.bf16.mxu0 0
      %2905 = vmatpush1.bf16.msra.mxu0 0
      %2906 = vmatprep.subr.bf16.mxu0 0
      %2907 = vmatpush1.bf16.msra.mxu0 0
      %2908 = vmatprep.subr.bf16.mxu0 0
      %2909 = vmatpush1.bf16.msra.mxu0 %v2892
      %2910 = vmatprep.subr.bf16.mxu0 0
      %2911 = vmatpush2.bf16.msra.mxu0 0
      %2912 = vmatprep.subr.bf16.mxu0 0
      %2913 = vmatpush2.bf16.msra.mxu0 0
      %2914 = vmatprep.subr.bf16.mxu0 0
      %2915 = vmatpush2.bf16.msra.mxu0 0
      %2916 = vmatprep.subr.bf16.mxu0 0
      %2917 = vmatpush2.bf16.msra.mxu0 0
      %2918 = vmatprep.subr.bf16.mxu0 0
      %2919 = vmatpush2.bf16.msra.mxu0 0
      %2920 = vmatprep.subr.bf16.mxu0 0
      %2921 = vmatpush2.bf16.msra.mxu0 0
      %2922 = vmatprep.subr.bf16.mxu0 0
      %2923 = vmatpush2.bf16.msra.mxu0 0
      %2924 = vmatprep.subr.bf16.mxu0 0
      %2925 = vmatpush2.bf16.msra.mxu0 0
      %2926 = vmatprep.mubr.bf16.mxu0 0
      %2927 = vmatmul.mubr.bf16.gmra.mxu0 %v2880
      %v2928 = vpop.f32.mrf.mxu0
      %v2929 = vadd.f32 0.0, %v2928
      %v2930 = vpop.f32.mrf.mxu0
      %v2931 = vpop.f32.mrf.mxu0
      %v2932 = vadd.f32 0.0, %v2931
      %v2933 = vpop.f32.mrf.mxu0
      %2934 = vmatprep.mubr.bf16.mxu0 0
      %2935 = vmatmul.mubr.bf16.gmra.mxu0 %v2883
      %v2936 = vpop.f32.mrf.mxu0
      %v2937 = vadd.f32 0.0, %v2936
      %v2938 = vpop.f32.mrf.mxu0
      %v2939 = vpop.f32.mrf.mxu0
      %v2940 = vadd.f32 0.0, %v2939
      %v2941 = vpop.f32.mrf.mxu0
      %2942 = vmatprep.mubr.bf16.mxu0 0
      %2943 = vmatmul.mubr.bf16.gmra.mxu0 %v2886
      %v2944 = vpop.f32.mrf.mxu0
      %v2945 = vadd.f32 0.0, %v2944
      %v2946 = vpop.f32.mrf.mxu0
      %v2947 = vpop.f32.mrf.mxu0
      %v2948 = vadd.f32 0.0, %v2947
      %v2949 = vpop.f32.mrf.mxu0
      %2950 = vmatprep.mubr.bf16.mxu0 0
      %2951 = vmatmul.mubr.bf16.gmra.mxu0 %v2889
      %v2952 = vpop.f32.mrf.mxu0
      %v2953 = vadd.f32 0.0, %v2952
      %v2954 = vpop.f32.mrf.mxu0
      %v2955 = vpop.f32.mrf.mxu0
      %v2956 = vadd.f32 0.0, %v2955
      %v2957 = vpop.f32.mrf.mxu0
      %2958 = vdwg.mxu0
      %v2959 = vadd.f32 %v2729, %v2929
      %v2960 = vadd.f32 %v2730, %v2932
      %v2961 = vadd.f32 %v2731, %v2937
      %v2962 = vadd.f32 %v2732, %v2940
      %v2963 = vadd.f32 %v2733, %v2945
      %v2964 = vadd.f32 %v2734, %v2948
      %v2965 = vadd.f32 %v2735, %v2953
      %v2966 = vadd.f32 %v2736, %v2956
      %v2967 = vld [vmem:[%s2618] sm:$0xe]
      %v2968 = vld [vmem:[%s2618 + $0x8] sm:$0xe]
      %v2969 = vld [vmem:[%s2618 + $0x10] sm:$0xe]
      %v2970 = vld [vmem:[%s2618 + $0x18] sm:$0xe]
      %v2971 = vld [vmem:[%s2618 + $0x20] sm:$0xe]
      %v2972 = vld [vmem:[%s2618 + $0x28] sm:$0xe]
      %v2973 = vld [vmem:[%s2618 + $0x30] sm:$0xe]
      %v2974 = vld [vmem:[%s2618 + $0x38] sm:$0xe]
      %v2991 = vrot.slane %v2967, 5
      %v2992 = vrot.slane %v2991, 4
      %v2993 = vrot.slane %v2738, 5
      %v2994 = vsel %vm890, %v2992, %v2993
      %v2995 = vrot.slane %v2968, 5
      %v2996 = vrot.slane %v2995, 4
      %v2997 = vrot.slane %v2740, 5
      %v2998 = vsel %vm890, %v2996, %v2997
      %v2999 = vrot.slane %v2969, 5
      %v3000 = vrot.slane %v2999, 4
      %v3001 = vrot.slane %v2742, 5
      %v3002 = vsel %vm890, %v3000, %v3001
      %v3003 = vrot.slane %v2970, 5
      %v3004 = vrot.slane %v3003, 4
      %v3005 = vrot.slane %v2744, 5
      %v3006 = vsel %vm890, %v3004, %v3005
      %v3007 = vrot.slane %v2971, 5
      %v3008 = vrot.slane %v3007, 4
      %v3009 = vrot.slane %v2746, 5
      %v3010 = vsel %vm890, %v3008, %v3009
      %v3011 = vrot.slane %v2972, 5
      %v3012 = vrot.slane %v3011, 4
      %v3013 = vrot.slane %v2748, 5
      %v3014 = vsel %vm890, %v3012, %v3013
      %v3015 = vrot.slane %v2973, 5
      %v3016 = vrot.slane %v3015, 4
      %v3017 = vrot.slane %v2750, 5
      %v3018 = vsel %vm890, %v3016, %v3017
      %v3019 = vrot.slane %v2974, 5
      %v3020 = vrot.slane %v3019, 4
      %v3021 = vrot.slane %v2752, 5
      %v3022 = vsel %vm890, %v3020, %v3021
      %s3023 = scalar_lea.vmem %s3, 28
      %v3024 = vld [vmem:[%s3023] sm:$0x3]
      %v3025 = vunpack.c.l.b16 %v2994
      %v3026 = vunpack.c.l.b16 %v2998
      %v3027 = vunpack.c.l.b16 %v3002
      %v3028 = vunpack.c.l.b16 %v3006
      %v3029 = vunpack.c.l.b16 %v3010
      %v3030 = vunpack.c.l.b16 %v3014
      %v3031 = vunpack.c.l.b16 %v3018
      %v3032 = vunpack.c.l.b16 %v3022
      %v3033 = vpack.c.b16 %v3026, %v3025
      %v3034 = vpack.c.b16 %v3028, %v3027
      %v3035 = vpack.c.b16 %v3030, %v3029
      %v3036 = vpack.c.b16 %v3032, %v3031
      %v3038 = vsel %vm682, %v3033, 0
      %v3041 = vsel %vm682, %v3034, 0
      %v3044 = vsel %vm682, %v3035, 0
      %v3047 = vsel %vm682, %v3036, 0
      %v3050 = vsel %vm695, %v3024, 0
      %3052 = vmatprep.subr.bf16.mxu0 0
      %3053 = vmatpush1.bf16.msra.mxu0 0
      %3054 = vmatprep.subr.bf16.mxu0 0
      %3055 = vmatpush1.bf16.msra.mxu0 0
      %3056 = vmatprep.subr.bf16.mxu0 0
      %3057 = vmatpush1.bf16.msra.mxu0 0
      %3058 = vmatprep.subr.bf16.mxu0 0
      %3059 = vmatpush1.bf16.msra.mxu0 0
      %3060 = vmatprep.subr.bf16.mxu0 0
      %3061 = vmatpush1.bf16.msra.mxu0 0
      %3062 = vmatprep.subr.bf16.mxu0 0
      %3063 = vmatpush1.bf16.msra.mxu0 0
      %3064 = vmatprep.subr.bf16.mxu0 0
      %3065 = vmatpush1.bf16.msra.mxu0 0
      %3066 = vmatprep.subr.bf16.mxu0 0
      %3067 = vmatpush1.bf16.msra.mxu0 %v3050
      %3068 = vmatprep.subr.bf16.mxu0 0
      %3069 = vmatpush2.bf16.msra.mxu0 0
      %3070 = vmatprep.subr.bf16.mxu0 0
      %3071 = vmatpush2.bf16.msra.mxu0 0
      %3072 = vmatprep.subr.bf16.mxu0 0
      %3073 = vmatpush2.bf16.msra.mxu0 0
      %3074 = vmatprep.subr.bf16.mxu0 0
      %3075 = vmatpush2.bf16.msra.mxu0 0
      %3076 = vmatprep.subr.bf16.mxu0 0
      %3077 = vmatpush2.bf16.msra.mxu0 0
      %3078 = vmatprep.subr.bf16.mxu0 0
      %3079 = vmatpush2.bf16.msra.mxu0 0
      %3080 = vmatprep.subr.bf16.mxu0 0
      %3081 = vmatpush2.bf16.msra.mxu0 0
      %3082 = vmatprep.subr.bf16.mxu0 0
      %3083 = vmatpush2.bf16.msra.mxu0 0
      %3084 = vmatprep.mubr.bf16.mxu0 0
      %3085 = vmatmul.mubr.bf16.gmra.mxu0 %v3038
      %v3086 = vpop.f32.mrf.mxu0
      %v3087 = vadd.f32 0.0, %v3086
      %v3088 = vpop.f32.mrf.mxu0
      %v3089 = vpop.f32.mrf.mxu0
      %v3090 = vadd.f32 0.0, %v3089
      %v3091 = vpop.f32.mrf.mxu0
      %3092 = vmatprep.mubr.bf16.mxu0 0
      %3093 = vmatmul.mubr.bf16.gmra.mxu0 %v3041
      %v3094 = vpop.f32.mrf.mxu0
      %v3095 = vadd.f32 0.0, %v3094
      %v3096 = vpop.f32.mrf.mxu0
      %v3097 = vpop.f32.mrf.mxu0
      %v3098 = vadd.f32 0.0, %v3097
      %v3099 = vpop.f32.mrf.mxu0
      %3100 = vmatprep.mubr.bf16.mxu0 0
      %3101 = vmatmul.mubr.bf16.gmra.mxu0 %v3044
      %v3102 = vpop.f32.mrf.mxu0
      %v3103 = vadd.f32 0.0, %v3102
      %v3104 = vpop.f32.mrf.mxu0
      %v3105 = vpop.f32.mrf.mxu0
      %v3106 = vadd.f32 0.0, %v3105
      %v3107 = vpop.f32.mrf.mxu0
      %3108 = vmatprep.mubr.bf16.mxu0 0
      %3109 = vmatmul.mubr.bf16.gmra.mxu0 %v3047
      %v3110 = vpop.f32.mrf.mxu0
      %v3111 = vadd.f32 0.0, %v3110
      %v3112 = vpop.f32.mrf.mxu0
      %v3113 = vpop.f32.mrf.mxu0
      %v3114 = vadd.f32 0.0, %v3113
      %v3115 = vpop.f32.mrf.mxu0
      %3116 = vdwg.mxu0
      %v3117 = vadd.f32 %v2959, %v3087
      %v3118 = vadd.f32 %v2960, %v3090
      %v3119 = vadd.f32 %v2961, %v3095
      %v3120 = vadd.f32 %v2962, %v3098
      %v3121 = vadd.f32 %v2963, %v3103
      %v3122 = vadd.f32 %v2964, %v3106
      %v3123 = vadd.f32 %v2965, %v3111
      %v3124 = vadd.f32 %v2966, %v3114
      %s3125 = scalar_lea.vmem %s524, 16
      %v3126 = vld [vmem:[%s3125] sm:$0xf]
      %v3127 = vld [vmem:[%s3125 + $0x8] sm:$0xf]
      %v3128 = vld [vmem:[%s3125 + $0x10] sm:$0xf]
      %v3129 = vld [vmem:[%s3125 + $0x18] sm:$0xf]
      %v3130 = vld [vmem:[%s3125 + $0x20] sm:$0xf]
      %v3131 = vld [vmem:[%s3125 + $0x28] sm:$0xf]
      %v3132 = vld [vmem:[%s3125 + $0x30] sm:$0xf]
      %v3133 = vld [vmem:[%s3125 + $0x38] sm:$0xf]
      %s3134 = scalar_lea.vmem %s3, 30
      %v3135 = vld [vmem:[%s3134] sm:$0x3]
      %v3144 = vunpack.c.l.b16 %v3126
      %v3145 = vunpack.c.l.b16 %v3127
      %v3146 = vunpack.c.l.b16 %v3128
      %v3147 = vunpack.c.l.b16 %v3129
      %v3148 = vunpack.c.l.b16 %v3130
      %v3149 = vunpack.c.l.b16 %v3131
      %v3150 = vunpack.c.l.b16 %v3132
      %v3151 = vunpack.c.l.b16 %v3133
      %v3152 = vpack.c.b16 %v3145, %v3144
      %v3153 = vpack.c.b16 %v3147, %v3146
      %v3154 = vpack.c.b16 %v3149, %v3148
      %v3155 = vpack.c.b16 %v3151, %v3150
      %v3157 = vsel %vm682, %v3152, 0
      %v3160 = vsel %vm682, %v3153, 0
      %v3163 = vsel %vm682, %v3154, 0
      %v3166 = vsel %vm682, %v3155, 0
      %v3169 = vsel %vm695, %v3135, 0
      %3171 = vmatprep.subr.bf16.mxu0 0
      %3172 = vmatpush1.bf16.msra.mxu0 0
      %3173 = vmatprep.subr.bf16.mxu0 0
      %3174 = vmatpush1.bf16.msra.mxu0 0
      %3175 = vmatprep.subr.bf16.mxu0 0
      %3176 = vmatpush1.bf16.msra.mxu0 0
      %3177 = vmatprep.subr.bf16.mxu0 0
      %3178 = vmatpush1.bf16.msra.mxu0 0
      %3179 = vmatprep.subr.bf16.mxu0 0
      %3180 = vmatpush1.bf16.msra.mxu0 0
      %3181 = vmatprep.subr.bf16.mxu0 0
      %3182 = vmatpush1.bf16.msra.mxu0 0
      %3183 = vmatprep.subr.bf16.mxu0 0
      %3184 = vmatpush1.bf16.msra.mxu0 0
      %3185 = vmatprep.subr.bf16.mxu0 0
      %3186 = vmatpush1.bf16.msra.mxu0 %v3169
      %3187 = vmatprep.subr.bf16.mxu0 0
      %3188 = vmatpush2.bf16.msra.mxu0 0
      %3189 = vmatprep.subr.bf16.mxu0 0
      %3190 = vmatpush2.bf16.msra.mxu0 0
      %3191 = vmatprep.subr.bf16.mxu0 0
      %3192 = vmatpush2.bf16.msra.mxu0 0
      %3193 = vmatprep.subr.bf16.mxu0 0
      %3194 = vmatpush2.bf16.msra.mxu0 0
      %3195 = vmatprep.subr.bf16.mxu0 0
      %3196 = vmatpush2.bf16.msra.mxu0 0
      %3197 = vmatprep.subr.bf16.mxu0 0
      %3198 = vmatpush2.bf16.msra.mxu0 0
      %3199 = vmatprep.subr.bf16.mxu0 0
      %3200 = vmatpush2.bf16.msra.mxu0 0
      %3201 = vmatprep.subr.bf16.mxu0 0
      %3202 = vmatpush2.bf16.msra.mxu0 0
      %3203 = vmatprep.mubr.bf16.mxu0 0
      %3204 = vmatmul.mubr.bf16.gmra.mxu0 %v3157
      %v3205 = vpop.f32.mrf.mxu0
      %v3206 = vadd.f32 0.0, %v3205
      %v3207 = vpop.f32.mrf.mxu0
      %v3208 = vpop.f32.mrf.mxu0
      %v3209 = vadd.f32 0.0, %v3208
      %v3210 = vpop.f32.mrf.mxu0
      %3211 = vmatprep.mubr.bf16.mxu0 0
      %3212 = vmatmul.mubr.bf16.gmra.mxu0 %v3160
      %v3213 = vpop.f32.mrf.mxu0
      %v3214 = vadd.f32 0.0, %v3213
      %v3215 = vpop.f32.mrf.mxu0
      %v3216 = vpop.f32.mrf.mxu0
      %v3217 = vadd.f32 0.0, %v3216
      %v3218 = vpop.f32.mrf.mxu0
      %3219 = vmatprep.mubr.bf16.mxu0 0
      %3220 = vmatmul.mubr.bf16.gmra.mxu0 %v3163
      %v3221 = vpop.f32.mrf.mxu0
      %v3222 = vadd.f32 0.0, %v3221
      %v3223 = vpop.f32.mrf.mxu0
      %v3224 = vpop.f32.mrf.mxu0
      %v3225 = vadd.f32 0.0, %v3224
      %v3226 = vpop.f32.mrf.mxu0
      %3227 = vmatprep.mubr.bf16.mxu0 0
      %3228 = vmatmul.mubr.bf16.gmra.mxu0 %v3166
      %v3229 = vpop.f32.mrf.mxu0
      %v3230 = vadd.f32 0.0, %v3229
      %v3231 = vpop.f32.mrf.mxu0
      %v3232 = vpop.f32.mrf.mxu0
      %v3233 = vadd.f32 0.0, %v3232
      %v3234 = vpop.f32.mrf.mxu0
      %3235 = vdwg.mxu0
      %v3236 = vadd.f32 %v3117, %v3206
      %v3237 = vadd.f32 %v3118, %v3209
      %v3238 = vadd.f32 %v3119, %v3214
      %v3239 = vadd.f32 %v3120, %v3217
      %v3240 = vadd.f32 %v3121, %v3222
      %v3241 = vadd.f32 %v3122, %v3225
      %v3242 = vadd.f32 %v3123, %v3230
      %v3243 = vadd.f32 %v3124, %v3233
      %v3244 = vld [vmem:[%s3125] sm:$0xf]
      %v3245 = vld [vmem:[%s3125 + $0x4] sm:$0x1]
      %v3246 = vld [vmem:[%s3125 + $0x8] sm:$0xf]
      %v3247 = vld [vmem:[%s3125 + $0xc] sm:$0x1]
      %v3248 = vld [vmem:[%s3125 + $0x10] sm:$0xf]
      %v3249 = vld [vmem:[%s3125 + $0x14] sm:$0x1]
      %v3250 = vld [vmem:[%s3125 + $0x18] sm:$0xf]
      %v3251 = vld [vmem:[%s3125 + $0x1c] sm:$0x1]
      %v3252 = vld [vmem:[%s3125 + $0x20] sm:$0xf]
      %v3253 = vld [vmem:[%s3125 + $0x24] sm:$0x1]
      %v3254 = vld [vmem:[%s3125 + $0x28] sm:$0xf]
      %v3255 = vld [vmem:[%s3125 + $0x2c] sm:$0x1]
      %v3256 = vld [vmem:[%s3125 + $0x30] sm:$0xf]
      %v3257 = vld [vmem:[%s3125 + $0x34] sm:$0x1]
      %v3258 = vld [vmem:[%s3125 + $0x38] sm:$0xf]
      %v3259 = vld [vmem:[%s3125 + $0x3c] sm:$0x1]
      %v3261 = vshrl.u32 %v3244, 16
      %v3263 = vrot.slane %v3261, 4
      %v3264 = vshll.u32 %v3244, 16
      %v3266 = vrot.slane %v3264, 5
      %v3267 = vor.u32 %v3263, %v3266
      %v3268 = vrot.slane %v3267, 4
      %v3270 = vshll.u32 %v3245, 16
      %v3272 = vrot.slane %v3270, 5
      %v3273 = vsel %vm555, %v3268, %v3272
      %v3275 = vshrl.u32 %v3246, 16
      %v3277 = vrot.slane %v3275, 4
      %v3278 = vshll.u32 %v3246, 16
      %v3280 = vrot.slane %v3278, 5
      %v3281 = vor.u32 %v3277, %v3280
      %v3282 = vrot.slane %v3281, 4
      %v3284 = vshll.u32 %v3247, 16
      %v3286 = vrot.slane %v3284, 5
      %v3287 = vsel %vm555, %v3282, %v3286
      %v3289 = vshrl.u32 %v3248, 16
      %v3291 = vrot.slane %v3289, 4
      %v3292 = vshll.u32 %v3248, 16
      %v3294 = vrot.slane %v3292, 5
      %v3295 = vor.u32 %v3291, %v3294
      %v3296 = vrot.slane %v3295, 4
      %v3298 = vshll.u32 %v3249, 16
      %v3300 = vrot.slane %v3298, 5
      %v3301 = vsel %vm555, %v3296, %v3300
      %v3303 = vshrl.u32 %v3250, 16
      %v3305 = vrot.slane %v3303, 4
      %v3306 = vshll.u32 %v3250, 16
      %v3308 = vrot.slane %v3306, 5
      %v3309 = vor.u32 %v3305, %v3308
      %v3310 = vrot.slane %v3309, 4
      %v3312 = vshll.u32 %v3251, 16
      %v3314 = vrot.slane %v3312, 5
      %v3315 = vsel %vm555, %v3310, %v3314
      %v3317 = vshrl.u32 %v3252, 16
      %v3319 = vrot.slane %v3317, 4
      %v3320 = vshll.u32 %v3252, 16
      %v3322 = vrot.slane %v3320, 5
      %v3323 = vor.u32 %v3319, %v3322
      %v3324 = vrot.slane %v3323, 4
      %v3326 = vshll.u32 %v3253, 16
      %v3328 = vrot.slane %v3326, 5
      %v3329 = vsel %vm555, %v3324, %v3328
      %v3331 = vshrl.u32 %v3254, 16
      %v3333 = vrot.slane %v3331, 4
      %v3334 = vshll.u32 %v3254, 16
      %v3336 = vrot.slane %v3334, 5
      %v3337 = vor.u32 %v3333, %v3336
      %v3338 = vrot.slane %v3337, 4
      %v3340 = vshll.u32 %v3255, 16
      %v3342 = vrot.slane %v3340, 5
      %v3343 = vsel %vm555, %v3338, %v3342
      %v3345 = vshrl.u32 %v3256, 16
      %v3347 = vrot.slane %v3345, 4
      %v3348 = vshll.u32 %v3256, 16
      %v3350 = vrot.slane %v3348, 5
      %v3351 = vor.u32 %v3347, %v3350
      %v3352 = vrot.slane %v3351, 4
      %v3354 = vshll.u32 %v3257, 16
      %v3356 = vrot.slane %v3354, 5
      %v3357 = vsel %vm555, %v3352, %v3356
      %v3359 = vshrl.u32 %v3258, 16
      %v3361 = vrot.slane %v3359, 4
      %v3362 = vshll.u32 %v3258, 16
      %v3364 = vrot.slane %v3362, 5
      %v3365 = vor.u32 %v3361, %v3364
      %v3366 = vrot.slane %v3365, 4
      %v3368 = vshll.u32 %v3259, 16
      %v3370 = vrot.slane %v3368, 5
      %v3371 = vsel %vm555, %v3366, %v3370
      %s3372 = scalar_lea.vmem %s3, 32
      %v3373 = vld [vmem:[%s3372] sm:$0x3]
      %v3374 = vunpack.c.l.b16 %v3273
      %v3375 = vunpack.c.l.b16 %v3287
      %v3376 = vunpack.c.l.b16 %v3301
      %v3377 = vunpack.c.l.b16 %v3315
      %v3378 = vunpack.c.l.b16 %v3329
      %v3379 = vunpack.c.l.b16 %v3343
      %v3380 = vunpack.c.l.b16 %v3357
      %v3381 = vunpack.c.l.b16 %v3371
      %v3382 = vpack.c.b16 %v3375, %v3374
      %v3383 = vpack.c.b16 %v3377, %v3376
      %v3384 = vpack.c.b16 %v3379, %v3378
      %v3385 = vpack.c.b16 %v3381, %v3380
      %v3387 = vsel %vm682, %v3382, 0
      %v3390 = vsel %vm682, %v3383, 0
      %v3393 = vsel %vm682, %v3384, 0
      %v3396 = vsel %vm682, %v3385, 0
      %v3399 = vsel %vm695, %v3373, 0
      %3401 = vmatprep.subr.bf16.mxu0 0
      %3402 = vmatpush1.bf16.msra.mxu0 0
      %3403 = vmatprep.subr.bf16.mxu0 0
      %3404 = vmatpush1.bf16.msra.mxu0 0
      %3405 = vmatprep.subr.bf16.mxu0 0
      %3406 = vmatpush1.bf16.msra.mxu0 0
      %3407 = vmatprep.subr.bf16.mxu0 0
      %3408 = vmatpush1.bf16.msra.mxu0 0
      %3409 = vmatprep.subr.bf16.mxu0 0
      %3410 = vmatpush1.bf16.msra.mxu0 0
      %3411 = vmatprep.subr.bf16.mxu0 0
      %3412 = vmatpush1.bf16.msra.mxu0 0
      %3413 = vmatprep.subr.bf16.mxu0 0
      %3414 = vmatpush1.bf16.msra.mxu0 0
      %3415 = vmatprep.subr.bf16.mxu0 0
      %3416 = vmatpush1.bf16.msra.mxu0 %v3399
      %3417 = vmatprep.subr.bf16.mxu0 0
      %3418 = vmatpush2.bf16.msra.mxu0 0
      %3419 = vmatprep.subr.bf16.mxu0 0
      %3420 = vmatpush2.bf16.msra.mxu0 0
      %3421 = vmatprep.subr.bf16.mxu0 0
      %3422 = vmatpush2.bf16.msra.mxu0 0
      %3423 = vmatprep.subr.bf16.mxu0 0
      %3424 = vmatpush2.bf16.msra.mxu0 0
      %3425 = vmatprep.subr.bf16.mxu0 0
      %3426 = vmatpush2.bf16.msra.mxu0 0
      %3427 = vmatprep.subr.bf16.mxu0 0
      %3428 = vmatpush2.bf16.msra.mxu0 0
      %3429 = vmatprep.subr.bf16.mxu0 0
      %3430 = vmatpush2.bf16.msra.mxu0 0
      %3431 = vmatprep.subr.bf16.mxu0 0
      %3432 = vmatpush2.bf16.msra.mxu0 0
      %3433 = vmatprep.mubr.bf16.mxu0 0
      %3434 = vmatmul.mubr.bf16.gmra.mxu0 %v3387
      %v3435 = vpop.f32.mrf.mxu0
      %v3436 = vadd.f32 0.0, %v3435
      %v3437 = vpop.f32.mrf.mxu0
      %v3438 = vpop.f32.mrf.mxu0
      %v3439 = vadd.f32 0.0, %v3438
      %v3440 = vpop.f32.mrf.mxu0
      %3441 = vmatprep.mubr.bf16.mxu0 0
      %3442 = vmatmul.mubr.bf16.gmra.mxu0 %v3390
      %v3443 = vpop.f32.mrf.mxu0
      %v3444 = vadd.f32 0.0, %v3443
      %v3445 = vpop.f32.mrf.mxu0
      %v3446 = vpop.f32.mrf.mxu0
      %v3447 = vadd.f32 0.0, %v3446
      %v3448 = vpop.f32.mrf.mxu0
      %3449 = vmatprep.mubr.bf16.mxu0 0
      %3450 = vmatmul.mubr.bf16.gmra.mxu0 %v3393
      %v3451 = vpop.f32.mrf.mxu0
      %v3452 = vadd.f32 0.0, %v3451
      %v3453 = vpop.f32.mrf.mxu0
      %v3454 = vpop.f32.mrf.mxu0
      %v3455 = vadd.f32 0.0, %v3454
      %v3456 = vpop.f32.mrf.mxu0
      %3457 = vmatprep.mubr.bf16.mxu0 0
      %3458 = vmatmul.mubr.bf16.gmra.mxu0 %v3396
      %v3459 = vpop.f32.mrf.mxu0
      %v3460 = vadd.f32 0.0, %v3459
      %v3461 = vpop.f32.mrf.mxu0
      %v3462 = vpop.f32.mrf.mxu0
      %v3463 = vadd.f32 0.0, %v3462
      %v3464 = vpop.f32.mrf.mxu0
      %3465 = vdwg.mxu0
      %v3466 = vadd.f32 %v3236, %v3436
      %v3467 = vadd.f32 %v3237, %v3439
      %v3468 = vadd.f32 %v3238, %v3444
      %v3469 = vadd.f32 %v3239, %v3447
      %v3470 = vadd.f32 %v3240, %v3452
      %v3471 = vadd.f32 %v3241, %v3455
      %v3472 = vadd.f32 %v3242, %v3460
      %v3473 = vadd.f32 %v3243, %v3463
      %v3474 = vld [vmem:[%s3125] sm:$0xe]
      %v3475 = vld [vmem:[%s3125 + $0x8] sm:$0xe]
      %v3476 = vld [vmem:[%s3125 + $0x10] sm:$0xe]
      %v3477 = vld [vmem:[%s3125 + $0x18] sm:$0xe]
      %v3478 = vld [vmem:[%s3125 + $0x20] sm:$0xe]
      %v3479 = vld [vmem:[%s3125 + $0x28] sm:$0xe]
      %v3480 = vld [vmem:[%s3125 + $0x30] sm:$0xe]
      %v3481 = vld [vmem:[%s3125 + $0x38] sm:$0xe]
      %v3498 = vrot.slane %v3474, 5
      %v3499 = vrot.slane %v3498, 4
      %v3500 = vrot.slane %v3245, 5
      %v3501 = vsel %vm890, %v3499, %v3500
      %v3502 = vrot.slane %v3475, 5
      %v3503 = vrot.slane %v3502, 4
      %v3504 = vrot.slane %v3247, 5
      %v3505 = vsel %vm890, %v3503, %v3504
      %v3506 = vrot.slane %v3476, 5
      %v3507 = vrot.slane %v3506, 4
      %v3508 = vrot.slane %v3249, 5
      %v3509 = vsel %vm890, %v3507, %v3508
      %v3510 = vrot.slane %v3477, 5
      %v3511 = vrot.slane %v3510, 4
      %v3512 = vrot.slane %v3251, 5
      %v3513 = vsel %vm890, %v3511, %v3512
      %v3514 = vrot.slane %v3478, 5
      %v3515 = vrot.slane %v3514, 4
      %v3516 = vrot.slane %v3253, 5
      %v3517 = vsel %vm890, %v3515, %v3516
      %v3518 = vrot.slane %v3479, 5
      %v3519 = vrot.slane %v3518, 4
      %v3520 = vrot.slane %v3255, 5
      %v3521 = vsel %vm890, %v3519, %v3520
      %v3522 = vrot.slane %v3480, 5
      %v3523 = vrot.slane %v3522, 4
      %v3524 = vrot.slane %v3257, 5
      %v3525 = vsel %vm890, %v3523, %v3524
      %v3526 = vrot.slane %v3481, 5
      %v3527 = vrot.slane %v3526, 4
      %v3528 = vrot.slane %v3259, 5
      %v3529 = vsel %vm890, %v3527, %v3528
      %s3530 = scalar_lea.vmem %s3, 34
      %v3531 = vld [vmem:[%s3530] sm:$0x3]
      %v3532 = vunpack.c.l.b16 %v3501
      %v3533 = vunpack.c.l.b16 %v3505
      %v3534 = vunpack.c.l.b16 %v3509
      %v3535 = vunpack.c.l.b16 %v3513
      %v3536 = vunpack.c.l.b16 %v3517
      %v3537 = vunpack.c.l.b16 %v3521
      %v3538 = vunpack.c.l.b16 %v3525
      %v3539 = vunpack.c.l.b16 %v3529
      %v3540 = vpack.c.b16 %v3533, %v3532
      %v3541 = vpack.c.b16 %v3535, %v3534
      %v3542 = vpack.c.b16 %v3537, %v3536
      %v3543 = vpack.c.b16 %v3539, %v3538
      %v3545 = vsel %vm682, %v3540, 0
      %v3548 = vsel %vm682, %v3541, 0
      %v3551 = vsel %vm682, %v3542, 0
      %v3554 = vsel %vm682, %v3543, 0
      %v3557 = vsel %vm695, %v3531, 0
      %3559 = vmatprep.subr.bf16.mxu0 0
      %3560 = vmatpush1.bf16.msra.mxu0 0
      %3561 = vmatprep.subr.bf16.mxu0 0
      %3562 = vmatpush1.bf16.msra.mxu0 0
      %3563 = vmatprep.subr.bf16.mxu0 0
      %3564 = vmatpush1.bf16.msra.mxu0 0
      %3565 = vmatprep.subr.bf16.mxu0 0
      %3566 = vmatpush1.bf16.msra.mxu0 0
      %3567 = vmatprep.subr.bf16.mxu0 0
      %3568 = vmatpush1.bf16.msra.mxu0 0
      %3569 = vmatprep.subr.bf16.mxu0 0
      %3570 = vmatpush1.bf16.msra.mxu0 0
      %3571 = vmatprep.subr.bf16.mxu0 0
      %3572 = vmatpush1.bf16.msra.mxu0 0
      %3573 = vmatprep.subr.bf16.mxu0 0
      %3574 = vmatpush1.bf16.msra.mxu0 %v3557
      %3575 = vmatprep.subr.bf16.mxu0 0
      %3576 = vmatpush2.bf16.msra.mxu0 0
      %3577 = vmatprep.subr.bf16.mxu0 0
      %3578 = vmatpush2.bf16.msra.mxu0 0
      %3579 = vmatprep.subr.bf16.mxu0 0
      %3580 = vmatpush2.bf16.msra.mxu0 0
      %3581 = vmatprep.subr.bf16.mxu0 0
      %3582 = vmatpush2.bf16.msra.mxu0 0
      %3583 = vmatprep.subr.bf16.mxu0 0
      %3584 = vmatpush2.bf16.msra.mxu0 0
      %3585 = vmatprep.subr.bf16.mxu0 0
      %3586 = vmatpush2.bf16.msra.mxu0 0
      %3587 = vmatprep.subr.bf16.mxu0 0
      %3588 = vmatpush2.bf16.msra.mxu0 0
      %3589 = vmatprep.subr.bf16.mxu0 0
      %3590 = vmatpush2.bf16.msra.mxu0 0
      %3591 = vmatprep.mubr.bf16.mxu0 0
      %3592 = vmatmul.mubr.bf16.gmra.mxu0 %v3545
      %v3593 = vpop.f32.mrf.mxu0
      %v3594 = vadd.f32 0.0, %v3593
      %v3595 = vpop.f32.mrf.mxu0
      %v3596 = vpop.f32.mrf.mxu0
      %v3597 = vadd.f32 0.0, %v3596
      %v3598 = vpop.f32.mrf.mxu0
      %3599 = vmatprep.mubr.bf16.mxu0 0
      %3600 = vmatmul.mubr.bf16.gmra.mxu0 %v3548
      %v3601 = vpop.f32.mrf.mxu0
      %v3602 = vadd.f32 0.0, %v3601
      %v3603 = vpop.f32.mrf.mxu0
      %v3604 = vpop.f32.mrf.mxu0
      %v3605 = vadd.f32 0.0, %v3604
      %v3606 = vpop.f32.mrf.mxu0
      %3607 = vmatprep.mubr.bf16.mxu0 0
      %3608 = vmatmul.mubr.bf16.gmra.mxu0 %v3551
      %v3609 = vpop.f32.mrf.mxu0
      %v3610 = vadd.f32 0.0, %v3609
      %v3611 = vpop.f32.mrf.mxu0
      %v3612 = vpop.f32.mrf.mxu0
      %v3613 = vadd.f32 0.0, %v3612
      %v3614 = vpop.f32.mrf.mxu0
      %3615 = vmatprep.mubr.bf16.mxu0 0
      %3616 = vmatmul.mubr.bf16.gmra.mxu0 %v3554
      %v3617 = vpop.f32.mrf.mxu0
      %v3618 = vadd.f32 0.0, %v3617
      %v3619 = vpop.f32.mrf.mxu0
      %v3620 = vpop.f32.mrf.mxu0
      %v3621 = vadd.f32 0.0, %v3620
      %v3622 = vpop.f32.mrf.mxu0
      %3623 = vdwg.mxu0
      %v3624 = vadd.f32 %v3466, %v3594
      %v3625 = vadd.f32 %v3467, %v3597
      %v3626 = vadd.f32 %v3468, %v3602
      %v3627 = vadd.f32 %v3469, %v3605
      %v3628 = vadd.f32 %v3470, %v3610
      %v3629 = vadd.f32 %v3471, %v3613
      %v3630 = vadd.f32 %v3472, %v3618
      %v3631 = vadd.f32 %v3473, %v3621
      %v3632 = vld [vmem:[%s4 + $0x1] sm:$0x1]
      %v3633 = vlaneseq
      %v3634 = vshrl.u32 %v3633, 7
      %v3635 = vsub.s32 0, %v3634
      %v3636 = vrot.slane %v3632, %v3635
      %v3637 = vmul.f32 %v3624, %v3636
      %v3638 = vmul.f32 %v3625, %v3636
      %v3639 = vmul.f32 %v3626, %v3636
      %v3640 = vmul.f32 %v3627, %v3636
      %v3641 = vmul.f32 %v3628, %v3636
      %v3642 = vmul.f32 %v3629, %v3636
      %v3643 = vmul.f32 %v3630, %v3636
      %v3644 = vmul.f32 %v3631, %v3636
      %v3645 = vld [vmem:[%s5 + $0x1] sm:$0x1]
      %v3646 = vlaneseq
      %v3647 = vshrl.u32 %v3646, 7
      %v3648 = vsub.s32 0, %v3647
      %v3649 = vrot.slane %v3645, %v3648
      %v3650 = vadd.f32 %v3637, %v3649
      %v3651 = vadd.f32 %v3638, %v3649
      %v3652 = vadd.f32 %v3639, %v3649
      %v3653 = vadd.f32 %v3640, %v3649
      %v3654 = vadd.f32 %v3641, %v3649
      %v3655 = vadd.f32 %v3642, %v3649
      %v3656 = vadd.f32 %v3643, %v3649
      %v3657 = vadd.f32 %v3644, %v3649
      %v3658 = vmax.f32 %v3650, 0.0
      %v3659 = vmax.f32 %v3651, 0.0
      %v3660 = vmax.f32 %v3652, 0.0
      %v3661 = vmax.f32 %v3653, 0.0
      %v3662 = vmax.f32 %v3654, 0.0
      %v3663 = vmax.f32 %v3655, 0.0
      %v3664 = vmax.f32 %v3656, 0.0
      %v3665 = vmax.f32 %v3657, 0.0
      %v3666 = vpack.c.bf16 %v3659, %v3658
      %v3667 = vpack.c.bf16 %v3661, %v3660
      %v3668 = vpack.c.bf16 %v3663, %v3662
      %v3669 = vpack.c.bf16 %v3665, %v3664
      %v3674 = vunpack.c.l.b16 %v3666
      %v3675 = vunpack.c.h.b16 %v3666
      %v3676 = vunpack.c.l.b16 %v3667
      %v3677 = vunpack.c.h.b16 %v3667
      %v3678 = vunpack.c.l.b16 %v3668
      %v3679 = vunpack.c.h.b16 %v3668
      %v3680 = vunpack.c.l.b16 %v3669
      %v3681 = vunpack.c.h.b16 %v3669
      %v3682 = vpack.c.b16 %v3674, %v3674
      %v3683 = vpack.c.b16 %v3675, %v3675
      %v3684 = vpack.c.b16 %v3676, %v3676
      %v3685 = vpack.c.b16 %v3677, %v3677
      %v3686 = vpack.c.b16 %v3678, %v3678
      %v3687 = vpack.c.b16 %v3679, %v3679
      %v3688 = vpack.c.b16 %v3680, %v3680
      %v3689 = vpack.c.b16 %v3681, %v3681
      %3698 = vst.msk [vmem:[#allocation3] sm:$0xf] %vm2105, %v3682
      %3699 = vst.msk [vmem:[#allocation3 + $0x4] sm:$0xf] %vm2105, %v3683
      %3700 = vst.msk [vmem:[#allocation3 + $0x8] sm:$0xf] %vm2105, %v3684
      %3701 = vst.msk [vmem:[#allocation3 + $0xc] sm:$0xf] %vm2105, %v3685
      %3702 = vst.msk [vmem:[#allocation3 + $0x10] sm:$0xf] %vm2105, %v3686
      %3703 = vst.msk [vmem:[#allocation3 + $0x14] sm:$0xf] %vm2105, %v3687
      %3704 = vst.msk [vmem:[#allocation3 + $0x18] sm:$0xf] %vm2105, %v3688
      %3705 = vst.msk [vmem:[#allocation3 + $0x1c] sm:$0xf] %vm2105, %v3689
      %v3706 = vsel %vm2114, %v3658, 0.0
      %v3707 = vsel %vm2114, %v3659, 0.0
      %v3708 = vadd.f32 %v3706, %v3707
      %v3709 = vsel %vm2114, %v3660, 0.0
      %v3710 = vadd.f32 %v3708, %v3709
      %v3711 = vsel %vm2114, %v3661, 0.0
      %v3712 = vadd.f32 %v3710, %v3711
      %v3713 = vsel %vm2114, %v3662, 0.0
      %v3714 = vadd.f32 %v3712, %v3713
      %v3715 = vsel %vm2114, %v3663, 0.0
      %v3716 = vadd.f32 %v3714, %v3715
      %v3717 = vsel %vm2114, %v3664, 0.0
      %v3718 = vadd.f32 %v3716, %v3717
      %v3719 = vsel %vm2114, %v3665, 0.0
      %v3720 = vadd.f32 %v3718, %v3719
      %v3721 = vrot.slane %v3720, 4
      %v3722 = vadd.f32 %v3720, %v3721
      %v3723 = vrot.slane %v3722, 2
      %v3724 = vadd.f32 %v3722, %v3723
      %v3725 = vrot.slane %v3724, 1
      %v3726 = vadd.f32 %v3724, %v3725
      %v3727 = vadd.f32 %v2135, %v3726
      %v3728 = vmul.f32 %v3727, 0.015625
      %v3729 = vpack.c.bf16 %v3728, %v3728
      %v3730 = vld [vmem:[%s6] sm:$0xf]
      %v3731 = vld [vmem:[%s7] sm:$0x1]
      %v3733 = vsel %vm2114, %v3729, 0
      %vm3735 = vcmask 1043456
      %v3737 = vsel %vm3735, %v3730, 0
      %3739 = vmatprep.subr.bf16.mxu0 0
      %3740 = vmatpush1.bf16.msra.mxu0 0
      %3741 = vmatprep.subr.bf16.mxu0 0
      %3742 = vmatpush1.bf16.msra.mxu0 0
      %3743 = vmatprep.subr.bf16.mxu0 0
      %3744 = vmatpush1.bf16.msra.mxu0 0
      %3745 = vmatprep.subr.bf16.mxu0 0
      %3746 = vmatpush1.bf16.msra.mxu0 0
      %3747 = vmatprep.subr.bf16.mxu0 0
      %3748 = vmatpush1.bf16.msra.mxu0 0
      %3749 = vmatprep.subr.bf16.mxu0 0
      %3750 = vmatpush1.bf16.msra.mxu0 0
      %3751 = vmatprep.subr.bf16.mxu0 0
      %3752 = vmatpush1.bf16.msra.mxu0 0
      %3753 = vmatprep.subr.bf16.mxu0 0
      %3754 = vmatpush1.bf16.msra.mxu0 %v3737
      %3755 = vmatprep.subr.bf16.mxu0 0
      %3756 = vmatpush2.bf16.msra.mxu0 0
      %3757 = vmatprep.subr.bf16.mxu0 0
      %3758 = vmatpush2.bf16.msra.mxu0 0
      %3759 = vmatprep.subr.bf16.mxu0 0
      %3760 = vmatpush2.bf16.msra.mxu0 0
      %3761 = vmatprep.subr.bf16.mxu0 0
      %3762 = vmatpush2.bf16.msra.mxu0 0
      %3763 = vmatprep.subr.bf16.mxu0 0
      %3764 = vmatpush2.bf16.msra.mxu0 0
      %3765 = vmatprep.subr.bf16.mxu0 0
      %3766 = vmatpush2.bf16.msra.mxu0 0
      %3767 = vmatprep.subr.bf16.mxu0 0
      %3768 = vmatpush2.bf16.msra.mxu0 0
      %3769 = vmatprep.subr.bf16.mxu0 0
      %3770 = vmatpush2.bf16.msra.mxu0 0
      %3771 = vmatprep.mubr.bf16.mxu0 0
      %3772 = vmatmul.mubr.bf16.gmra.mxu0 %v3733
      %v3773 = vpop.f32.mrf.mxu0
      %v3774 = vadd.f32 %v3731, %v3773
      %v3775 = vpop.f32.mrf.mxu0
      %v3776 = vpop.f32.mrf.mxu0
      %v3777 = vpop.f32.mrf.mxu0
      %3778 = vdwg.mxu0
      %v3779 = vld [vmem:[%s8] sm:$0x1]
      %v3780 = vmul.f32 %v3774, %v3779
      %v3781 = vld [vmem:[%s9] sm:$0x1]
      %v3782 = vadd.f32 %v3780, %v3781
      %v3783 = vmax.f32 %v3782, 0.0
      %v3784 = vpack.c.bf16 %v3783, %v3783
      %v3785 = vld [vmem:[%s10] sm:$0xf]
      %v3786 = vld [vmem:[%s10 + $0x4] sm:$0xf]
      %v3787 = vld [vmem:[%s10 + $0x8] sm:$0xf]
      %v3788 = vld [vmem:[%s10 + $0xc] sm:$0xf]
      %v3789 = vld [vmem:[%s11] sm:$0x1]
      %v3794 = vunpack.c.l.b16 %v3785
      %v3795 = vunpack.c.l.b16 %v3786
      %v3796 = vunpack.c.l.b16 %v3787
      %v3797 = vunpack.c.l.b16 %v3788
      %v3798 = vpack.c.b16 %v3795, %v3794
      %v3799 = vpack.c.b16 %v3797, %v3796
      %vm3802 = vcmask 261120
      %v3804 = vsel %vm3802, %v3784, 0
      %3806 = vmatprep.subr.bf16.mxu0 0
      %3807 = vmatpush1.bf16.msra.mxu0 0
      %3808 = vmatprep.subr.bf16.mxu0 0
      %3809 = vmatpush1.bf16.msra.mxu0 0
      %3810 = vmatprep.subr.bf16.mxu0 0
      %3811 = vmatpush1.bf16.msra.mxu0 0
      %3812 = vmatprep.subr.bf16.mxu0 0
      %3813 = vmatpush1.bf16.msra.mxu0 0
      %3814 = vmatprep.subr.bf16.mxu0 0
      %3815 = vmatpush1.bf16.msra.mxu0 0
      %3816 = vmatprep.subr.bf16.mxu0 0
      %3817 = vmatpush1.bf16.msra.mxu0 0
      %3818 = vmatprep.subr.bf16.mxu0 0
      %3819 = vmatpush1.bf16.msra.mxu0 %v3799
      %3820 = vmatprep.subr.bf16.mxu0 0
      %3821 = vmatpush1.bf16.msra.mxu0 %v3798
      %3822 = vmatprep.subr.bf16.mxu0 0
      %3823 = vmatpush2.bf16.msra.mxu0 0
      %3824 = vmatprep.subr.bf16.mxu0 0
      %3825 = vmatpush2.bf16.msra.mxu0 0
      %3826 = vmatprep.subr.bf16.mxu0 0
      %3827 = vmatpush2.bf16.msra.mxu0 0
      %3828 = vmatprep.subr.bf16.mxu0 0
      %3829 = vmatpush2.bf16.msra.mxu0 0
      %3830 = vmatprep.subr.bf16.mxu0 0
      %3831 = vmatpush2.bf16.msra.mxu0 0
      %3832 = vmatprep.subr.bf16.mxu0 0
      %3833 = vmatpush2.bf16.msra.mxu0 0
      %3834 = vmatprep.subr.bf16.mxu0 0
      %3835 = vmatpush2.bf16.msra.mxu0 0
      %3836 = vmatprep.subr.bf16.mxu0 0
      %3837 = vmatpush2.bf16.msra.mxu0 0
      %3838 = vmatprep.mubr.bf16.mxu0 0
      %3839 = vmatmul.mubr.bf16.gmra.mxu0 %v3804
      %v3840 = vpop.f32.mrf.mxu0
      %v3841 = vadd.f32 %v3789, %v3840
      %v3842 = vpop.f32.mrf.mxu0
      %v3843 = vpop.f32.mrf.mxu0
      %v3844 = vpop.f32.mrf.mxu0
      %3845 = vdwg.mxu0
      %s3846 = scalar_lea.vmem %s10, 16
      %v3847 = vld [vmem:[%s3846] sm:$0xf]
      %v3848 = vld [vmem:[%s3846 + $0x4] sm:$0xf]
      %v3849 = vld [vmem:[%s3846 + $0x8] sm:$0xf]
      %v3850 = vld [vmem:[%s3846 + $0xc] sm:$0xf]
      %v3851 = vld [vmem:[%s11 + $0x1] sm:$0x1]
      %v3856 = vunpack.c.l.b16 %v3847
      %v3857 = vunpack.c.l.b16 %v3848
      %v3858 = vunpack.c.l.b16 %v3849
      %v3859 = vunpack.c.l.b16 %v3850
      %v3860 = vpack.c.b16 %v3857, %v3856
      %v3861 = vpack.c.b16 %v3859, %v3858
      %3864 = vmatprep.subr.bf16.mxu0 0
      %3865 = vmatpush1.bf16.msra.mxu0 0
      %3866 = vmatprep.subr.bf16.mxu0 0
      %3867 = vmatpush1.bf16.msra.mxu0 0
      %3868 = vmatprep.subr.bf16.mxu0 0
      %3869 = vmatpush1.bf16.msra.mxu0 0
      %3870 = vmatprep.subr.bf16.mxu0 0
      %3871 = vmatpush1.bf16.msra.mxu0 0
      %3872 = vmatprep.subr.bf16.mxu0 0
      %3873 = vmatpush1.bf16.msra.mxu0 0
      %3874 = vmatprep.subr.bf16.mxu0 0
      %3875 = vmatpush1.bf16.msra.mxu0 0
      %3876 = vmatprep.subr.bf16.mxu0 0
      %3877 = vmatpush1.bf16.msra.mxu0 %v3861
      %3878 = vmatprep.subr.bf16.mxu0 0
      %3879 = vmatpush1.bf16.msra.mxu0 %v3860
      %3880 = vmatprep.subr.bf16.mxu0 0
      %3881 = vmatpush2.bf16.msra.mxu0 0
      %3882 = vmatprep.subr.bf16.mxu0 0
      %3883 = vmatpush2.bf16.msra.mxu0 0
      %3884 = vmatprep.subr.bf16.mxu0 0
      %3885 = vmatpush2.bf16.msra.mxu0 0
      %3886 = vmatprep.subr.bf16.mxu0 0
      %3887 = vmatpush2.bf16.msra.mxu0 0
      %3888 = vmatprep.subr.bf16.mxu0 0
      %3889 = vmatpush2.bf16.msra.mxu0 0
      %3890 = vmatprep.subr.bf16.mxu0 0
      %3891 = vmatpush2.bf16.msra.mxu0 0
      %3892 = vmatprep.subr.bf16.mxu0 0
      %3893 = vmatpush2.bf16.msra.mxu0 0
      %3894 = vmatprep.subr.bf16.mxu0 0
      %3895 = vmatpush2.bf16.msra.mxu0 0
      %3896 = vmatprep.mubr.bf16.mxu0 0
      %3897 = vmatmul.mubr.bf16.gmra.mxu0 %v3804
      %v3898 = vpop.f32.mrf.mxu0
      %v3899 = vadd.f32 %v3851, %v3898
      %v3900 = vpop.f32.mrf.mxu0
      %v3901 = vpop.f32.mrf.mxu0
      %v3902 = vpop.f32.mrf.mxu0
      %3903 = vdwg.mxu0
      %v3904 = vmax.f32 %v3841, %v3899
      %v3905 = vsub.f32 %v3841, %v3904
      %v3906 = vmul.f32 %v3905, 1.442695
      %v3907 = vpow.pop %v3906
      %v3908 = vsub.f32 %v3899, %v3904
      %v3909 = vmul.f32 %v3908, 1.442695
      %v3910 = vpow.pop %v3909
      %v3911 = vadd.f32 %v3907, %v3910
      %v3912 = vrcp.pop %v3911
      %v3913 = vmul.f32 %v3907, %v3912
      %v3914 = vmul.f32 %v3910, %v3912
      %v3915 = vld [vmem:[#allocation2] sm:$0xf]
      %v3916 = vld [vmem:[#allocation2 + $0x4] sm:$0xf]
      %v3917 = vld [vmem:[#allocation2 + $0x8] sm:$0xf]
      %v3918 = vld [vmem:[#allocation2 + $0xc] sm:$0xf]
      %v3919 = vld [vmem:[#allocation2 + $0x10] sm:$0xf]
      %v3920 = vld [vmem:[#allocation2 + $0x14] sm:$0xf]
      %v3921 = vld [vmem:[#allocation2 + $0x18] sm:$0xf]
      %v3922 = vld [vmem:[#allocation2 + $0x1c] sm:$0xf]
      %v3923 = vunpack.c.l.bf16 %v3915
      %v3924 = vunpack.c.l.bf16 %v3916
      %v3925 = vunpack.c.l.bf16 %v3917
      %v3926 = vunpack.c.l.bf16 %v3918
      %v3927 = vunpack.c.l.bf16 %v3919
      %v3928 = vunpack.c.l.bf16 %v3920
      %v3929 = vunpack.c.l.bf16 %v3921
      %v3930 = vunpack.c.l.bf16 %v3922
      %v3931 = vlaneseq
      %v3932 = vshrl.u32 %v3931, 7
      %v3933 = vsub.s32 0, %v3932
      %v3934 = vrot.slane %v3913, %v3933
      %v3935 = vmul.f32 %v3923, %v3934
      %v3936 = vmul.f32 %v3924, %v3934
      %v3937 = vmul.f32 %v3925, %v3934
      %v3938 = vmul.f32 %v3926, %v3934
      %v3939 = vmul.f32 %v3927, %v3934
      %v3940 = vmul.f32 %v3928, %v3934
      %v3941 = vmul.f32 %v3929, %v3934
      %v3942 = vmul.f32 %v3930, %v3934
      %v3943 = vld [vmem:[#allocation3] sm:$0xf]
      %v3944 = vld [vmem:[#allocation3 + $0x4] sm:$0xf]
      %v3945 = vld [vmem:[#allocation3 + $0x8] sm:$0xf]
      %v3946 = vld [vmem:[#allocation3 + $0xc] sm:$0xf]
      %v3947 = vld [vmem:[#allocation3 + $0x10] sm:$0xf]
      %v3948 = vld [vmem:[#allocation3 + $0x14] sm:$0xf]
      %v3949 = vld [vmem:[#allocation3 + $0x18] sm:$0xf]
      %v3950 = vld [vmem:[#allocation3 + $0x1c] sm:$0xf]
      %v3951 = vunpack.c.l.bf16 %v3943
      %v3952 = vunpack.c.l.bf16 %v3944
      %v3953 = vunpack.c.l.bf16 %v3945
      %v3954 = vunpack.c.l.bf16 %v3946
      %v3955 = vunpack.c.l.bf16 %v3947
      %v3956 = vunpack.c.l.bf16 %v3948
      %v3957 = vunpack.c.l.bf16 %v3949
      %v3958 = vunpack.c.l.bf16 %v3950
      %v3959 = vlaneseq
      %v3960 = vshrl.u32 %v3959, 7
      %v3961 = vsub.s32 0, %v3960
      %v3962 = vrot.slane %v3914, %v3961
      %v3963 = vmul.f32 %v3951, %v3962
      %v3964 = vmul.f32 %v3952, %v3962
      %v3965 = vmul.f32 %v3953, %v3962
      %v3966 = vmul.f32 %v3954, %v3962
      %v3967 = vmul.f32 %v3955, %v3962
      %v3968 = vmul.f32 %v3956, %v3962
      %v3969 = vmul.f32 %v3957, %v3962
      %v3970 = vmul.f32 %v3958, %v3962
      %v3971 = vadd.f32 %v3935, %v3963
      %v3972 = vadd.f32 %v3936, %v3964
      %v3973 = vadd.f32 %v3937, %v3965
      %v3974 = vadd.f32 %v3938, %v3966
      %v3975 = vadd.f32 %v3939, %v3967
      %v3976 = vadd.f32 %v3940, %v3968
      %v3977 = vadd.f32 %v3941, %v3969
      %v3978 = vadd.f32 %v3942, %v3970
      %3979 = vst.msk [vmem:[#allocation4] sm:$0xf] %vm2105, 0
      %vm3980 = vcmask 57344
      %3981 = vst.msk [vmem:[#allocation4 + $0x4] sm:$0x1] %vm3980, 0
      %s3982 = scalar_lea.vmem [#allocation4], 72
      %3983 = vst.msk [vmem:[%s3982] sm:$0xf] %vm2105, 0
      %3984 = vst.msk [vmem:[%s3982 + $0x4] sm:$0x1] %vm3980, 0
      %vm3985 = vcmask 57344
      %vm3986 = vsmask.f32 256
      %vm3987 = vmand %vm3985, %vm3986
      %v3988 = vld [vmem:[#allocation4] sm:$0x1]
      %v3989 = vsel %vm3987, 0, %v3988
      %3990 = vst [vmem:[#allocation4] sm:$0x1] %v3989
      %v3991 = vld [vmem:[#allocation4 + $0x8] sm:$0x1]
      %v3992 = vsel %vm3987, 0, %v3991
      %3993 = vst [vmem:[#allocation4 + $0x8] sm:$0x1] %v3992
      %v3994 = vld [vmem:[#allocation4 + $0x10] sm:$0x1]
      %v3995 = vsel %vm3987, 0, %v3994
      %3996 = vst [vmem:[#allocation4 + $0x10] sm:$0x1] %v3995
      %v3997 = vld [vmem:[#allocation4 + $0x18] sm:$0x1]
      %v3998 = vsel %vm3987, 0, %v3997
      %3999 = vst [vmem:[#allocation4 + $0x18] sm:$0x1] %v3998
      %v4000 = vld [vmem:[#allocation4 + $0x20] sm:$0x1]
      %v4001 = vsel %vm3987, 0, %v4000
      %4002 = vst [vmem:[#allocation4 + $0x20] sm:$0x1] %v4001
      %v4003 = vld [vmem:[#allocation4 + $0x28] sm:$0x1]
      %v4004 = vsel %vm3987, 0, %v4003
      %4005 = vst [vmem:[#allocation4 + $0x28] sm:$0x1] %v4004
      %v4006 = vld [vmem:[#allocation4 + $0x30] sm:$0x1]
      %v4007 = vsel %vm3987, 0, %v4006
      %4008 = vst [vmem:[#allocation4 + $0x30] sm:$0x1] %v4007
      %v4009 = vld [vmem:[#allocation4 + $0x38] sm:$0x1]
      %v4010 = vsel %vm3987, 0, %v4009
      %4011 = vst [vmem:[#allocation4 + $0x38] sm:$0x1] %v4010
      %v4012 = vld [vmem:[#allocation4 + $0x40] sm:$0x1]
      %v4013 = vsel %vm3987, 0, %v4012
      %4014 = vst [vmem:[#allocation4 + $0x40] sm:$0x1] %v4013
      %v4015 = vld [vmem:[#allocation4 + $0x48] sm:$0x1]
      %v4016 = vsel %vm3987, 0, %v4015
      %4017 = vst [vmem:[#allocation4 + $0x48] sm:$0x1] %v4016
      %vm4018 = vsmask.f32 7938
      %vm4019 = vmand %vm3985, %vm4018
      %v4020 = vld [vmem:[#allocation4 + $0x4] sm:$0x1]
      %v4021 = vsel %vm4019, 0, %v4020
      %4022 = vst [vmem:[#allocation4 + $0x4] sm:$0x1] %v4021
      %v4023 = vld [vmem:[#allocation4 + $0xc] sm:$0x1]
      %v4024 = vsel %vm4019, 0, %v4023
      %4025 = vst [vmem:[#allocation4 + $0xc] sm:$0x1] %v4024
      %v4026 = vld [vmem:[#allocation4 + $0x14] sm:$0x1]
      %v4027 = vsel %vm4019, 0, %v4026
      %4028 = vst [vmem:[#allocation4 + $0x14] sm:$0x1] %v4027
      %v4029 = vld [vmem:[#allocation4 + $0x1c] sm:$0x1]
      %v4030 = vsel %vm4019, 0, %v4029
      %4031 = vst [vmem:[#allocation4 + $0x1c] sm:$0x1] %v4030
      %v4032 = vld [vmem:[#allocation4 + $0x24] sm:$0x1]
      %v4033 = vsel %vm4019, 0, %v4032
      %4034 = vst [vmem:[#allocation4 + $0x24] sm:$0x1] %v4033
      %v4035 = vld [vmem:[#allocation4 + $0x2c] sm:$0x1]
      %v4036 = vsel %vm4019, 0, %v4035
      %4037 = vst [vmem:[#allocation4 + $0x2c] sm:$0x1] %v4036
      %v4038 = vld [vmem:[#allocation4 + $0x34] sm:$0x1]
      %v4039 = vsel %vm4019, 0, %v4038
      %4040 = vst [vmem:[#allocation4 + $0x34] sm:$0x1] %v4039
      %v4041 = vld [vmem:[#allocation4 + $0x3c] sm:$0x1]
      %v4042 = vsel %vm4019, 0, %v4041
      %4043 = vst [vmem:[#allocation4 + $0x3c] sm:$0x1] %v4042
      %v4044 = vld [vmem:[#allocation4 + $0x44] sm:$0x1]
      %v4045 = vsel %vm4019, 0, %v4044
      %4046 = vst [vmem:[#allocation4 + $0x44] sm:$0x1] %v4045
      %v4047 = vld [vmem:[#allocation4 + $0x4c] sm:$0x1]
      %v4048 = vsel %vm4019, 0, %v4047
      %4049 = vst [vmem:[#allocation4 + $0x4c] sm:$0x1] %v4048
      %v4050 = vpack.c.bf16 %v3971, %v3971
      %v4051 = vpack.c.bf16 %v3972, %v3972
      %v4052 = vpack.c.bf16 %v3973, %v3973
      %v4053 = vpack.c.bf16 %v3974, %v3974
      %v4054 = vpack.c.bf16 %v3975, %v3975
      %v4055 = vpack.c.bf16 %v3976, %v3976
      %v4056 = vpack.c.bf16 %v3977, %v3977
      %v4057 = vpack.c.bf16 %v3978, %v3978
      %v4066 = vunpack.c.l.b16 %v4050
      %v4067 = vunpack.c.l.b16 %v4051
      %v4068 = vunpack.c.l.b16 %v4052
      %v4069 = vunpack.c.l.b16 %v4053
      %v4070 = vunpack.c.l.b16 %v4054
      %v4071 = vunpack.c.l.b16 %v4055
      %v4072 = vunpack.c.l.b16 %v4056
      %v4073 = vunpack.c.l.b16 %v4057
      %v4074 = vpack.c.b16 %v4066, %v4066
      %v4075 = vpack.c.b16 %v4067, %v4067
      %v4076 = vpack.c.b16 %v4068, %v4068
      %v4077 = vpack.c.b16 %v4069, %v4069
      %v4078 = vpack.c.b16 %v4070, %v4070
      %v4079 = vpack.c.b16 %v4071, %v4071
      %v4080 = vpack.c.b16 %v4072, %v4072
      %v4081 = vpack.c.b16 %v4073, %v4073
      %v4083 = vshrl.u32 %v4074, 16
      %v4085 = vrot.slane %v4083, 7
      %v4086 = vshll.u32 %v4074, 16
      %v4088 = vor.u32 %v4085, %v4086
      %v4089 = vrot.slane %v4085, 4
      %v4091 = vshrl.u32 %v4075, 16
      %v4093 = vrot.slane %v4091, 7
      %v4094 = vshll.u32 %v4075, 16
      %v4096 = vor.u32 %v4093, %v4094
      %v4097 = vrot.slane %v4093, 4
      %v4099 = vshrl.u32 %v4076, 16
      %v4101 = vrot.slane %v4099, 7
      %v4102 = vshll.u32 %v4076, 16
      %v4104 = vor.u32 %v4101, %v4102
      %v4105 = vrot.slane %v4101, 4
      %v4107 = vshrl.u32 %v4077, 16
      %v4109 = vrot.slane %v4107, 7
      %v4110 = vshll.u32 %v4077, 16
      %v4112 = vor.u32 %v4109, %v4110
      %v4113 = vrot.slane %v4109, 4
      %v4115 = vshrl.u32 %v4078, 16
      %v4117 = vrot.slane %v4115, 7
      %v4118 = vshll.u32 %v4078, 16
      %v4120 = vor.u32 %v4117, %v4118
      %v4121 = vrot.slane %v4117, 4
      %v4123 = vshrl.u32 %v4079, 16
      %v4125 = vrot.slane %v4123, 7
      %v4126 = vshll.u32 %v4079, 16
      %v4128 = vor.u32 %v4125, %v4126
      %v4129 = vrot.slane %v4125, 4
      %v4131 = vshrl.u32 %v4080, 16
      %v4133 = vrot.slane %v4131, 7
      %v4134 = vshll.u32 %v4080, 16
      %v4136 = vor.u32 %v4133, %v4134
      %v4137 = vrot.slane %v4133, 4
      %v4139 = vshrl.u32 %v4081, 16
      %v4141 = vrot.slane %v4139, 7
      %v4142 = vshll.u32 %v4081, 16
      %v4144 = vor.u32 %v4141, %v4142
      %v4145 = vrot.slane %v4141, 4
      %s4162 = scalar_lea.vmem [#allocation4], 8
      %vm4163 = vcmask 60416
      %vm4164 = vmand %vm4163, %vm4018
      %v4165 = vld [vmem:[%s4162] sm:$0xf]
      %v4166 = vsel %vm4164, %v4088, %v4165
      %4167 = vst [vmem:[%s4162] sm:$0xf] %v4166
      %v4168 = vld [vmem:[%s4162 + $0x4] sm:$0x1]
      %v4169 = vsel %vm3987, %v4089, %v4168
      %4170 = vst [vmem:[%s4162 + $0x4] sm:$0x1] %v4169
      %v4171 = vld [vmem:[%s4162 + $0x8] sm:$0xf]
      %v4172 = vsel %vm4164, %v4096, %v4171
      %4173 = vst [vmem:[%s4162 + $0x8] sm:$0xf] %v4172
      %v4174 = vld [vmem:[%s4162 + $0xc] sm:$0x1]
      %v4175 = vsel %vm3987, %v4097, %v4174
      %4176 = vst [vmem:[%s4162 + $0xc] sm:$0x1] %v4175
      %v4177 = vld [vmem:[%s4162 + $0x10] sm:$0xf]
      %v4178 = vsel %vm4164, %v4104, %v4177
      %4179 = vst [vmem:[%s4162 + $0x10] sm:$0xf] %v4178
      %v4180 = vld [vmem:[%s4162 + $0x14] sm:$0x1]
      %v4181 = vsel %vm3987, %v4105, %v4180
      %4182 = vst [vmem:[%s4162 + $0x14] sm:$0x1] %v4181
      %v4183 = vld [vmem:[%s4162 + $0x18] sm:$0xf]
      %v4184 = vsel %vm4164, %v4112, %v4183
      %4185 = vst [vmem:[%s4162 + $0x18] sm:$0xf] %v4184
      %v4186 = vld [vmem:[%s4162 + $0x1c] sm:$0x1]
      %v4187 = vsel %vm3987, %v4113, %v4186
      %4188 = vst [vmem:[%s4162 + $0x1c] sm:$0x1] %v4187
      %v4189 = vld [vmem:[%s4162 + $0x20] sm:$0xf]
      %v4190 = vsel %vm4164, %v4120, %v4189
      %4191 = vst [vmem:[%s4162 + $0x20] sm:$0xf] %v4190
      %v4192 = vld [vmem:[%s4162 + $0x24] sm:$0x1]
      %v4193 = vsel %vm3987, %v4121, %v4192
      %4194 = vst [vmem:[%s4162 + $0x24] sm:$0x1] %v4193
      %v4195 = vld [vmem:[%s4162 + $0x28] sm:$0xf]
      %v4196 = vsel %vm4164, %v4128, %v4195
      %4197 = vst [vmem:[%s4162 + $0x28] sm:$0xf] %v4196
      %v4198 = vld [vmem:[%s4162 + $0x2c] sm:$0x1]
      %v4199 = vsel %vm3987, %v4129, %v4198
      %4200 = vst [vmem:[%s4162 + $0x2c] sm:$0x1] %v4199
      %v4201 = vld [vmem:[%s4162 + $0x30] sm:$0xf]
      %v4202 = vsel %vm4164, %v4136, %v4201
      %4203 = vst [vmem:[%s4162 + $0x30] sm:$0xf] %v4202
      %v4204 = vld [vmem:[%s4162 + $0x34] sm:$0x1]
      %v4205 = vsel %vm3987, %v4137, %v4204
      %4206 = vst [vmem:[%s4162 + $0x34] sm:$0x1] %v4205
      %v4207 = vld [vmem:[%s4162 + $0x38] sm:$0xf]
      %v4208 = vsel %vm4164, %v4144, %v4207
      %4209 = vst [vmem:[%s4162 + $0x38] sm:$0xf] %v4208
      %v4210 = vld [vmem:[%s4162 + $0x3c] sm:$0x1]
      %v4211 = vsel %vm3987, %v4145, %v4210
      %4212 = vst [vmem:[%s4162 + $0x3c] sm:$0x1] %v4211
      %v4213 = vld [vmem:[#allocation4] sm:$0xf]
      %v4214 = vld [vmem:[#allocation4 + $0x8] sm:$0xf]
      %v4215 = vld [vmem:[#allocation4 + $0x10] sm:$0xf]
      %v4216 = vld [vmem:[#allocation4 + $0x18] sm:$0xf]
      %v4217 = vld [vmem:[#allocation4 + $0x20] sm:$0xf]
      %v4218 = vld [vmem:[#allocation4 + $0x28] sm:$0xf]
      %v4219 = vld [vmem:[#allocation4 + $0x30] sm:$0xf]
      %v4220 = vld [vmem:[#allocation4 + $0x38] sm:$0xf]
      %v4221 = vld [vmem:[%s12] sm:$0xf]
      %v4222 = vld [vmem:[#allocation4 + $0x4] sm:$0x1]
      %v4223 = vld [vmem:[#allocation4 + $0xc] sm:$0x1]
      %v4224 = vld [vmem:[#allocation4 + $0x14] sm:$0x1]
      %v4225 = vld [vmem:[#allocation4 + $0x1c] sm:$0x1]
      %v4226 = vld [vmem:[#allocation4 + $0x24] sm:$0x1]
      %v4227 = vld [vmem:[#allocation4 + $0x2c] sm:$0x1]
      %v4228 = vld [vmem:[#allocation4 + $0x34] sm:$0x1]
      %v4229 = vld [vmem:[#allocation4 + $0x3c] sm:$0x1]
      %v4231 = vshrl.u32 %v4213, 16
      %v4233 = vrot.slane %v4231, 4
      %v4234 = vshll.u32 %v4213, 16
      %v4236 = vrot.slane %v4234, 5
      %v4237 = vor.u32 %v4233, %v4236
      %v4238 = vrot.slane %v4237, 4
      %v4240 = vshll.u32 %v4222, 16
      %v4242 = vrot.slane %v4240, 5
      %v4243 = vsel %vm555, %v4238, %v4242
      %v4245 = vshrl.u32 %v4214, 16
      %v4247 = vrot.slane %v4245, 4
      %v4248 = vshll.u32 %v4214, 16
      %v4250 = vrot.slane %v4248, 5
      %v4251 = vor.u32 %v4247, %v4250
      %v4252 = vrot.slane %v4251, 4
      %v4254 = vshll.u32 %v4223, 16
      %v4256 = vrot.slane %v4254, 5
      %v4257 = vsel %vm555, %v4252, %v4256
      %v4259 = vshrl.u32 %v4215, 16
      %v4261 = vrot.slane %v4259, 4
      %v4262 = vshll.u32 %v4215, 16
      %v4264 = vrot.slane %v4262, 5
      %v4265 = vor.u32 %v4261, %v4264
      %v4266 = vrot.slane %v4265, 4
      %v4268 = vshll.u32 %v4224, 16
      %v4270 = vrot.slane %v4268, 5
      %v4271 = vsel %vm555, %v4266, %v4270
      %v4273 = vshrl.u32 %v4216, 16
      %v4275 = vrot.slane %v4273, 4
      %v4276 = vshll.u32 %v4216, 16
      %v4278 = vrot.slane %v4276, 5
      %v4279 = vor.u32 %v4275, %v4278
      %v4280 = vrot.slane %v4279, 4
      %v4282 = vshll.u32 %v4225, 16
      %v4284 = vrot.slane %v4282, 5
      %v4285 = vsel %vm555, %v4280, %v4284
      %v4287 = vshrl.u32 %v4217, 16
      %v4289 = vrot.slane %v4287, 4
      %v4290 = vshll.u32 %v4217, 16
      %v4292 = vrot.slane %v4290, 5
      %v4293 = vor.u32 %v4289, %v4292
      %v4294 = vrot.slane %v4293, 4
      %v4296 = vshll.u32 %v4226, 16
      %v4298 = vrot.slane %v4296, 5
      %v4299 = vsel %vm555, %v4294, %v4298
      %v4301 = vshrl.u32 %v4218, 16
      %v4303 = vrot.slane %v4301, 4
      %v4304 = vshll.u32 %v4218, 16
      %v4306 = vrot.slane %v4304, 5
      %v4307 = vor.u32 %v4303, %v4306
      %v4308 = vrot.slane %v4307, 4
      %v4310 = vshll.u32 %v4227, 16
      %v4312 = vrot.slane %v4310, 5
      %v4313 = vsel %vm555, %v4308, %v4312
      %v4315 = vshrl.u32 %v4219, 16
      %v4317 = vrot.slane %v4315, 4
      %v4318 = vshll.u32 %v4219, 16
      %v4320 = vrot.slane %v4318, 5
      %v4321 = vor.u32 %v4317, %v4320
      %v4322 = vrot.slane %v4321, 4
      %v4324 = vshll.u32 %v4228, 16
      %v4326 = vrot.slane %v4324, 5
      %v4327 = vsel %vm555, %v4322, %v4326
      %v4329 = vshrl.u32 %v4220, 16
      %v4331 = vrot.slane %v4329, 4
      %v4332 = vshll.u32 %v4220, 16
      %v4334 = vrot.slane %v4332, 5
      %v4335 = vor.u32 %v4331, %v4334
      %v4336 = vrot.slane %v4335, 4
      %v4338 = vshll.u32 %v4229, 16
      %v4340 = vrot.slane %v4338, 5
      %v4341 = vsel %vm555, %v4336, %v4340
      %s4342 = scalar_lea.vmem %s12, 4
      %v4343 = vld [vmem:[%s4342] sm:$0xf]
      %v4344 = vunpack.c.l.b16 %v4243
      %v4345 = vunpack.c.l.b16 %v4257
      %v4346 = vunpack.c.l.b16 %v4271
      %v4347 = vunpack.c.l.b16 %v4285
      %v4348 = vunpack.c.l.b16 %v4299
      %v4349 = vunpack.c.l.b16 %v4313
      %v4350 = vunpack.c.l.b16 %v4327
      %v4351 = vunpack.c.l.b16 %v4341
      %v4352 = vpack.c.b16 %v4345, %v4344
      %v4353 = vpack.c.b16 %v4347, %v4346
      %v4354 = vpack.c.b16 %v4349, %v4348
      %v4355 = vpack.c.b16 %v4351, %v4350
      %v4357 = vsel %vm2114, %v4352, 0
      %v4360 = vsel %vm2114, %v4353, 0
      %v4363 = vsel %vm2114, %v4354, 0
      %v4366 = vsel %vm2114, %v4355, 0
      %v4369 = vsel %vm3735, %v4343, 0
      %4371 = vmatprep.subr.bf16.mxu0 0
      %4372 = vmatpush1.bf16.msra.mxu0 0
      %4373 = vmatprep.subr.bf16.mxu0 0
      %4374 = vmatpush1.bf16.msra.mxu0 0
      %4375 = vmatprep.subr.bf16.mxu0 0
      %4376 = vmatpush1.bf16.msra.mxu0 0
      %4377 = vmatprep.subr.bf16.mxu0 0
      %4378 = vmatpush1.bf16.msra.mxu0 0
      %4379 = vmatprep.subr.bf16.mxu0 0
      %4380 = vmatpush1.bf16.msra.mxu0 0
      %4381 = vmatprep.subr.bf16.mxu0 0
      %4382 = vmatpush1.bf16.msra.mxu0 0
      %4383 = vmatprep.subr.bf16.mxu0 0
      %4384 = vmatpush1.bf16.msra.mxu0 0
      %4385 = vmatprep.subr.bf16.mxu0 0
      %4386 = vmatpush1.bf16.msra.mxu0 %v4369
      %4387 = vmatprep.subr.bf16.mxu0 0
      %4388 = vmatpush2.bf16.msra.mxu0 0
      %4389 = vmatprep.subr.bf16.mxu0 0
      %4390 = vmatpush2.bf16.msra.mxu0 0
      %4391 = vmatprep.subr.bf16.mxu0 0
      %4392 = vmatpush2.bf16.msra.mxu0 0
      %4393 = vmatprep.subr.bf16.mxu0 0
      %4394 = vmatpush2.bf16.msra.mxu0 0
      %4395 = vmatprep.subr.bf16.mxu0 0
      %4396 = vmatpush2.bf16.msra.mxu0 0
      %4397 = vmatprep.subr.bf16.mxu0 0
      %4398 = vmatpush2.bf16.msra.mxu0 0
      %4399 = vmatprep.subr.bf16.mxu0 0
      %4400 = vmatpush2.bf16.msra.mxu0 0
      %4401 = vmatprep.subr.bf16.mxu0 0
      %4402 = vmatpush2.bf16.msra.mxu0 0
      %4403 = vmatprep.mubr.bf16.mxu0 0
      %4404 = vmatmul.mubr.bf16.gmra.mxu0 %v4357
      %v4405 = vpop.f32.mrf.mxu0
      %v4406 = vadd.f32 0.0, %v4405
      %v4407 = vpop.f32.mrf.mxu0
      %v4408 = vpop.f32.mrf.mxu0
      %v4409 = vadd.f32 0.0, %v4408
      %v4410 = vpop.f32.mrf.mxu0
      %4411 = vmatprep.mubr.bf16.mxu0 0
      %4412 = vmatmul.mubr.bf16.gmra.mxu0 %v4360
      %v4413 = vpop.f32.mrf.mxu0
      %v4414 = vadd.f32 0.0, %v4413
      %v4415 = vpop.f32.mrf.mxu0
      %v4416 = vpop.f32.mrf.mxu0
      %v4417 = vadd.f32 0.0, %v4416
      %v4418 = vpop.f32.mrf.mxu0
      %4419 = vmatprep.mubr.bf16.mxu0 0
      %4420 = vmatmul.mubr.bf16.gmra.mxu0 %v4363
      %v4421 = vpop.f32.mrf.mxu0
      %v4422 = vadd.f32 0.0, %v4421
      %v4423 = vpop.f32.mrf.mxu0
      %v4424 = vpop.f32.mrf.mxu0
      %v4425 = vadd.f32 0.0, %v4424
      %v4426 = vpop.f32.mrf.mxu0
      %4427 = vmatprep.mubr.bf16.mxu0 0
      %4428 = vmatmul.mubr.bf16.gmra.mxu0 %v4366
      %v4429 = vpop.f32.mrf.mxu0
      %v4430 = vadd.f32 0.0, %v4429
      %v4431 = vpop.f32.mrf.mxu0
      %v4432 = vpop.f32.mrf.mxu0
      %v4433 = vadd.f32 0.0, %v4432
      %v4434 = vpop.f32.mrf.mxu0
      %4435 = vdwg.mxu0
      %v4444 = vunpack.c.l.b16 %v4213
      %v4445 = vunpack.c.l.b16 %v4214
      %v4446 = vunpack.c.l.b16 %v4215
      %v4447 = vunpack.c.l.b16 %v4216
      %v4448 = vunpack.c.l.b16 %v4217
      %v4449 = vunpack.c.l.b16 %v4218
      %v4450 = vunpack.c.l.b16 %v4219
      %v4451 = vunpack.c.l.b16 %v4220
      %v4452 = vpack.c.b16 %v4445, %v4444
      %v4453 = vpack.c.b16 %v4447, %v4446
      %v4454 = vpack.c.b16 %v4449, %v4448
      %v4455 = vpack.c.b16 %v4451, %v4450
      %v4457 = vsel %vm2114, %v4452, 0
      %v4460 = vsel %vm2114, %v4453, 0
      %v4463 = vsel %vm2114, %v4454, 0
      %v4466 = vsel %vm2114, %v4455, 0
      %v4469 = vsel %vm3735, %v4221, 0
      %4471 = vmatprep.subr.bf16.mxu0 0
      %4472 = vmatpush1.bf16.msra.mxu0 0
      %4473 = vmatprep.subr.bf16.mxu0 0
      %4474 = vmatpush1.bf16.msra.mxu0 0
      %4475 = vmatprep.subr.bf16.mxu0 0
      %4476 = vmatpush1.bf16.msra.mxu0 0
      %4477 = vmatprep.subr.bf16.mxu0 0
      %4478 = vmatpush1.bf16.msra.mxu0 0
      %4479 = vmatprep.subr.bf16.mxu0 0
      %4480 = vmatpush1.bf16.msra.mxu0 0
      %4481 = vmatprep.subr.bf16.mxu0 0
      %4482 = vmatpush1.bf16.msra.mxu0 0
      %4483 = vmatprep.subr.bf16.mxu0 0
      %4484 = vmatpush1.bf16.msra.mxu0 0
      %4485 = vmatprep.subr.bf16.mxu0 0
      %4486 = vmatpush1.bf16.msra.mxu0 %v4469
      %4487 = vmatprep.subr.bf16.mxu0 0
      %4488 = vmatpush2.bf16.msra.mxu0 0
      %4489 = vmatprep.subr.bf16.mxu0 0
      %4490 = vmatpush2.bf16.msra.mxu0 0
      %4491 = vmatprep.subr.bf16.mxu0 0
      %4492 = vmatpush2.bf16.msra.mxu0 0
      %4493 = vmatprep.subr.bf16.mxu0 0
      %4494 = vmatpush2.bf16.msra.mxu0 0
      %4495 = vmatprep.subr.bf16.mxu0 0
      %4496 = vmatpush2.bf16.msra.mxu0 0
      %4497 = vmatprep.subr.bf16.mxu0 0
      %4498 = vmatpush2.bf16.msra.mxu0 0
      %4499 = vmatprep.subr.bf16.mxu0 0
      %4500 = vmatpush2.bf16.msra.mxu0 0
      %4501 = vmatprep.subr.bf16.mxu0 0
      %4502 = vmatpush2.bf16.msra.mxu0 0
      %4503 = vmatprep.mubr.bf16.mxu0 0
      %4504 = vmatmul.mubr.bf16.gmra.mxu0 %v4457
      %v4505 = vpop.f32.mrf.mxu0
      %v4506 = vadd.f32 %v4406, %v4505
      %v4507 = vpop.f32.mrf.mxu0
      %v4508 = vpop.f32.mrf.mxu0
      %v4509 = vadd.f32 %v4409, %v4508
      %v4510 = vpop.f32.mrf.mxu0
      %4511 = vmatprep.mubr.bf16.mxu0 0
      %4512 = vmatmul.mubr.bf16.gmra.mxu0 %v4460
      %v4513 = vpop.f32.mrf.mxu0
      %v4514 = vadd.f32 %v4414, %v4513
      %v4515 = vpop.f32.mrf.mxu0
      %v4516 = vpop.f32.mrf.mxu0
      %v4517 = vadd.f32 %v4417, %v4516
      %v4518 = vpop.f32.mrf.mxu0
      %4519 = vmatprep.mubr.bf16.mxu0 0
      %4520 = vmatmul.mubr.bf16.gmra.mxu0 %v4463
      %v4521 = vpop.f32.mrf.mxu0
      %v4522 = vadd.f32 %v4422, %v4521
      %v4523 = vpop.f32.mrf.mxu0
      %v4524 = vpop.f32.mrf.mxu0
      %v4525 = vadd.f32 %v4425, %v4524
      %v4526 = vpop.f32.mrf.mxu0
      %4527 = vmatprep.mubr.bf16.mxu0 0
      %4528 = vmatmul.mubr.bf16.gmra.mxu0 %v4466
      %v4529 = vpop.f32.mrf.mxu0
      %v4530 = vadd.f32 %v4430, %v4529
      %v4531 = vpop.f32.mrf.mxu0
      %v4532 = vpop.f32.mrf.mxu0
      %v4533 = vadd.f32 %v4433, %v4532
      %v4534 = vpop.f32.mrf.mxu0
      %4535 = vdwg.mxu0
      %v4536 = vld [vmem:[#allocation4] sm:$0xe]
      %v4537 = vld [vmem:[#allocation4 + $0x8] sm:$0xe]
      %v4538 = vld [vmem:[#allocation4 + $0x10] sm:$0xe]
      %v4539 = vld [vmem:[#allocation4 + $0x18] sm:$0xe]
      %v4540 = vld [vmem:[#allocation4 + $0x20] sm:$0xe]
      %v4541 = vld [vmem:[#allocation4 + $0x28] sm:$0xe]
      %v4542 = vld [vmem:[#allocation4 + $0x30] sm:$0xe]
      %v4543 = vld [vmem:[#allocation4 + $0x38] sm:$0xe]
      %v4560 = vrot.slane %v4536, 5
      %v4561 = vrot.slane %v4560, 4
      %v4562 = vrot.slane %v4222, 5
      %v4563 = vsel %vm890, %v4561, %v4562
      %v4564 = vrot.slane %v4537, 5
      %v4565 = vrot.slane %v4564, 4
      %v4566 = vrot.slane %v4223, 5
      %v4567 = vsel %vm890, %v4565, %v4566
      %v4568 = vrot.slane %v4538, 5
      %v4569 = vrot.slane %v4568, 4
      %v4570 = vrot.slane %v4224, 5
      %v4571 = vsel %vm890, %v4569, %v4570
      %v4572 = vrot.slane %v4539, 5
      %v4573 = vrot.slane %v4572, 4
      %v4574 = vrot.slane %v4225, 5
      %v4575 = vsel %vm890, %v4573, %v4574
      %v4576 = vrot.slane %v4540, 5
      %v4577 = vrot.slane %v4576, 4
      %v4578 = vrot.slane %v4226, 5
      %v4579 = vsel %vm890, %v4577, %v4578
      %v4580 = vrot.slane %v4541, 5
      %v4581 = vrot.slane %v4580, 4
      %v4582 = vrot.slane %v4227, 5
      %v4583 = vsel %vm890, %v4581, %v4582
      %v4584 = vrot.slane %v4542, 5
      %v4585 = vrot.slane %v4584, 4
      %v4586 = vrot.slane %v4228, 5
      %v4587 = vsel %vm890, %v4585, %v4586
      %v4588 = vrot.slane %v4543, 5
      %v4589 = vrot.slane %v4588, 4
      %v4590 = vrot.slane %v4229, 5
      %v4591 = vsel %vm890, %v4589, %v4590
      %s4592 = scalar_lea.vmem %s12, 8
      %v4593 = vld [vmem:[%s4592] sm:$0xf]
      %v4594 = vunpack.c.l.b16 %v4563
      %v4595 = vunpack.c.l.b16 %v4567
      %v4596 = vunpack.c.l.b16 %v4571
      %v4597 = vunpack.c.l.b16 %v4575
      %v4598 = vunpack.c.l.b16 %v4579
      %v4599 = vunpack.c.l.b16 %v4583
      %v4600 = vunpack.c.l.b16 %v4587
      %v4601 = vunpack.c.l.b16 %v4591
      %v4602 = vpack.c.b16 %v4595, %v4594
      %v4603 = vpack.c.b16 %v4597, %v4596
      %v4604 = vpack.c.b16 %v4599, %v4598
      %v4605 = vpack.c.b16 %v4601, %v4600
      %v4607 = vsel %vm2114, %v4602, 0
      %v4610 = vsel %vm2114, %v4603, 0
      %v4613 = vsel %vm2114, %v4604, 0
      %v4616 = vsel %vm2114, %v4605, 0
      %v4619 = vsel %vm3735, %v4593, 0
      %4621 = vmatprep.subr.bf16.mxu0 0
      %4622 = vmatpush1.bf16.msra.mxu0 0
      %4623 = vmatprep.subr.bf16.mxu0 0
      %4624 = vmatpush1.bf16.msra.mxu0 0
      %4625 = vmatprep.subr.bf16.mxu0 0
      %4626 = vmatpush1.bf16.msra.mxu0 0
      %4627 = vmatprep.subr.bf16.mxu0 0
      %4628 = vmatpush1.bf16.msra.mxu0 0
      %4629 = vmatprep.subr.bf16.mxu0 0
      %4630 = vmatpush1.bf16.msra.mxu0 0
      %4631 = vmatprep.subr.bf16.mxu0 0
      %4632 = vmatpush1.bf16.msra.mxu0 0
      %4633 = vmatprep.subr.bf16.mxu0 0
      %4634 = vmatpush1.bf16.msra.mxu0 0
      %4635 = vmatprep.subr.bf16.mxu0 0
      %4636 = vmatpush1.bf16.msra.mxu0 %v4619
      %4637 = vmatprep.subr.bf16.mxu0 0
      %4638 = vmatpush2.bf16.msra.mxu0 0
      %4639 = vmatprep.subr.bf16.mxu0 0
      %4640 = vmatpush2.bf16.msra.mxu0 0
      %4641 = vmatprep.subr.bf16.mxu0 0
      %4642 = vmatpush2.bf16.msra.mxu0 0
      %4643 = vmatprep.subr.bf16.mxu0 0
      %4644 = vmatpush2.bf16.msra.mxu0 0
      %4645 = vmatprep.subr.bf16.mxu0 0
      %4646 = vmatpush2.bf16.msra.mxu0 0
      %4647 = vmatprep.subr.bf16.mxu0 0
      %4648 = vmatpush2.bf16.msra.mxu0 0
      %4649 = vmatprep.subr.bf16.mxu0 0
      %4650 = vmatpush2.bf16.msra.mxu0 0
      %4651 = vmatprep.subr.bf16.mxu0 0
      %4652 = vmatpush2.bf16.msra.mxu0 0
      %4653 = vmatprep.mubr.bf16.mxu0 0
      %4654 = vmatmul.mubr.bf16.gmra.mxu0 %v4607
      %v4655 = vpop.f32.mrf.mxu0
      %v4656 = vadd.f32 0.0, %v4655
      %v4657 = vpop.f32.mrf.mxu0
      %v4658 = vpop.f32.mrf.mxu0
      %v4659 = vadd.f32 0.0, %v4658
      %v4660 = vpop.f32.mrf.mxu0
      %4661 = vmatprep.mubr.bf16.mxu0 0
      %4662 = vmatmul.mubr.bf16.gmra.mxu0 %v4610
      %v4663 = vpop.f32.mrf.mxu0
      %v4664 = vadd.f32 0.0, %v4663
      %v4665 = vpop.f32.mrf.mxu0
      %v4666 = vpop.f32.mrf.mxu0
      %v4667 = vadd.f32 0.0, %v4666
      %v4668 = vpop.f32.mrf.mxu0
      %4669 = vmatprep.mubr.bf16.mxu0 0
      %4670 = vmatmul.mubr.bf16.gmra.mxu0 %v4613
      %v4671 = vpop.f32.mrf.mxu0
      %v4672 = vadd.f32 0.0, %v4671
      %v4673 = vpop.f32.mrf.mxu0
      %v4674 = vpop.f32.mrf.mxu0
      %v4675 = vadd.f32 0.0, %v4674
      %v4676 = vpop.f32.mrf.mxu0
      %4677 = vmatprep.mubr.bf16.mxu0 0
      %4678 = vmatmul.mubr.bf16.gmra.mxu0 %v4616
      %v4679 = vpop.f32.mrf.mxu0
      %v4680 = vadd.f32 0.0, %v4679
      %v4681 = vpop.f32.mrf.mxu0
      %v4682 = vpop.f32.mrf.mxu0
      %v4683 = vadd.f32 0.0, %v4682
      %v4684 = vpop.f32.mrf.mxu0
      %4685 = vdwg.mxu0
      %v4686 = vadd.f32 %v4506, %v4656
      %v4687 = vadd.f32 %v4509, %v4659
      %v4688 = vadd.f32 %v4514, %v4664
      %v4689 = vadd.f32 %v4517, %v4667
      %v4690 = vadd.f32 %v4522, %v4672
      %v4691 = vadd.f32 %v4525, %v4675
      %v4692 = vadd.f32 %v4530, %v4680
      %v4693 = vadd.f32 %v4533, %v4683
      %v4694 = vld [vmem:[%s4162] sm:$0xf]
      %v4695 = vld [vmem:[%s4162 + $0x8] sm:$0xf]
      %v4696 = vld [vmem:[%s4162 + $0x10] sm:$0xf]
      %v4697 = vld [vmem:[%s4162 + $0x18] sm:$0xf]
      %v4698 = vld [vmem:[%s4162 + $0x20] sm:$0xf]
      %v4699 = vld [vmem:[%s4162 + $0x28] sm:$0xf]
      %v4700 = vld [vmem:[%s4162 + $0x30] sm:$0xf]
      %v4701 = vld [vmem:[%s4162 + $0x38] sm:$0xf]
      %s4702 = scalar_lea.vmem %s12, 12
      %v4703 = vld [vmem:[%s4702] sm:$0xf]
      %v4712 = vunpack.c.l.b16 %v4694
      %v4713 = vunpack.c.l.b16 %v4695
      %v4714 = vunpack.c.l.b16 %v4696
      %v4715 = vunpack.c.l.b16 %v4697
      %v4716 = vunpack.c.l.b16 %v4698
      %v4717 = vunpack.c.l.b16 %v4699
      %v4718 = vunpack.c.l.b16 %v4700
      %v4719 = vunpack.c.l.b16 %v4701
      %v4720 = vpack.c.b16 %v4713, %v4712
      %v4721 = vpack.c.b16 %v4715, %v4714
      %v4722 = vpack.c.b16 %v4717, %v4716
      %v4723 = vpack.c.b16 %v4719, %v4718
      %v4725 = vsel %vm2114, %v4720, 0
      %v4728 = vsel %vm2114, %v4721, 0
      %v4731 = vsel %vm2114, %v4722, 0
      %v4734 = vsel %vm2114, %v4723, 0
      %v4737 = vsel %vm3735, %v4703, 0
      %4739 = vmatprep.subr.bf16.mxu0 0
      %4740 = vmatpush1.bf16.msra.mxu0 0
      %4741 = vmatprep.subr.bf16.mxu0 0
      %4742 = vmatpush1.bf16.msra.mxu0 0
      %4743 = vmatprep.subr.bf16.mxu0 0
      %4744 = vmatpush1.bf16.msra.mxu0 0
      %4745 = vmatprep.subr.bf16.mxu0 0
      %4746 = vmatpush1.bf16.msra.mxu0 0
      %4747 = vmatprep.subr.bf16.mxu0 0
      %4748 = vmatpush1.bf16.msra.mxu0 0
      %4749 = vmatprep.subr.bf16.mxu0 0
      %4750 = vmatpush1.bf16.msra.mxu0 0
      %4751 = vmatprep.subr.bf16.mxu0 0
      %4752 = vmatpush1.bf16.msra.mxu0 0
      %4753 = vmatprep.subr.bf16.mxu0 0
      %4754 = vmatpush1.bf16.msra.mxu0 %v4737
      %4755 = vmatprep.subr.bf16.mxu0 0
      %4756 = vmatpush2.bf16.msra.mxu0 0
      %4757 = vmatprep.subr.bf16.mxu0 0
      %4758 = vmatpush2.bf16.msra.mxu0 0
      %4759 = vmatprep.subr.bf16.mxu0 0
      %4760 = vmatpush2.bf16.msra.mxu0 0
      %4761 = vmatprep.subr.bf16.mxu0 0
      %4762 = vmatpush2.bf16.msra.mxu0 0
      %4763 = vmatprep.subr.bf16.mxu0 0
      %4764 = vmatpush2.bf16.msra.mxu0 0
      %4765 = vmatprep.subr.bf16.mxu0 0
      %4766 = vmatpush2.bf16.msra.mxu0 0
      %4767 = vmatprep.subr.bf16.mxu0 0
      %4768 = vmatpush2.bf16.msra.mxu0 0
      %4769 = vmatprep.subr.bf16.mxu0 0
      %4770 = vmatpush2.bf16.msra.mxu0 0
      %4771 = vmatprep.mubr.bf16.mxu0 0
      %4772 = vmatmul.mubr.bf16.gmra.mxu0 %v4725
      %v4773 = vpop.f32.mrf.mxu0
      %v4774 = vadd.f32 0.0, %v4773
      %v4775 = vpop.f32.mrf.mxu0
      %v4776 = vpop.f32.mrf.mxu0
      %v4777 = vadd.f32 0.0, %v4776
      %v4778 = vpop.f32.mrf.mxu0
      %4779 = vmatprep.mubr.bf16.mxu0 0
      %4780 = vmatmul.mubr.bf16.gmra.mxu0 %v4728
      %v4781 = vpop.f32.mrf.mxu0
      %v4782 = vadd.f32 0.0, %v4781
      %v4783 = vpop.f32.mrf.mxu0
      %v4784 = vpop.f32.mrf.mxu0
      %v4785 = vadd.f32 0.0, %v4784
      %v4786 = vpop.f32.mrf.mxu0
      %4787 = vmatprep.mubr.bf16.mxu0 0
      %4788 = vmatmul.mubr.bf16.gmra.mxu0 %v4731
      %v4789 = vpop.f32.mrf.mxu0
      %v4790 = vadd.f32 0.0, %v4789
      %v4791 = vpop.f32.mrf.mxu0
      %v4792 = vpop.f32.mrf.mxu0
      %v4793 = vadd.f32 0.0, %v4792
      %v4794 = vpop.f32.mrf.mxu0
      %4795 = vmatprep.mubr.bf16.mxu0 0
      %4796 = vmatmul.mubr.bf16.gmra.mxu0 %v4734
      %v4797 = vpop.f32.mrf.mxu0
      %v4798 = vadd.f32 0.0, %v4797
      %v4799 = vpop.f32.mrf.mxu0
      %v4800 = vpop.f32.mrf.mxu0
      %v4801 = vadd.f32 0.0, %v4800
      %v4802 = vpop.f32.mrf.mxu0
      %4803 = vdwg.mxu0
      %v4804 = vadd.f32 %v4686, %v4774
      %v4805 = vadd.f32 %v4687, %v4777
      %v4806 = vadd.f32 %v4688, %v4782
      %v4807 = vadd.f32 %v4689, %v4785
      %v4808 = vadd.f32 %v4690, %v4790
      %v4809 = vadd.f32 %v4691, %v4793
      %v4810 = vadd.f32 %v4692, %v4798
      %v4811 = vadd.f32 %v4693, %v4801
      %v4812 = vld [vmem:[%s4162] sm:$0xf]
      %v4813 = vld [vmem:[%s4162 + $0x4] sm:$0x1]
      %v4814 = vld [vmem:[%s4162 + $0x8] sm:$0xf]
      %v4815 = vld [vmem:[%s4162 + $0xc] sm:$0x1]
      %v4816 = vld [vmem:[%s4162 + $0x10] sm:$0xf]
      %v4817 = vld [vmem:[%s4162 + $0x14] sm:$0x1]
      %v4818 = vld [vmem:[%s4162 + $0x18] sm:$0xf]
      %v4819 = vld [vmem:[%s4162 + $0x1c] sm:$0x1]
      %v4820 = vld [vmem:[%s4162 + $0x20] sm:$0xf]
      %v4821 = vld [vmem:[%s4162 + $0x24] sm:$0x1]
      %v4822 = vld [vmem:[%s4162 + $0x28] sm:$0xf]
      %v4823 = vld [vmem:[%s4162 + $0x2c] sm:$0x1]
      %v4824 = vld [vmem:[%s4162 + $0x30] sm:$0xf]
      %v4825 = vld [vmem:[%s4162 + $0x34] sm:$0x1]
      %v4826 = vld [vmem:[%s4162 + $0x38] sm:$0xf]
      %v4827 = vld [vmem:[%s4162 + $0x3c] sm:$0x1]
      %v4829 = vshrl.u32 %v4812, 16
      %v4831 = vrot.slane %v4829, 4
      %v4832 = vshll.u32 %v4812, 16
      %v4834 = vrot.slane %v4832, 5
      %v4835 = vor.u32 %v4831, %v4834
      %v4836 = vrot.slane %v4835, 4
      %v4838 = vshll.u32 %v4813, 16
      %v4840 = vrot.slane %v4838, 5
      %v4841 = vsel %vm555, %v4836, %v4840
      %v4843 = vshrl.u32 %v4814, 16
      %v4845 = vrot.slane %v4843, 4
      %v4846 = vshll.u32 %v4814, 16
      %v4848 = vrot.slane %v4846, 5
      %v4849 = vor.u32 %v4845, %v4848
      %v4850 = vrot.slane %v4849, 4
      %v4852 = vshll.u32 %v4815, 16
      %v4854 = vrot.slane %v4852, 5
      %v4855 = vsel %vm555, %v4850, %v4854
      %v4857 = vshrl.u32 %v4816, 16
      %v4859 = vrot.slane %v4857, 4
      %v4860 = vshll.u32 %v4816, 16
      %v4862 = vrot.slane %v4860, 5
      %v4863 = vor.u32 %v4859, %v4862
      %v4864 = vrot.slane %v4863, 4
      %v4866 = vshll.u32 %v4817, 16
      %v4868 = vrot.slane %v4866, 5
      %v4869 = vsel %vm555, %v4864, %v4868
      %v4871 = vshrl.u32 %v4818, 16
      %v4873 = vrot.slane %v4871, 4
      %v4874 = vshll.u32 %v4818, 16
      %v4876 = vrot.slane %v4874, 5
      %v4877 = vor.u32 %v4873, %v4876
      %v4878 = vrot.slane %v4877, 4
      %v4880 = vshll.u32 %v4819, 16
      %v4882 = vrot.slane %v4880, 5
      %v4883 = vsel %vm555, %v4878, %v4882
      %v4885 = vshrl.u32 %v4820, 16
      %v4887 = vrot.slane %v4885, 4
      %v4888 = vshll.u32 %v4820, 16
      %v4890 = vrot.slane %v4888, 5
      %v4891 = vor.u32 %v4887, %v4890
      %v4892 = vrot.slane %v4891, 4
      %v4894 = vshll.u32 %v4821, 16
      %v4896 = vrot.slane %v4894, 5
      %v4897 = vsel %vm555, %v4892, %v4896
      %v4899 = vshrl.u32 %v4822, 16
      %v4901 = vrot.slane %v4899, 4
      %v4902 = vshll.u32 %v4822, 16
      %v4904 = vrot.slane %v4902, 5
      %v4905 = vor.u32 %v4901, %v4904
      %v4906 = vrot.slane %v4905, 4
      %v4908 = vshll.u32 %v4823, 16
      %v4910 = vrot.slane %v4908, 5
      %v4911 = vsel %vm555, %v4906, %v4910
      %v4913 = vshrl.u32 %v4824, 16
      %v4915 = vrot.slane %v4913, 4
      %v4916 = vshll.u32 %v4824, 16
      %v4918 = vrot.slane %v4916, 5
      %v4919 = vor.u32 %v4915, %v4918
      %v4920 = vrot.slane %v4919, 4
      %v4922 = vshll.u32 %v4825, 16
      %v4924 = vrot.slane %v4922, 5
      %v4925 = vsel %vm555, %v4920, %v4924
      %v4927 = vshrl.u32 %v4826, 16
      %v4929 = vrot.slane %v4927, 4
      %v4930 = vshll.u32 %v4826, 16
      %v4932 = vrot.slane %v4930, 5
      %v4933 = vor.u32 %v4929, %v4932
      %v4934 = vrot.slane %v4933, 4
      %v4936 = vshll.u32 %v4827, 16
      %v4938 = vrot.slane %v4936, 5
      %v4939 = vsel %vm555, %v4934, %v4938
      %s4940 = scalar_lea.vmem %s12, 16
      %v4941 = vld [vmem:[%s4940] sm:$0xf]
      %v4942 = vunpack.c.l.b16 %v4841
      %v4943 = vunpack.c.l.b16 %v4855
      %v4944 = vunpack.c.l.b16 %v4869
      %v4945 = vunpack.c.l.b16 %v4883
      %v4946 = vunpack.c.l.b16 %v4897
      %v4947 = vunpack.c.l.b16 %v4911
      %v4948 = vunpack.c.l.b16 %v4925
      %v4949 = vunpack.c.l.b16 %v4939
      %v4950 = vpack.c.b16 %v4943, %v4942
      %v4951 = vpack.c.b16 %v4945, %v4944
      %v4952 = vpack.c.b16 %v4947, %v4946
      %v4953 = vpack.c.b16 %v4949, %v4948
      %v4955 = vsel %vm2114, %v4950, 0
      %v4958 = vsel %vm2114, %v4951, 0
      %v4961 = vsel %vm2114, %v4952, 0
      %v4964 = vsel %vm2114, %v4953, 0
      %v4967 = vsel %vm3735, %v4941, 0
      %4969 = vmatprep.subr.bf16.mxu0 0
      %4970 = vmatpush1.bf16.msra.mxu0 0
      %4971 = vmatprep.subr.bf16.mxu0 0
      %4972 = vmatpush1.bf16.msra.mxu0 0
      %4973 = vmatprep.subr.bf16.mxu0 0
      %4974 = vmatpush1.bf16.msra.mxu0 0
      %4975 = vmatprep.subr.bf16.mxu0 0
      %4976 = vmatpush1.bf16.msra.mxu0 0
      %4977 = vmatprep.subr.bf16.mxu0 0
      %4978 = vmatpush1.bf16.msra.mxu0 0
      %4979 = vmatprep.subr.bf16.mxu0 0
      %4980 = vmatpush1.bf16.msra.mxu0 0
      %4981 = vmatprep.subr.bf16.mxu0 0
      %4982 = vmatpush1.bf16.msra.mxu0 0
      %4983 = vmatprep.subr.bf16.mxu0 0
      %4984 = vmatpush1.bf16.msra.mxu0 %v4967
      %4985 = vmatprep.subr.bf16.mxu0 0
      %4986 = vmatpush2.bf16.msra.mxu0 0
      %4987 = vmatprep.subr.bf16.mxu0 0
      %4988 = vmatpush2.bf16.msra.mxu0 0
      %4989 = vmatprep.subr.bf16.mxu0 0
      %4990 = vmatpush2.bf16.msra.mxu0 0
      %4991 = vmatprep.subr.bf16.mxu0 0
      %4992 = vmatpush2.bf16.msra.mxu0 0
      %4993 = vmatprep.subr.bf16.mxu0 0
      %4994 = vmatpush2.bf16.msra.mxu0 0
      %4995 = vmatprep.subr.bf16.mxu0 0
      %4996 = vmatpush2.bf16.msra.mxu0 0
      %4997 = vmatprep.subr.bf16.mxu0 0
      %4998 = vmatpush2.bf16.msra.mxu0 0
      %4999 = vmatprep.subr.bf16.mxu0 0
      %5000 = vmatpush2.bf16.msra.mxu0 0
      %5001 = vmatprep.mubr.bf16.mxu0 0
      %5002 = vmatmul.mubr.bf16.gmra.mxu0 %v4955
      %v5003 = vpop.f32.mrf.mxu0
      %v5004 = vadd.f32 0.0, %v5003
      %v5005 = vpop.f32.mrf.mxu0
      %v5006 = vpop.f32.mrf.mxu0
      %v5007 = vadd.f32 0.0, %v5006
      %v5008 = vpop.f32.mrf.mxu0
      %5009 = vmatprep.mubr.bf16.mxu0 0
      %5010 = vmatmul.mubr.bf16.gmra.mxu0 %v4958
      %v5011 = vpop.f32.mrf.mxu0
      %v5012 = vadd.f32 0.0, %v5011
      %v5013 = vpop.f32.mrf.mxu0
      %v5014 = vpop.f32.mrf.mxu0
      %v5015 = vadd.f32 0.0, %v5014
      %v5016 = vpop.f32.mrf.mxu0
      %5017 = vmatprep.mubr.bf16.mxu0 0
      %5018 = vmatmul.mubr.bf16.gmra.mxu0 %v4961
      %v5019 = vpop.f32.mrf.mxu0
      %v5020 = vadd.f32 0.0, %v5019
      %v5021 = vpop.f32.mrf.mxu0
      %v5022 = vpop.f32.mrf.mxu0
      %v5023 = vadd.f32 0.0, %v5022
      %v5024 = vpop.f32.mrf.mxu0
      %5025 = vmatprep.mubr.bf16.mxu0 0
      %5026 = vmatmul.mubr.bf16.gmra.mxu0 %v4964
      %v5027 = vpop.f32.mrf.mxu0
      %v5028 = vadd.f32 0.0, %v5027
      %v5029 = vpop.f32.mrf.mxu0
      %v5030 = vpop.f32.mrf.mxu0
      %v5031 = vadd.f32 0.0, %v5030
      %v5032 = vpop.f32.mrf.mxu0
      %5033 = vdwg.mxu0
      %v5034 = vadd.f32 %v4804, %v5004
      %v5035 = vadd.f32 %v4805, %v5007
      %v5036 = vadd.f32 %v4806, %v5012
      %v5037 = vadd.f32 %v4807, %v5015
      %v5038 = vadd.f32 %v4808, %v5020
      %v5039 = vadd.f32 %v4809, %v5023
      %v5040 = vadd.f32 %v4810, %v5028
      %v5041 = vadd.f32 %v4811, %v5031
      %v5042 = vld [vmem:[%s4162] sm:$0xe]
      %v5043 = vld [vmem:[%s4162 + $0x8] sm:$0xe]
      %v5044 = vld [vmem:[%s4162 + $0x10] sm:$0xe]
      %v5045 = vld [vmem:[%s4162 + $0x18] sm:$0xe]
      %v5046 = vld [vmem:[%s4162 + $0x20] sm:$0xe]
      %v5047 = vld [vmem:[%s4162 + $0x28] sm:$0xe]
      %v5048 = vld [vmem:[%s4162 + $0x30] sm:$0xe]
      %v5049 = vld [vmem:[%s4162 + $0x38] sm:$0xe]
      %v5066 = vrot.slane %v5042, 5
      %v5067 = vrot.slane %v5066, 4
      %v5068 = vrot.slane %v4813, 5
      %v5069 = vsel %vm890, %v5067, %v5068
      %v5070 = vrot.slane %v5043, 5
      %v5071 = vrot.slane %v5070, 4
      %v5072 = vrot.slane %v4815, 5
      %v5073 = vsel %vm890, %v5071, %v5072
      %v5074 = vrot.slane %v5044, 5
      %v5075 = vrot.slane %v5074, 4
      %v5076 = vrot.slane %v4817, 5
      %v5077 = vsel %vm890, %v5075, %v5076
      %v5078 = vrot.slane %v5045, 5
      %v5079 = vrot.slane %v5078, 4
      %v5080 = vrot.slane %v4819, 5
      %v5081 = vsel %vm890, %v5079, %v5080
      %v5082 = vrot.slane %v5046, 5
      %v5083 = vrot.slane %v5082, 4
      %v5084 = vrot.slane %v4821, 5
      %v5085 = vsel %vm890, %v5083, %v5084
      %v5086 = vrot.slane %v5047, 5
      %v5087 = vrot.slane %v5086, 4
      %v5088 = vrot.slane %v4823, 5
      %v5089 = vsel %vm890, %v5087, %v5088
      %v5090 = vrot.slane %v5048, 5
      %v5091 = vrot.slane %v5090, 4
      %v5092 = vrot.slane %v4825, 5
      %v5093 = vsel %vm890, %v5091, %v5092
      %v5094 = vrot.slane %v5049, 5
      %v5095 = vrot.slane %v5094, 4
      %v5096 = vrot.slane %v4827, 5
      %v5097 = vsel %vm890, %v5095, %v5096
      %s5098 = scalar_lea.vmem %s12, 20
      %v5099 = vld [vmem:[%s5098] sm:$0xf]
      %v5100 = vunpack.c.l.b16 %v5069
      %v5101 = vunpack.c.l.b16 %v5073
      %v5102 = vunpack.c.l.b16 %v5077
      %v5103 = vunpack.c.l.b16 %v5081
      %v5104 = vunpack.c.l.b16 %v5085
      %v5105 = vunpack.c.l.b16 %v5089
      %v5106 = vunpack.c.l.b16 %v5093
      %v5107 = vunpack.c.l.b16 %v5097
      %v5108 = vpack.c.b16 %v5101, %v5100
      %v5109 = vpack.c.b16 %v5103, %v5102
      %v5110 = vpack.c.b16 %v5105, %v5104
      %v5111 = vpack.c.b16 %v5107, %v5106
      %v5113 = vsel %vm2114, %v5108, 0
      %v5116 = vsel %vm2114, %v5109, 0
      %v5119 = vsel %vm2114, %v5110, 0
      %v5122 = vsel %vm2114, %v5111, 0
      %v5125 = vsel %vm3735, %v5099, 0
      %5127 = vmatprep.subr.bf16.mxu0 0
      %5128 = vmatpush1.bf16.msra.mxu0 0
      %5129 = vmatprep.subr.bf16.mxu0 0
      %5130 = vmatpush1.bf16.msra.mxu0 0
      %5131 = vmatprep.subr.bf16.mxu0 0
      %5132 = vmatpush1.bf16.msra.mxu0 0
      %5133 = vmatprep.subr.bf16.mxu0 0
      %5134 = vmatpush1.bf16.msra.mxu0 0
      %5135 = vmatprep.subr.bf16.mxu0 0
      %5136 = vmatpush1.bf16.msra.mxu0 0
      %5137 = vmatprep.subr.bf16.mxu0 0
      %5138 = vmatpush1.bf16.msra.mxu0 0
      %5139 = vmatprep.subr.bf16.mxu0 0
      %5140 = vmatpush1.bf16.msra.mxu0 0
      %5141 = vmatprep.subr.bf16.mxu0 0
      %5142 = vmatpush1.bf16.msra.mxu0 %v5125
      %5143 = vmatprep.subr.bf16.mxu0 0
      %5144 = vmatpush2.bf16.msra.mxu0 0
      %5145 = vmatprep.subr.bf16.mxu0 0
      %5146 = vmatpush2.bf16.msra.mxu0 0
      %5147 = vmatprep.subr.bf16.mxu0 0
      %5148 = vmatpush2.bf16.msra.mxu0 0
      %5149 = vmatprep.subr.bf16.mxu0 0
      %5150 = vmatpush2.bf16.msra.mxu0 0
      %5151 = vmatprep.subr.bf16.mxu0 0
      %5152 = vmatpush2.bf16.msra.mxu0 0
      %5153 = vmatprep.subr.bf16.mxu0 0
      %5154 = vmatpush2.bf16.msra.mxu0 0
      %5155 = vmatprep.subr.bf16.mxu0 0
      %5156 = vmatpush2.bf16.msra.mxu0 0
      %5157 = vmatprep.subr.bf16.mxu0 0
      %5158 = vmatpush2.bf16.msra.mxu0 0
      %5159 = vmatprep.mubr.bf16.mxu0 0
      %5160 = vmatmul.mubr.bf16.gmra.mxu0 %v5113
      %v5161 = vpop.f32.mrf.mxu0
      %v5162 = vadd.f32 0.0, %v5161
      %v5163 = vpop.f32.mrf.mxu0
      %v5164 = vpop.f32.mrf.mxu0
      %v5165 = vadd.f32 0.0, %v5164
      %v5166 = vpop.f32.mrf.mxu0
      %5167 = vmatprep.mubr.bf16.mxu0 0
      %5168 = vmatmul.mubr.bf16.gmra.mxu0 %v5116
      %v5169 = vpop.f32.mrf.mxu0
      %v5170 = vadd.f32 0.0, %v5169
      %v5171 = vpop.f32.mrf.mxu0
      %v5172 = vpop.f32.mrf.mxu0
      %v5173 = vadd.f32 0.0, %v5172
      %v5174 = vpop.f32.mrf.mxu0
      %5175 = vmatprep.mubr.bf16.mxu0 0
      %5176 = vmatmul.mubr.bf16.gmra.mxu0 %v5119
      %v5177 = vpop.f32.mrf.mxu0
      %v5178 = vadd.f32 0.0, %v5177
      %v5179 = vpop.f32.mrf.mxu0
      %v5180 = vpop.f32.mrf.mxu0
      %v5181 = vadd.f32 0.0, %v5180
      %v5182 = vpop.f32.mrf.mxu0
      %5183 = vmatprep.mubr.bf16.mxu0 0
      %5184 = vmatmul.mubr.bf16.gmra.mxu0 %v5122
      %v5185 = vpop.f32.mrf.mxu0
      %v5186 = vadd.f32 0.0, %v5185
      %v5187 = vpop.f32.mrf.mxu0
      %v5188 = vpop.f32.mrf.mxu0
      %v5189 = vadd.f32 0.0, %v5188
      %v5190 = vpop.f32.mrf.mxu0
      %5191 = vdwg.mxu0
      %v5192 = vadd.f32 %v5034, %v5162
      %v5193 = vadd.f32 %v5035, %v5165
      %v5194 = vadd.f32 %v5036, %v5170
      %v5195 = vadd.f32 %v5037, %v5173
      %v5196 = vadd.f32 %v5038, %v5178
      %v5197 = vadd.f32 %v5039, %v5181
      %v5198 = vadd.f32 %v5040, %v5186
      %v5199 = vadd.f32 %v5041, %v5189
      %s5200 = scalar_lea.vmem [#allocation4], 16
      %v5201 = vld [vmem:[%s5200] sm:$0xf]
      %v5202 = vld [vmem:[%s5200 + $0x8] sm:$0xf]
      %v5203 = vld [vmem:[%s5200 + $0x10] sm:$0xf]
      %v5204 = vld [vmem:[%s5200 + $0x18] sm:$0xf]
      %v5205 = vld [vmem:[%s5200 + $0x20] sm:$0xf]
      %v5206 = vld [vmem:[%s5200 + $0x28] sm:$0xf]
      %v5207 = vld [vmem:[%s5200 + $0x30] sm:$0xf]
      %v5208 = vld [vmem:[%s5200 + $0x38] sm:$0xf]
      %s5209 = scalar_lea.vmem %s12, 24
      %v5210 = vld [vmem:[%s5209] sm:$0xf]
      %v5219 = vunpack.c.l.b16 %v5201
      %v5220 = vunpack.c.l.b16 %v5202
      %v5221 = vunpack.c.l.b16 %v5203
      %v5222 = vunpack.c.l.b16 %v5204
      %v5223 = vunpack.c.l.b16 %v5205
      %v5224 = vunpack.c.l.b16 %v5206
      %v5225 = vunpack.c.l.b16 %v5207
      %v5226 = vunpack.c.l.b16 %v5208
      %v5227 = vpack.c.b16 %v5220, %v5219
      %v5228 = vpack.c.b16 %v5222, %v5221
      %v5229 = vpack.c.b16 %v5224, %v5223
      %v5230 = vpack.c.b16 %v5226, %v5225
      %v5232 = vsel %vm2114, %v5227, 0
      %v5235 = vsel %vm2114, %v5228, 0
      %v5238 = vsel %vm2114, %v5229, 0
      %v5241 = vsel %vm2114, %v5230, 0
      %v5244 = vsel %vm3735, %v5210, 0
      %5246 = vmatprep.subr.bf16.mxu0 0
      %5247 = vmatpush1.bf16.msra.mxu0 0
      %5248 = vmatprep.subr.bf16.mxu0 0
      %5249 = vmatpush1.bf16.msra.mxu0 0
      %5250 = vmatprep.subr.bf16.mxu0 0
      %5251 = vmatpush1.bf16.msra.mxu0 0
      %5252 = vmatprep.subr.bf16.mxu0 0
      %5253 = vmatpush1.bf16.msra.mxu0 0
      %5254 = vmatprep.subr.bf16.mxu0 0
      %5255 = vmatpush1.bf16.msra.mxu0 0
      %5256 = vmatprep.subr.bf16.mxu0 0
      %5257 = vmatpush1.bf16.msra.mxu0 0
      %5258 = vmatprep.subr.bf16.mxu0 0
      %5259 = vmatpush1.bf16.msra.mxu0 0
      %5260 = vmatprep.subr.bf16.mxu0 0
      %5261 = vmatpush1.bf16.msra.mxu0 %v5244
      %5262 = vmatprep.subr.bf16.mxu0 0
      %5263 = vmatpush2.bf16.msra.mxu0 0
      %5264 = vmatprep.subr.bf16.mxu0 0
      %5265 = vmatpush2.bf16.msra.mxu0 0
      %5266 = vmatprep.subr.bf16.mxu0 0
      %5267 = vmatpush2.bf16.msra.mxu0 0
      %5268 = vmatprep.subr.bf16.mxu0 0
      %5269 = vmatpush2.bf16.msra.mxu0 0
      %5270 = vmatprep.subr.bf16.mxu0 0
      %5271 = vmatpush2.bf16.msra.mxu0 0
      %5272 = vmatprep.subr.bf16.mxu0 0
      %5273 = vmatpush2.bf16.msra.mxu0 0
      %5274 = vmatprep.subr.bf16.mxu0 0
      %5275 = vmatpush2.bf16.msra.mxu0 0
      %5276 = vmatprep.subr.bf16.mxu0 0
      %5277 = vmatpush2.bf16.msra.mxu0 0
      %5278 = vmatprep.mubr.bf16.mxu0 0
      %5279 = vmatmul.mubr.bf16.gmra.mxu0 %v5232
      %v5280 = vpop.f32.mrf.mxu0
      %v5281 = vadd.f32 0.0, %v5280
      %v5282 = vpop.f32.mrf.mxu0
      %v5283 = vpop.f32.mrf.mxu0
      %v5284 = vadd.f32 0.0, %v5283
      %v5285 = vpop.f32.mrf.mxu0
      %5286 = vmatprep.mubr.bf16.mxu0 0
      %5287 = vmatmul.mubr.bf16.gmra.mxu0 %v5235
      %v5288 = vpop.f32.mrf.mxu0
      %v5289 = vadd.f32 0.0, %v5288
      %v5290 = vpop.f32.mrf.mxu0
      %v5291 = vpop.f32.mrf.mxu0
      %v5292 = vadd.f32 0.0, %v5291
      %v5293 = vpop.f32.mrf.mxu0
      %5294 = vmatprep.mubr.bf16.mxu0 0
      %5295 = vmatmul.mubr.bf16.gmra.mxu0 %v5238
      %v5296 = vpop.f32.mrf.mxu0
      %v5297 = vadd.f32 0.0, %v5296
      %v5298 = vpop.f32.mrf.mxu0
      %v5299 = vpop.f32.mrf.mxu0
      %v5300 = vadd.f32 0.0, %v5299
      %v5301 = vpop.f32.mrf.mxu0
      %5302 = vmatprep.mubr.bf16.mxu0 0
      %5303 = vmatmul.mubr.bf16.gmra.mxu0 %v5241
      %v5304 = vpop.f32.mrf.mxu0
      %v5305 = vadd.f32 0.0, %v5304
      %v5306 = vpop.f32.mrf.mxu0
      %v5307 = vpop.f32.mrf.mxu0
      %v5308 = vadd.f32 0.0, %v5307
      %v5309 = vpop.f32.mrf.mxu0
      %5310 = vdwg.mxu0
      %v5311 = vadd.f32 %v5192, %v5281
      %v5312 = vadd.f32 %v5193, %v5284
      %v5313 = vadd.f32 %v5194, %v5289
      %v5314 = vadd.f32 %v5195, %v5292
      %v5315 = vadd.f32 %v5196, %v5297
      %v5316 = vadd.f32 %v5197, %v5300
      %v5317 = vadd.f32 %v5198, %v5305
      %v5318 = vadd.f32 %v5199, %v5308
      %v5319 = vld [vmem:[%s5200] sm:$0xf]
      %v5320 = vld [vmem:[%s5200 + $0x4] sm:$0x1]
      %v5321 = vld [vmem:[%s5200 + $0x8] sm:$0xf]
      %v5322 = vld [vmem:[%s5200 + $0xc] sm:$0x1]
      %v5323 = vld [vmem:[%s5200 + $0x10] sm:$0xf]
      %v5324 = vld [vmem:[%s5200 + $0x14] sm:$0x1]
      %v5325 = vld [vmem:[%s5200 + $0x18] sm:$0xf]
      %v5326 = vld [vmem:[%s5200 + $0x1c] sm:$0x1]
      %v5327 = vld [vmem:[%s5200 + $0x20] sm:$0xf]
      %v5328 = vld [vmem:[%s5200 + $0x24] sm:$0x1]
      %v5329 = vld [vmem:[%s5200 + $0x28] sm:$0xf]
      %v5330 = vld [vmem:[%s5200 + $0x2c] sm:$0x1]
      %v5331 = vld [vmem:[%s5200 + $0x30] sm:$0xf]
      %v5332 = vld [vmem:[%s5200 + $0x34] sm:$0x1]
      %v5333 = vld [vmem:[%s5200 + $0x38] sm:$0xf]
      %v5334 = vld [vmem:[%s5200 + $0x3c] sm:$0x1]
      %v5336 = vshrl.u32 %v5319, 16
      %v5338 = vrot.slane %v5336, 4
      %v5339 = vshll.u32 %v5319, 16
      %v5341 = vrot.slane %v5339, 5
      %v5342 = vor.u32 %v5338, %v5341
      %v5343 = vrot.slane %v5342, 4
      %v5345 = vshll.u32 %v5320, 16
      %v5347 = vrot.slane %v5345, 5
      %v5348 = vsel %vm555, %v5343, %v5347
      %v5350 = vshrl.u32 %v5321, 16
      %v5352 = vrot.slane %v5350, 4
      %v5353 = vshll.u32 %v5321, 16
      %v5355 = vrot.slane %v5353, 5
      %v5356 = vor.u32 %v5352, %v5355
      %v5357 = vrot.slane %v5356, 4
      %v5359 = vshll.u32 %v5322, 16
      %v5361 = vrot.slane %v5359, 5
      %v5362 = vsel %vm555, %v5357, %v5361
      %v5364 = vshrl.u32 %v5323, 16
      %v5366 = vrot.slane %v5364, 4
      %v5367 = vshll.u32 %v5323, 16
      %v5369 = vrot.slane %v5367, 5
      %v5370 = vor.u32 %v5366, %v5369
      %v5371 = vrot.slane %v5370, 4
      %v5373 = vshll.u32 %v5324, 16
      %v5375 = vrot.slane %v5373, 5
      %v5376 = vsel %vm555, %v5371, %v5375
      %v5378 = vshrl.u32 %v5325, 16
      %v5380 = vrot.slane %v5378, 4
      %v5381 = vshll.u32 %v5325, 16
      %v5383 = vrot.slane %v5381, 5
      %v5384 = vor.u32 %v5380, %v5383
      %v5385 = vrot.slane %v5384, 4
      %v5387 = vshll.u32 %v5326, 16
      %v5389 = vrot.slane %v5387, 5
      %v5390 = vsel %vm555, %v5385, %v5389
      %v5392 = vshrl.u32 %v5327, 16
      %v5394 = vrot.slane %v5392, 4
      %v5395 = vshll.u32 %v5327, 16
      %v5397 = vrot.slane %v5395, 5
      %v5398 = vor.u32 %v5394, %v5397
      %v5399 = vrot.slane %v5398, 4
      %v5401 = vshll.u32 %v5328, 16
      %v5403 = vrot.slane %v5401, 5
      %v5404 = vsel %vm555, %v5399, %v5403
      %v5406 = vshrl.u32 %v5329, 16
      %v5408 = vrot.slane %v5406, 4
      %v5409 = vshll.u32 %v5329, 16
      %v5411 = vrot.slane %v5409, 5
      %v5412 = vor.u32 %v5408, %v5411
      %v5413 = vrot.slane %v5412, 4
      %v5415 = vshll.u32 %v5330, 16
      %v5417 = vrot.slane %v5415, 5
      %v5418 = vsel %vm555, %v5413, %v5417
      %v5420 = vshrl.u32 %v5331, 16
      %v5422 = vrot.slane %v5420, 4
      %v5423 = vshll.u32 %v5331, 16
      %v5425 = vrot.slane %v5423, 5
      %v5426 = vor.u32 %v5422, %v5425
      %v5427 = vrot.slane %v5426, 4
      %v5429 = vshll.u32 %v5332, 16
      %v5431 = vrot.slane %v5429, 5
      %v5432 = vsel %vm555, %v5427, %v5431
      %v5434 = vshrl.u32 %v5333, 16
      %v5436 = vrot.slane %v5434, 4
      %v5437 = vshll.u32 %v5333, 16
      %v5439 = vrot.slane %v5437, 5
      %v5440 = vor.u32 %v5436, %v5439
      %v5441 = vrot.slane %v5440, 4
      %v5443 = vshll.u32 %v5334, 16
      %v5445 = vrot.slane %v5443, 5
      %v5446 = vsel %vm555, %v5441, %v5445
      %s5447 = scalar_lea.vmem %s12, 28
      %v5448 = vld [vmem:[%s5447] sm:$0xf]
      %v5449 = vunpack.c.l.b16 %v5348
      %v5450 = vunpack.c.l.b16 %v5362
      %v5451 = vunpack.c.l.b16 %v5376
      %v5452 = vunpack.c.l.b16 %v5390
      %v5453 = vunpack.c.l.b16 %v5404
      %v5454 = vunpack.c.l.b16 %v5418
      %v5455 = vunpack.c.l.b16 %v5432
      %v5456 = vunpack.c.l.b16 %v5446
      %v5457 = vpack.c.b16 %v5450, %v5449
      %v5458 = vpack.c.b16 %v5452, %v5451
      %v5459 = vpack.c.b16 %v5454, %v5453
      %v5460 = vpack.c.b16 %v5456, %v5455
      %v5462 = vsel %vm2114, %v5457, 0
      %v5465 = vsel %vm2114, %v5458, 0
      %v5468 = vsel %vm2114, %v5459, 0
      %v5471 = vsel %vm2114, %v5460, 0
      %v5474 = vsel %vm3735, %v5448, 0
      %5476 = vmatprep.subr.bf16.mxu0 0
      %5477 = vmatpush1.bf16.msra.mxu0 0
      %5478 = vmatprep.subr.bf16.mxu0 0
      %5479 = vmatpush1.bf16.msra.mxu0 0
      %5480 = vmatprep.subr.bf16.mxu0 0
      %5481 = vmatpush1.bf16.msra.mxu0 0
      %5482 = vmatprep.subr.bf16.mxu0 0
      %5483 = vmatpush1.bf16.msra.mxu0 0
      %5484 = vmatprep.subr.bf16.mxu0 0
      %5485 = vmatpush1.bf16.msra.mxu0 0
      %5486 = vmatprep.subr.bf16.mxu0 0
      %5487 = vmatpush1.bf16.msra.mxu0 0
      %5488 = vmatprep.subr.bf16.mxu0 0
      %5489 = vmatpush1.bf16.msra.mxu0 0
      %5490 = vmatprep.subr.bf16.mxu0 0
      %5491 = vmatpush1.bf16.msra.mxu0 %v5474
      %5492 = vmatprep.subr.bf16.mxu0 0
      %5493 = vmatpush2.bf16.msra.mxu0 0
      %5494 = vmatprep.subr.bf16.mxu0 0
      %5495 = vmatpush2.bf16.msra.mxu0 0
      %5496 = vmatprep.subr.bf16.mxu0 0
      %5497 = vmatpush2.bf16.msra.mxu0 0
      %5498 = vmatprep.subr.bf16.mxu0 0
      %5499 = vmatpush2.bf16.msra.mxu0 0
      %5500 = vmatprep.subr.bf16.mxu0 0
      %5501 = vmatpush2.bf16.msra.mxu0 0
      %5502 = vmatprep.subr.bf16.mxu0 0
      %5503 = vmatpush2.bf16.msra.mxu0 0
      %5504 = vmatprep.subr.bf16.mxu0 0
      %5505 = vmatpush2.bf16.msra.mxu0 0
      %5506 = vmatprep.subr.bf16.mxu0 0
      %5507 = vmatpush2.bf16.msra.mxu0 0
      %5508 = vmatprep.mubr.bf16.mxu0 0
      %5509 = vmatmul.mubr.bf16.gmra.mxu0 %v5462
      %v5510 = vpop.f32.mrf.mxu0
      %v5511 = vadd.f32 0.0, %v5510
      %v5512 = vpop.f32.mrf.mxu0
      %v5513 = vpop.f32.mrf.mxu0
      %v5514 = vadd.f32 0.0, %v5513
      %v5515 = vpop.f32.mrf.mxu0
      %5516 = vmatprep.mubr.bf16.mxu0 0
      %5517 = vmatmul.mubr.bf16.gmra.mxu0 %v5465
      %v5518 = vpop.f32.mrf.mxu0
      %v5519 = vadd.f32 0.0, %v5518
      %v5520 = vpop.f32.mrf.mxu0
      %v5521 = vpop.f32.mrf.mxu0
      %v5522 = vadd.f32 0.0, %v5521
      %v5523 = vpop.f32.mrf.mxu0
      %5524 = vmatprep.mubr.bf16.mxu0 0
      %5525 = vmatmul.mubr.bf16.gmra.mxu0 %v5468
      %v5526 = vpop.f32.mrf.mxu0
      %v5527 = vadd.f32 0.0, %v5526
      %v5528 = vpop.f32.mrf.mxu0
      %v5529 = vpop.f32.mrf.mxu0
      %v5530 = vadd.f32 0.0, %v5529
      %v5531 = vpop.f32.mrf.mxu0
      %5532 = vmatprep.mubr.bf16.mxu0 0
      %5533 = vmatmul.mubr.bf16.gmra.mxu0 %v5471
      %v5534 = vpop.f32.mrf.mxu0
      %v5535 = vadd.f32 0.0, %v5534
      %v5536 = vpop.f32.mrf.mxu0
      %v5537 = vpop.f32.mrf.mxu0
      %v5538 = vadd.f32 0.0, %v5537
      %v5539 = vpop.f32.mrf.mxu0
      %5540 = vdwg.mxu0
      %v5541 = vadd.f32 %v5311, %v5511
      %v5542 = vadd.f32 %v5312, %v5514
      %v5543 = vadd.f32 %v5313, %v5519
      %v5544 = vadd.f32 %v5314, %v5522
      %v5545 = vadd.f32 %v5315, %v5527
      %v5546 = vadd.f32 %v5316, %v5530
      %v5547 = vadd.f32 %v5317, %v5535
      %v5548 = vadd.f32 %v5318, %v5538
      %v5549 = vld [vmem:[%s5200] sm:$0xe]
      %v5550 = vld [vmem:[%s5200 + $0x8] sm:$0xe]
      %v5551 = vld [vmem:[%s5200 + $0x10] sm:$0xe]
      %v5552 = vld [vmem:[%s5200 + $0x18] sm:$0xe]
      %v5553 = vld [vmem:[%s5200 + $0x20] sm:$0xe]
      %v5554 = vld [vmem:[%s5200 + $0x28] sm:$0xe]
      %v5555 = vld [vmem:[%s5200 + $0x30] sm:$0xe]
      %v5556 = vld [vmem:[%s5200 + $0x38] sm:$0xe]
      %v5573 = vrot.slane %v5549, 5
      %v5574 = vrot.slane %v5573, 4
      %v5575 = vrot.slane %v5320, 5
      %v5576 = vsel %vm890, %v5574, %v5575
      %v5577 = vrot.slane %v5550, 5
      %v5578 = vrot.slane %v5577, 4
      %v5579 = vrot.slane %v5322, 5
      %v5580 = vsel %vm890, %v5578, %v5579
      %v5581 = vrot.slane %v5551, 5
      %v5582 = vrot.slane %v5581, 4
      %v5583 = vrot.slane %v5324, 5
      %v5584 = vsel %vm890, %v5582, %v5583
      %v5585 = vrot.slane %v5552, 5
      %v5586 = vrot.slane %v5585, 4
      %v5587 = vrot.slane %v5326, 5
      %v5588 = vsel %vm890, %v5586, %v5587
      %v5589 = vrot.slane %v5553, 5
      %v5590 = vrot.slane %v5589, 4
      %v5591 = vrot.slane %v5328, 5
      %v5592 = vsel %vm890, %v5590, %v5591
      %v5593 = vrot.slane %v5554, 5
      %v5594 = vrot.slane %v5593, 4
      %v5595 = vrot.slane %v5330, 5
      %v5596 = vsel %vm890, %v5594, %v5595
      %v5597 = vrot.slane %v5555, 5
      %v5598 = vrot.slane %v5597, 4
      %v5599 = vrot.slane %v5332, 5
      %v5600 = vsel %vm890, %v5598, %v5599
      %v5601 = vrot.slane %v5556, 5
      %v5602 = vrot.slane %v5601, 4
      %v5603 = vrot.slane %v5334, 5
      %v5604 = vsel %vm890, %v5602, %v5603
      %s5605 = scalar_lea.vmem %s12, 32
      %v5606 = vld [vmem:[%s5605] sm:$0xf]
      %v5607 = vunpack.c.l.b16 %v5576
      %v5608 = vunpack.c.l.b16 %v5580
      %v5609 = vunpack.c.l.b16 %v5584
      %v5610 = vunpack.c.l.b16 %v5588
      %v5611 = vunpack.c.l.b16 %v5592
      %v5612 = vunpack.c.l.b16 %v5596
      %v5613 = vunpack.c.l.b16 %v5600
      %v5614 = vunpack.c.l.b16 %v5604
      %v5615 = vpack.c.b16 %v5608, %v5607
      %v5616 = vpack.c.b16 %v5610, %v5609
      %v5617 = vpack.c.b16 %v5612, %v5611
      %v5618 = vpack.c.b16 %v5614, %v5613
      %v5620 = vsel %vm2114, %v5615, 0
      %v5623 = vsel %vm2114, %v5616, 0
      %v5626 = vsel %vm2114, %v5617, 0
      %v5629 = vsel %vm2114, %v5618, 0
      %v5632 = vsel %vm3735, %v5606, 0
      %5634 = vmatprep.subr.bf16.mxu0 0
      %5635 = vmatpush1.bf16.msra.mxu0 0
      %5636 = vmatprep.subr.bf16.mxu0 0
      %5637 = vmatpush1.bf16.msra.mxu0 0
      %5638 = vmatprep.subr.bf16.mxu0 0
      %5639 = vmatpush1.bf16.msra.mxu0 0
      %5640 = vmatprep.subr.bf16.mxu0 0
      %5641 = vmatpush1.bf16.msra.mxu0 0
      %5642 = vmatprep.subr.bf16.mxu0 0
      %5643 = vmatpush1.bf16.msra.mxu0 0
      %5644 = vmatprep.subr.bf16.mxu0 0
      %5645 = vmatpush1.bf16.msra.mxu0 0
      %5646 = vmatprep.subr.bf16.mxu0 0
      %5647 = vmatpush1.bf16.msra.mxu0 0
      %5648 = vmatprep.subr.bf16.mxu0 0
      %5649 = vmatpush1.bf16.msra.mxu0 %v5632
      %5650 = vmatprep.subr.bf16.mxu0 0
      %5651 = vmatpush2.bf16.msra.mxu0 0
      %5652 = vmatprep.subr.bf16.mxu0 0
      %5653 = vmatpush2.bf16.msra.mxu0 0
      %5654 = vmatprep.subr.bf16.mxu0 0
      %5655 = vmatpush2.bf16.msra.mxu0 0
      %5656 = vmatprep.subr.bf16.mxu0 0
      %5657 = vmatpush2.bf16.msra.mxu0 0
      %5658 = vmatprep.subr.bf16.mxu0 0
      %5659 = vmatpush2.bf16.msra.mxu0 0
      %5660 = vmatprep.subr.bf16.mxu0 0
      %5661 = vmatpush2.bf16.msra.mxu0 0
      %5662 = vmatprep.subr.bf16.mxu0 0
      %5663 = vmatpush2.bf16.msra.mxu0 0
      %5664 = vmatprep.subr.bf16.mxu0 0
      %5665 = vmatpush2.bf16.msra.mxu0 0
      %5666 = vmatprep.mubr.bf16.mxu0 0
      %5667 = vmatmul.mubr.bf16.gmra.mxu0 %v5620
      %v5668 = vpop.f32.mrf.mxu0
      %v5669 = vadd.f32 0.0, %v5668
      %v5670 = vpop.f32.mrf.mxu0
      %v5671 = vpop.f32.mrf.mxu0
      %v5672 = vadd.f32 0.0, %v5671
      %v5673 = vpop.f32.mrf.mxu0
      %5674 = vmatprep.mubr.bf16.mxu0 0
      %5675 = vmatmul.mubr.bf16.gmra.mxu0 %v5623
      %v5676 = vpop.f32.mrf.mxu0
      %v5677 = vadd.f32 0.0, %v5676
      %v5678 = vpop.f32.mrf.mxu0
      %v5679 = vpop.f32.mrf.mxu0
      %v5680 = vadd.f32 0.0, %v5679
      %v5681 = vpop.f32.mrf.mxu0
      %5682 = vmatprep.mubr.bf16.mxu0 0
      %5683 = vmatmul.mubr.bf16.gmra.mxu0 %v5626
      %v5684 = vpop.f32.mrf.mxu0
      %v5685 = vadd.f32 0.0, %v5684
      %v5686 = vpop.f32.mrf.mxu0
      %v5687 = vpop.f32.mrf.mxu0
      %v5688 = vadd.f32 0.0, %v5687
      %v5689 = vpop.f32.mrf.mxu0
      %5690 = vmatprep.mubr.bf16.mxu0 0
      %5691 = vmatmul.mubr.bf16.gmra.mxu0 %v5629
      %v5692 = vpop.f32.mrf.mxu0
      %v5693 = vadd.f32 0.0, %v5692
      %v5694 = vpop.f32.mrf.mxu0
      %v5695 = vpop.f32.mrf.mxu0
      %v5696 = vadd.f32 0.0, %v5695
      %v5697 = vpop.f32.mrf.mxu0
      %5698 = vdwg.mxu0
      %v5699 = vadd.f32 %v5541, %v5669
      %v5700 = vadd.f32 %v5542, %v5672
      %v5701 = vadd.f32 %v5543, %v5677
      %v5702 = vadd.f32 %v5544, %v5680
      %v5703 = vadd.f32 %v5545, %v5685
      %v5704 = vadd.f32 %v5546, %v5688
      %v5705 = vadd.f32 %v5547, %v5693
      %v5706 = vadd.f32 %v5548, %v5696
      %v5707 = vld [vmem:[%s13] sm:$0x1]
      %v5709 = vlaneseq
      %v5710 = vshrl.u32 %v5709, 7
      %v5711 = vsub.s32 0, %v5710
      %v5712 = vrot.slane %v5707, %v5711
      %v5714 = vmul.f32 %v5699, %v5712
      %v5715 = vmul.f32 %v5700, %v5712
      %v5716 = vmul.f32 %v5701, %v5712
      %v5717 = vmul.f32 %v5702, %v5712
      %v5718 = vmul.f32 %v5703, %v5712
      %v5719 = vmul.f32 %v5704, %v5712
      %v5720 = vmul.f32 %v5705, %v5712
      %v5721 = vmul.f32 %v5706, %v5712
      %v5722 = vld [vmem:[%s14] sm:$0x1]
      %v5724 = vlaneseq
      %v5725 = vshrl.u32 %v5724, 7
      %v5726 = vsub.s32 0, %v5725
      %v5727 = vrot.slane %v5722, %v5726
      %v5729 = vadd.f32 %v5714, %v5727
      %v5730 = vadd.f32 %v5715, %v5727
      %v5731 = vadd.f32 %v5716, %v5727
      %v5732 = vadd.f32 %v5717, %v5727
      %v5733 = vadd.f32 %v5718, %v5727
      %v5734 = vadd.f32 %v5719, %v5727
      %v5735 = vadd.f32 %v5720, %v5727
      %v5736 = vadd.f32 %v5721, %v5727
      %v5737 = vld [vmem:[%s529] sm:$0xff]
      %v5738 = vld [vmem:[%s529 + $0x8] sm:$0xff]
      %v5739 = vld [vmem:[%s529 + $0x10] sm:$0xff]
      %v5740 = vld [vmem:[%s529 + $0x18] sm:$0xff]
      %v5741 = vld [vmem:[%s529 + $0x20] sm:$0xff]
      %v5742 = vld [vmem:[%s529 + $0x28] sm:$0xff]
      %v5743 = vld [vmem:[%s529 + $0x30] sm:$0xff]
      %v5744 = vld [vmem:[%s529 + $0x38] sm:$0xff]
      %v5745 = vadd.f32 %v5729, %v5737
      %v5746 = vadd.f32 %v5730, %v5738
      %v5747 = vadd.f32 %v5731, %v5739
      %v5748 = vadd.f32 %v5732, %v5740
      %v5749 = vadd.f32 %v5733, %v5741
      %v5750 = vadd.f32 %v5734, %v5742
      %v5751 = vadd.f32 %v5735, %v5743
      %v5752 = vadd.f32 %v5736, %v5744
      %v5753 = vmax.f32 %v5745, 0.0
      %v5754 = vmax.f32 %v5746, 0.0
      %v5755 = vmax.f32 %v5747, 0.0
      %v5756 = vmax.f32 %v5748, 0.0
      %v5757 = vmax.f32 %v5749, 0.0
      %v5758 = vmax.f32 %v5750, 0.0
      %v5759 = vmax.f32 %v5751, 0.0
      %v5760 = vmax.f32 %v5752, 0.0
      %5761 = vst.msk [vmem:[%s534] sm:$0xff] %vm2114, %v5753
      %5762 = vst.msk [vmem:[%s534 + $0x8] sm:$0xff] %vm2114, %v5754
      %5763 = vst.msk [vmem:[%s534 + $0x10] sm:$0xff] %vm2114, %v5755
      %5764 = vst.msk [vmem:[%s534 + $0x18] sm:$0xff] %vm2114, %v5756
      %5765 = vst.msk [vmem:[%s534 + $0x20] sm:$0xff] %vm2114, %v5757
      %5766 = vst.msk [vmem:[%s534 + $0x28] sm:$0xff] %vm2114, %v5758
      %5767 = vst.msk [vmem:[%s534 + $0x30] sm:$0xff] %vm2114, %v5759
      %5768 = vst.msk [vmem:[%s534 + $0x38] sm:$0xff] %vm2114, %v5760
      %p5769 = scmp.lt.s32.totalorder %s26, 1
      %s5770 = scalar_select %p5769, %s26, 1
      %s5771 = smul.addr %s5770, 8
      %s5772 = smul.addr %s5771, 8
      %s5773 = scalar_lea.vmem %s15, %s5772
      // Predicated region
      $region81: #{splat_atte_basic.1} parent=79 // pred_check
        %p5774 = pneg %p374
      $region82: #{splat_atte_basic.1} parent=79 // pred_check_branch
        %5776 = sbr.rel (%p5774) target = $region84
      $region83: #{splat_atte_basic.1} parent=79 // pred_region
        _
      $region84: #{splat_atte_basic.1} parent=79 // pred_fallthru
        _
    $region80: #{splat_atte_basic.1} parent=5 // pred_fallthru
      _
    %p5777 = scmp.le.s32.totalorder 2, %s21
    // Predicated region
    $region85: #{splat_atte_basic.1} parent=5 // pred_check
      %p5778 = pneg %p5777
    $region86: #{splat_atte_basic.1} parent=5 // pred_check_branch
      %5780 = sbr.rel (%p5778) target = $region88
    $region87: #{splat_atte_basic.1} parent=5 // pred_region
      %s5781 = ssub.s32 %s21, 2
      // Predicated region
      $region89: #{splat_atte_basic.1} parent=87 // pred_check
        %p5782 = pneg %p380
      $region90: #{splat_atte_basic.1} parent=87 // pred_check_branch
        %5784 = sbr.rel (%p5782) target = $region92
      $region91: #{splat_atte_basic.1} parent=87 // pred_region
        %p5785 = scmp.lt.s32.totalorder %s27, 1
        %s5786 = scalar_select %p5785, %s27, 1
        %s5787 = smul.addr %s5786, 8
        %s5788 = smul.addr %s5787, 8
        %s5789 = scalar_lea.vmem %s15, %s5788
      $region92: #{splat_atte_basic.1} parent=87 // pred_fallthru
        _
    $region88: #{splat_atte_basic.1} parent=5 // pred_fallthru
      _
  $region6: #{splat_atte_basic.1} parent=0 // loop_footer
    %s25 = sadd.s32 1, %s21
  $region7: #{splat_atte_basic.1} parent=0 // loop_footer_branch
    %20 = sbr.rel target = $region3
  $region8: #{splat_atte_basic.1} parent=0 // loop_exit
    _

</llo_original>
